<compile_context>
chip_gen: v6e
topology: v6e:2x2x1
jax: 0.10.0
libtpu: 0.0.40
codegen_flags: <defaults>
</compile_context>

<pallas_src>
import functools
import math

import jax
import jax.numpy as jnp
from jax.experimental import pallas as pl
from jax.experimental.pallas import tpu as pltpu

# ---------------- configuration (small, TPU-friendly BERT) ----------------
B, S = 2, 16            # batch, sequence length
H = 128                 # bert hidden dim (module default 300 -> 128 for lane alignment)
NH = 4                  # attention heads
DH = H // NH            # head dim
INTER = 512             # FFN intermediate dim (4*H)
VOCAB = 100
MAX_POS = 64
TYPE_VOCAB = 2
N_ENC_LAYERS = 2
OUT_DIM = 5             # output_dim
LN_EPS = 1e-12


# ---------------- in-kernel helpers (f32 math) ----------------
def _ln(x, g, b, eps=LN_EPS):
    """LayerNorm over the last dim; x:(M,H) f32, g/b:(1,H)."""
    mu = jnp.mean(x, axis=-1, keepdims=True)
    xc = x - mu
    var = jnp.mean(xc * xc, axis=-1, keepdims=True)
    return xc * jax.lax.rsqrt(var + eps) * g + b


def _gelu(x):
    # TODO(synk): original BERT uses erf-based GELU; tanh-form approximation
    # is used here (EUP-friendly transcendentals).
    c = 0.7978845608028654  # sqrt(2/pi)
    return 0.5 * x * (1.0 + jnp.tanh(c * (x + 0.044715 * x * x * x)))


# ---------------- fused encoder kernel ----------------
def _bert_encoder_kernel(
    x_ref, mb_ref, eg_ref, eb_ref,
    wq_ref, bq_ref, wk_ref, bk_ref, wv_ref, bv_ref,
    wao_ref, bao_ref, ln1g_ref, ln1b_ref,
    wfi_ref, bfi_ref, wfo_ref, bfo_ref, ln2g_ref, ln2b_ref,
    o_ref, *, scale):
    """One grid step = one (batch block, encoder layer).

    The output block (this batch's (S, H) hidden state) stays resident in VMEM
    across the layer axis and is used as the carry between layers.
    """
    l = pl.program_id(1)

    @pl.when(l == 0)
    def _():
        # Embedding LayerNorm fused into the first layer step (saves a launch).
        o_ref[...] = _ln(x_ref[...].astype(jnp.float32),
                         eg_ref[...], eb_ref[...]).astype(o_ref.dtype)

    h = o_ref[...].astype(jnp.float32)        # (S, H) hidden state of this batch
    mb = mb_ref[0].astype(jnp.float32)        # (S, S) additive attention mask bias

    # ---- multi-head self-attention: all heads in this single grid step ----
    acc = jnp.zeros((S, H), jnp.float32)
    for hd in range(NH):
        q = jnp.dot(h, wq_ref[0, hd], preferred_element_type=jnp.float32) + bq_ref[0, hd]
        k = jnp.dot(h, wk_ref[0, hd], preferred_element_type=jnp.float32) + bk_ref[0, hd]
        v = jnp.dot(h, wv_ref[0, hd], preferred_element_type=jnp.float32) + bv_ref[0, hd]
        s = jnp.dot(q, k.T, preferred_element_type=jnp.float32) * scale + mb   # (S, S)
        s = s - jnp.max(s, axis=-1, keepdims=True)
        p = jnp.exp(s)
        p = p * pl.reciprocal(jnp.sum(p, axis=-1, keepdims=True), approx=True)
        ctx = jnp.dot(p, v, preferred_element_type=jnp.float32)                # (S, DH)
        # head merge + output projection fused: sum_h ctx_h @ Wo_h
        acc = acc + jnp.dot(ctx, wao_ref[0, hd], preferred_element_type=jnp.float32)
    attn = acc + bao_ref[0]

    # ---- residual + LN1 (fused) ----
    h1 = _ln(attn + h, ln1g_ref[0], ln1b_ref[0])

    # ---- FFN: single 512-wide dot, GELU, single dot back, residual + LN2 ----
    inter = _gelu(jnp.dot(h1, wfi_ref[0], preferred_element_type=jnp.float32) + bfi_ref[0])
    ffn = jnp.dot(inter, wfo_ref[0], preferred_element_type=jnp.float32) + bfo_ref[0]
    o_ref[...] = _ln(ffn + h1, ln2g_ref[0], ln2b_ref[0]).astype(o_ref.dtype)


def bert_encoder(x, mask_bias3, params):
    """x: (B*S, H) post-embedding (pre-LN); mask_bias3: (B, S, S) additive bias."""
    M, Hd = x.shape
    Bq = mask_bias3.shape[0]
    Sq = M // Bq
    L = params["wq"].shape[0]

    def const_spec(a):
        nd = a.ndim
        return pl.BlockSpec(a.shape, lambda b, l: (0,) * nd)

    def layer_spec(a):
        nd = a.ndim
        return pl.BlockSpec((1,) + a.shape[1:], lambda b, l: (l,) + (0,) * (nd - 1))

    x_spec = pl.BlockSpec((Sq, Hd), lambda b, l: (b, 0))
    mask_spec = pl.BlockSpec((1, Sq, Sq), lambda b, l: (b, 0, 0))
    out_spec = pl.BlockSpec((Sq, Hd), lambda b, l: (b, 0))

    weight_args = [params["wq"], params["bq"], params["wk"], params["bk"],
                   params["wv"], params["bv"], params["wao"], params["bao"],
                   params["ln1_g"], params["ln1_b"], params["wfi"], params["bfi"],
                   params["wfo"], params["bfo"], params["ln2_g"], params["ln2_b"]]

    in_specs = ([x_spec, mask_spec,
                 const_spec(params["emb_ln_g"]), const_spec(params["emb_ln_b"])]
                + [layer_spec(a) for a in weight_args])

    return pl.pallas_call(
        functools.partial(_bert_encoder_kernel, scale=1.0 / math.sqrt(DH)),
        out_shape=jax.ShapeDtypeStruct((M, Hd), jnp.float32),
        grid_spec=pltpu.PrefetchScalarGridSpec(
            num_scalar_prefetch=0,
            grid=(Bq, L),                 # batch parallel, layers sequential (carry)
            in_specs=in_specs,
            out_specs=out_spec),
        compiler_params=pltpu.CompilerParams(
            dimension_semantics=("parallel", "arbitrary")),
    )(x, mask_bias3, params["emb_ln_g"], params["emb_ln_b"], *weight_args)


# ---------------- parameters (deterministic, synthetic) ----------------
def init_params(key):
    ks = iter(jax.random.split(key, 16))

    def nrm(shape, scale=0.02):
        return (scale * jax.random.normal(next(ks), shape)).astype(jnp.float32)

    L = N_ENC_LAYERS
    return {
        "word_emb": nrm((VOCAB, H)),
        "pos_emb": nrm((MAX_POS, H)),
        "tok_emb": nrm((TYPE_VOCAB, H)),
        "emb_ln_g": jnp.ones((1, H), jnp.float32),
        "emb_ln_b": jnp.zeros((1, H), jnp.float32),
        # per-head layouts so the fused kernel never lane-slices activations:
        "wq": nrm((L, NH, H, DH)), "bq": jnp.zeros((L, NH, 1, DH), jnp.float32),
        "wk": nrm((L, NH, H, DH)), "bk": jnp.zeros((L, NH, 1, DH), jnp.float32),
        "wv": nrm((L, NH, H, DH)), "bv": jnp.zeros((L, NH, 1, DH), jnp.float32),
        "wao": nrm((L, NH, DH, H)), "bao": jnp.zeros((L, 1, H), jnp.float32),
        "ln1_g": jnp.ones((L, 1, H), jnp.float32), "ln1_b": jnp.zeros((L, 1, H), jnp.float32),
        "wfi": nrm((L, H, INTER)), "bfi": jnp.zeros((L, 1, INTER), jnp.float32),
        "wfo": nrm((L, INTER, H)), "bfo": jnp.zeros((L, 1, H), jnp.float32),
        "ln2_g": jnp.ones((L, 1, H), jnp.float32), "ln2_b": jnp.zeros((L, 1, H), jnp.float32),
        "pool_w": nrm((H, H)), "pool_b": jnp.zeros((H,), jnp.float32),
        "cls_w": nrm((H, OUT_DIM)), "cls_b": jnp.zeros((OUT_DIM,), jnp.float32),
    }


# ---------------- forward (gathers + tiny head in XLA, encoder in Pallas) ----------------
def bert_classifier_forward(params, context, token_type_ids, mask):
    Bq, Sq = context.shape
    pos_ids = jnp.arange(Sq, dtype=jnp.int32)[None, :]

    # embeddings (gather is glue); the embedding LayerNorm runs inside the fused kernel.
    emb = (jnp.take(params["word_emb"], context, axis=0)
           + jnp.take(params["pos_emb"], pos_ids, axis=0)
           + jnp.take(params["tok_emb"], token_type_ids, axis=0))            # (B, S, H)
    x = emb.reshape(Bq * Sq, H).astype(jnp.float32)

    # extended attention mask, pre-broadcast over the query dim: (B, S, S)
    mask_bias = (1.0 - mask.astype(jnp.float32)) * -10000.0
    mask_bias3 = jnp.broadcast_to(mask_bias[:, None, :], (Bq, Sq, Sq))

    h = bert_encoder(x, mask_bias3, params)                                  # (B*S, H)

    # pooler + classifier: (2,128)@(128,128) and (2,128)@(128,5) — left to XLA
    # (per perf review: narrow/masked Pallas stores here are pure overhead).
    first_tok = h.reshape(Bq, Sq, H)[:, 0, :]                                # (B, H)
    pooled = jnp.tanh(first_tok @ params["pool_w"] + params["pool_b"])
    # nn.Dropout(p=0.1) -> identity in eval mode.
    logits = pooled @ params["cls_w"] + params["cls_b"]                      # (B, OUT_DIM)
    return logits
    # TODO(synk): LSTM branch (n_layers != 0) not implemented; module default n_layers=0.


if __name__ == "__main__":
    key = jax.random.PRNGKey(0)
    pkey, ikey = jax.random.split(key)
    params = init_params(pkey)

    # x = (context, seq_len_unused, mask) — forward uses x[0] and x[2].
    context = jax.random.randint(ikey, (B, S), 0, VOCAB, dtype=jnp.int32)
    token_type_ids = jnp.zeros((B, S), jnp.int32)
    mask = jnp.concatenate(
        [jnp.ones((B, S - 4), jnp.int32), jnp.zeros((B, 4), jnp.int32)], axis=1)

    fwd = jax.jit(bert_classifier_forward)
    out = jax.block_until_ready(fwd(params, context, token_type_ids, mask))
    assert out.shape == (B, OUT_DIM) and out.dtype == jnp.float32
    print("KERNEL_OK")
</pallas_src>

<mosaic_0001>
module attributes {stable_mosaic.version = 11 : i64} {
  func.func @_bert_encoder_kernel(%arg0: i32, %arg1: i32, %arg2: memref<16x128xf32, #tpu.memory_space<vmem>>, %arg3: memref<1x16x16xf32, #tpu.memory_space<vmem>>, %arg4: memref<1x128xf32, #tpu.memory_space<vmem>>, %arg5: memref<1x128xf32, #tpu.memory_space<vmem>>, %arg6: memref<1x4x128x32xf32, #tpu.memory_space<vmem>>, %arg7: memref<1x4x1x32xf32, #tpu.memory_space<vmem>>, %arg8: memref<1x4x128x32xf32, #tpu.memory_space<vmem>>, %arg9: memref<1x4x1x32xf32, #tpu.memory_space<vmem>>, %arg10: memref<1x4x128x32xf32, #tpu.memory_space<vmem>>, %arg11: memref<1x4x1x32xf32, #tpu.memory_space<vmem>>, %arg12: memref<1x4x32x128xf32, #tpu.memory_space<vmem>>, %arg13: memref<1x1x128xf32, #tpu.memory_space<vmem>>, %arg14: memref<1x1x128xf32, #tpu.memory_space<vmem>>, %arg15: memref<1x1x128xf32, #tpu.memory_space<vmem>>, %arg16: memref<1x128x512xf32, #tpu.memory_space<vmem>>, %arg17: memref<1x1x512xf32, #tpu.memory_space<vmem>>, %arg18: memref<1x512x128xf32, #tpu.memory_space<vmem>>, %arg19: memref<1x1x128xf32, #tpu.memory_space<vmem>>, %arg20: memref<1x1x128xf32, #tpu.memory_space<vmem>>, %arg21: memref<1x1x128xf32, #tpu.memory_space<vmem>>, %arg22: memref<16x128xf32, #tpu.memory_space<vmem>>) attributes {dimension_semantics = [#tpu.dimension_semantics<parallel>, #tpu.dimension_semantics<arbitrary>], iteration_bounds = array<i64: 2, 2>, scalar_prefetch = 0 : i64, scratch_operands = 0 : i64, tpu.core_type = #tpu.core_type<tc>, window_params = [{transform_indices = @transform_0, window_bounds = array<i64: 16, 128>}, {transform_indices = @transform_1, window_bounds = array<i64: 1, 16, 16>}, {pipeline_mode = #tpu.pipeline_mode<synchronous>, transform_indices = @transform_2, window_bounds = array<i64: 1, 128>}, {pipeline_mode = #tpu.pipeline_mode<synchronous>, transform_indices = @transform_3, window_bounds = array<i64: 1, 128>}, {transform_indices = @transform_4, window_bounds = array<i64: 1, 4, 128, 32>}, {transform_indices = @transform_5, window_bounds = array<i64: 1, 4, 1, 32>}, {transform_indices = @transform_6, window_bounds = array<i64: 1, 4, 128, 32>}, {transform_indices = @transform_7, window_bounds = array<i64: 1, 4, 1, 32>}, {transform_indices = @transform_8, window_bounds = array<i64: 1, 4, 128, 32>}, {transform_indices = @transform_9, window_bounds = array<i64: 1, 4, 1, 32>}, {transform_indices = @transform_10, window_bounds = array<i64: 1, 4, 32, 128>}, {transform_indices = @transform_11, window_bounds = array<i64: 1, 1, 128>}, {transform_indices = @transform_12, window_bounds = array<i64: 1, 1, 128>}, {transform_indices = @transform_13, window_bounds = array<i64: 1, 1, 128>}, {transform_indices = @transform_14, window_bounds = array<i64: 1, 128, 512>}, {transform_indices = @transform_15, window_bounds = array<i64: 1, 1, 512>}, {transform_indices = @transform_16, window_bounds = array<i64: 1, 512, 128>}, {transform_indices = @transform_17, window_bounds = array<i64: 1, 1, 128>}, {transform_indices = @transform_18, window_bounds = array<i64: 1, 1, 128>}, {transform_indices = @transform_19, window_bounds = array<i64: 1, 1, 128>}, {transform_indices = @transform_20, window_bounds = array<i64: 16, 128>}]} {
    %c0_i32 = arith.constant 0 : i32
    %0 = arith.cmpi eq, %arg1, %c0_i32 : i32
    %1 = arith.extui %0 : i1 to i32
    %c0_i32_0 = arith.constant 0 : i32
    %2 = arith.cmpi ne, %1, %c0_i32_0 : i32
    scf.if %2 {
      %c0_195 = arith.constant 0 : index
      %c0_196 = arith.constant 0 : index
      %253 = vector.load %arg2[%c0_195, %c0_196] : memref<16x128xf32, #tpu.memory_space<vmem>>, vector<16x128xf32>
      %c0_197 = arith.constant 0 : index
      %c0_198 = arith.constant 0 : index
      %254 = vector.load %arg4[%c0_197, %c0_198] : memref<1x128xf32, #tpu.memory_space<vmem>>, vector<1x128xf32>
      %c0_199 = arith.constant 0 : index
      %c0_200 = arith.constant 0 : index
      %255 = vector.load %arg5[%c0_199, %c0_200] : memref<1x128xf32, #tpu.memory_space<vmem>>, vector<1x128xf32>
      %cst_201 = arith.constant dense<0.000000e+00> : vector<16xf32>
      %256 = vector.multi_reduction <add>, %253, %cst_201 [1] : vector<16x128xf32> to vector<16xf32>
      %257 = vector.shape_cast %256 : vector<16xf32> to vector<16x1xf32>
      %cst_202 = arith.constant 1.280000e+02 : f32
      %258 = vector.broadcast %cst_202 : f32 to vector<16x1xf32>
      %259 = arith.divf %257, %258 : vector<16x1xf32>
      %260 = vector.broadcast %259 : vector<16x1xf32> to vector<16x128xf32>
      %261 = arith.subf %253, %260 : vector<16x128xf32>
      %262 = arith.mulf %261, %261 : vector<16x128xf32>
      %cst_203 = arith.constant dense<0.000000e+00> : vector<16xf32>
      %263 = vector.multi_reduction <add>, %262, %cst_203 [1] : vector<16x128xf32> to vector<16xf32>
      %264 = vector.shape_cast %263 : vector<16xf32> to vector<16x1xf32>
      %cst_204 = arith.constant 1.280000e+02 : f32
      %265 = vector.broadcast %cst_204 : f32 to vector<16x1xf32>
      %266 = arith.divf %264, %265 : vector<16x1xf32>
      %cst_205 = arith.constant 9.99999996E-13 : f32
      %267 = vector.broadcast %cst_205 : f32 to vector<16x1xf32>
      %268 = arith.addf %266, %267 : vector<16x1xf32>
      %269 = math.rsqrt %268 : vector<16x1xf32>
      %270 = vector.broadcast %269 : vector<16x1xf32> to vector<16x128xf32>
      %271 = arith.mulf %261, %270 : vector<16x128xf32>
      %272 = vector.broadcast %254 : vector<1x128xf32> to vector<16x128xf32>
      %273 = arith.mulf %271, %272 : vector<16x128xf32>
      %274 = vector.broadcast %255 : vector<1x128xf32> to vector<16x128xf32>
      %275 = arith.addf %273, %274 : vector<16x128xf32>
      %c0_206 = arith.constant 0 : index
      %c0_207 = arith.constant 0 : index
      %276 = vector.load %arg22[%c0_206, %c0_207] : memref<16x128xf32, #tpu.memory_space<vmem>>, vector<16x128xf32>
      tpu.vector_store %arg22[%c0_206, %c0_207], %275 {strides = array<i32>} : memref<16x128xf32, #tpu.memory_space<vmem>>, vector<16x128xf32>,
    } else {
    }
    %c0 = arith.constant 0 : index
    %c0_1 = arith.constant 0 : index
    %3 = vector.load %arg22[%c0, %c0_1] : memref<16x128xf32, #tpu.memory_space<vmem>>, vector<16x128xf32>
    %c0_2 = arith.constant 0 : index
    %c0_3 = arith.constant 0 : index
    %c0_4 = arith.constant 0 : index
    %4 = vector.load %arg3[%c0_2, %c0_3, %c0_4] : memref<1x16x16xf32, #tpu.memory_space<vmem>>, vector<1x16x16xf32>
    %5 = vector.shape_cast %4 : vector<1x16x16xf32> to vector<16x16xf32>
    %cst = arith.constant 0.000000e+00 : f32
    %6 = vector.broadcast %cst : f32 to vector<16x128xf32>
    %c0_5 = arith.constant 0 : index
    %c0_6 = arith.constant 0 : index
    %c0_7 = arith.constant 0 : index
    %c0_8 = arith.constant 0 : index
    %7 = vector.load %arg6[%c0_5, %c0_6, %c0_7, %c0_8] : memref<1x4x128x32xf32, #tpu.memory_space<vmem>>, vector<1x1x128x32xf32>
    %8 = vector.shape_cast %7 : vector<1x1x128x32xf32> to vector<128x32xf32>
    %cst_9 = arith.constant dense<0.000000e+00> : vector<16x32xf32>
    %9 = tpu.matmul %3, %8, %cst_9 {dimension_numbers = #tpu.dot_dimension_numbers<[1], [0], [0], [1], [0, 0, 1, 1], [], []>} : vector<16x128xf32>, vector<128x32xf32>, vector<16x32xf32> -> vector<16x32xf32>
    %c0_10 = arith.constant 0 : index
    %c0_11 = arith.constant 0 : index
    %c0_12 = arith.constant 0 : index
    %c0_13 = arith.constant 0 : index
    %10 = vector.load %arg7[%c0_10, %c0_11, %c0_12, %c0_13] : memref<1x4x1x32xf32, #tpu.memory_space<vmem>>, vector<1x1x1x32xf32>
    %11 = vector.shape_cast %10 : vector<1x1x1x32xf32> to vector<1x32xf32>
    %12 = vector.broadcast %11 : vector<1x32xf32> to vector<16x32xf32>
    %13 = arith.addf %9, %12 : vector<16x32xf32>
    %c0_14 = arith.constant 0 : index
    %c0_15 = arith.constant 0 : index
    %c0_16 = arith.constant 0 : index
    %c0_17 = arith.constant 0 : index
    %14 = vector.load %arg8[%c0_14, %c0_15, %c0_16, %c0_17] : memref<1x4x128x32xf32, #tpu.memory_space<vmem>>, vector<1x1x128x32xf32>
    %15 = vector.shape_cast %14 : vector<1x1x128x32xf32> to vector<128x32xf32>
    %cst_18 = arith.constant dense<0.000000e+00> : vector<16x32xf32>
    %16 = tpu.matmul %3, %15, %cst_18 {dimension_numbers = #tpu.dot_dimension_numbers<[1], [0], [0], [1], [0, 0, 1, 1], [], []>} : vector<16x128xf32>, vector<128x32xf32>, vector<16x32xf32> -> vector<16x32xf32>
    %c0_19 = arith.constant 0 : index
    %c0_20 = arith.constant 0 : index
    %c0_21 = arith.constant 0 : index
    %c0_22 = arith.constant 0 : index
    %17 = vector.load %arg9[%c0_19, %c0_20, %c0_21, %c0_22] : memref<1x4x1x32xf32, #tpu.memory_space<vmem>>, vector<1x1x1x32xf32>
    %18 = vector.shape_cast %17 : vector<1x1x1x32xf32> to vector<1x32xf32>
    %19 = vector.broadcast %18 : vector<1x32xf32> to vector<16x32xf32>
    %20 = arith.addf %16, %19 : vector<16x32xf32>
    %c0_23 = arith.constant 0 : index
    %c0_24 = arith.constant 0 : index
    %c0_25 = arith.constant 0 : index
    %c0_26 = arith.constant 0 : index
    %21 = vector.load %arg10[%c0_23, %c0_24, %c0_25, %c0_26] : memref<1x4x128x32xf32, #tpu.memory_space<vmem>>, vector<1x1x128x32xf32>
    %22 = vector.shape_cast %21 : vector<1x1x128x32xf32> to vector<128x32xf32>
    %cst_27 = arith.constant dense<0.000000e+00> : vector<16x32xf32>
    %23 = tpu.matmul %3, %22, %cst_27 {dimension_numbers = #tpu.dot_dimension_numbers<[1], [0], [0], [1], [0, 0, 1, 1], [], []>} : vector<16x128xf32>, vector<128x32xf32>, vector<16x32xf32> -> vector<16x32xf32>
    %c0_28 = arith.constant 0 : index
    %c0_29 = arith.constant 0 : index
    %c0_30 = arith.constant 0 : index
    %c0_31 = arith.constant 0 : index
    %24 = vector.load %arg11[%c0_28, %c0_29, %c0_30, %c0_31] : memref<1x4x1x32xf32, #tpu.memory_space<vmem>>, vector<1x1x1x32xf32>
    %25 = vector.shape_cast %24 : vector<1x1x1x32xf32> to vector<1x32xf32>
    %26 = vector.broadcast %25 : vector<1x32xf32> to vector<16x32xf32>
    %27 = arith.addf %23, %26 : vector<16x32xf32>
    %28 = tpu.transpose %20, [1, 0] : vector<16x32xf32> -> vector<32x16xf32>
    %cst_32 = arith.constant dense<0.000000e+00> : vector<16x16xf32>
    %29 = tpu.matmul %13, %28, %cst_32 {dimension_numbers = #tpu.dot_dimension_numbers<[1], [0], [0], [1], [0, 0, 1, 1], [], []>} : vector<16x32xf32>, vector<32x16xf32>, vector<16x16xf32> -> vector<16x16xf32>
    %cst_33 = arith.constant 0.176776692 : f32
    %30 = vector.broadcast %cst_33 : f32 to vector<16x16xf32>
    %31 = arith.mulf %29, %30 : vector<16x16xf32>
    %32 = arith.addf %31, %5 : vector<16x16xf32>
    %cst_34 = arith.constant dense<0xFF800000> : vector<16xf32>
    %33 = vector.multi_reduction <maximumf>, %32, %cst_34 [1] : vector<16x16xf32> to vector<16xf32>
    %34 = vector.shape_cast %33 : vector<16xf32> to vector<16x1xf32>
    %35 = vector.broadcast %34 : vector<16x1xf32> to vector<16x16xf32>
    %36 = arith.subf %32, %35 : vector<16x16xf32>
    %37 = math.exp %36 : vector<16x16xf32>
    %cst_35 = arith.constant dense<0.000000e+00> : vector<16xf32>
    %38 = vector.multi_reduction <add>, %37, %cst_35 [1] : vector<16x16xf32> to vector<16xf32>
    %39 = vector.shape_cast %38 : vector<16xf32> to vector<16x1xf32>
    %40 = tpu.reciprocal %39 {approx = true} : vector<16x1xf32> -> vector<16x1xf32>
    %41 = vector.broadcast %40 : vector<16x1xf32> to vector<16x16xf32>
    %42 = arith.mulf %37, %41 : vector<16x16xf32>
    %cst_36 = arith.constant dense<0.000000e+00> : vector<16x32xf32>
    %43 = tpu.matmul %42, %27, %cst_36 {dimension_numbers = #tpu.dot_dimension_numbers<[1], [0], [0], [1], [0, 0, 1, 1], [], []>} : vector<16x16xf32>, vector<16x32xf32>, vector<16x32xf32> -> vector<16x32xf32>
    %c0_37 = arith.constant 0 : index
    %c0_38 = arith.constant 0 : index
    %c0_39 = arith.constant 0 : index
    %c0_40 = arith.constant 0 : index
    %44 = vector.load %arg12[%c0_37, %c0_38, %c0_39, %c0_40] : memref<1x4x32x128xf32, #tpu.memory_space<vmem>>, vector<1x1x32x128xf32>
    %45 = vector.shape_cast %44 : vector<1x1x32x128xf32> to vector<32x128xf32>
    %cst_41 = arith.constant dense<0.000000e+00> : vector<16x128xf32>
    %46 = tpu.matmul %43, %45, %cst_41 {dimension_numbers = #tpu.dot_dimension_numbers<[1], [0], [0], [1], [0, 0, 1, 1], [], []>} : vector<16x32xf32>, vector<32x128xf32>, vector<16x128xf32> -> vector<16x128xf32>
    %47 = arith.addf %6, %46 : vector<16x128xf32>
    %c0_42 = arith.constant 0 : index
    %c1 = arith.constant 1 : index
    %c0_43 = arith.constant 0 : index
    %c0_44 = arith.constant 0 : index
    %48 = vector.load %arg6[%c0_42, %c1, %c0_43, %c0_44] : memref<1x4x128x32xf32, #tpu.memory_space<vmem>>, vector<1x1x128x32xf32>
    %49 = vector.shape_cast %48 : vector<1x1x128x32xf32> to vector<128x32xf32>
    %cst_45 = arith.constant dense<0.000000e+00> : vector<16x32xf32>
    %50 = tpu.matmul %3, %49, %cst_45 {dimension_numbers = #tpu.dot_dimension_numbers<[1], [0], [0], [1], [0, 0, 1, 1], [], []>} : vector<16x128xf32>, vector<128x32xf32>, vector<16x32xf32> -> vector<16x32xf32>
    %c0_46 = arith.constant 0 : index
    %c1_47 = arith.constant 1 : index
    %c0_48 = arith.constant 0 : index
    %c0_49 = arith.constant 0 : index
    %51 = vector.load %arg7[%c0_46, %c1_47, %c0_48, %c0_49] : memref<1x4x1x32xf32, #tpu.memory_space<vmem>>, vector<1x1x1x32xf32>
    %52 = vector.shape_cast %51 : vector<1x1x1x32xf32> to vector<1x32xf32>
    %53 = vector.broadcast %52 : vector<1x32xf32> to vector<16x32xf32>
    %54 = arith.addf %50, %53 : vector<16x32xf32>
    %c0_50 = arith.constant 0 : index
    %c1_51 = arith.constant 1 : index
    %c0_52 = arith.constant 0 : index
    %c0_53 = arith.constant 0 : index
    %55 = vector.load %arg8[%c0_50, %c1_51, %c0_52, %c0_53] : memref<1x4x128x32xf32, #tpu.memory_space<vmem>>, vector<1x1x128x32xf32>
    %56 = vector.shape_cast %55 : vector<1x1x128x32xf32> to vector<128x32xf32>
    %cst_54 = arith.constant dense<0.000000e+00> : vector<16x32xf32>
    %57 = tpu.matmul %3, %56, %cst_54 {dimension_numbers = #tpu.dot_dimension_numbers<[1], [0], [0], [1], [0, 0, 1, 1], [], []>} : vector<16x128xf32>, vector<128x32xf32>, vector<16x32xf32> -> vector<16x32xf32>
    %c0_55 = arith.constant 0 : index
    %c1_56 = arith.constant 1 : index
    %c0_57 = arith.constant 0 : index
    %c0_58 = arith.constant 0 : index
    %58 = vector.load %arg9[%c0_55, %c1_56, %c0_57, %c0_58] : memref<1x4x1x32xf32, #tpu.memory_space<vmem>>, vector<1x1x1x32xf32>
    %59 = vector.shape_cast %58 : vector<1x1x1x32xf32> to vector<1x32xf32>
    %60 = vector.broadcast %59 : vector<1x32xf32> to vector<16x32xf32>
    %61 = arith.addf %57, %60 : vector<16x32xf32>
    %c0_59 = arith.constant 0 : index
    %c1_60 = arith.constant 1 : index
    %c0_61 = arith.constant 0 : index
    %c0_62 = arith.constant 0 : index
    %62 = vector.load %arg10[%c0_59, %c1_60, %c0_61, %c0_62] : memref<1x4x128x32xf32, #tpu.memory_space<vmem>>, vector<1x1x128x32xf32>
    %63 = vector.shape_cast %62 : vector<1x1x128x32xf32> to vector<128x32xf32>
    %cst_63 = arith.constant dense<0.000000e+00> : vector<16x32xf32>
    %64 = tpu.matmul %3, %63, %cst_63 {dimension_numbers = #tpu.dot_dimension_numbers<[1], [0], [0], [1], [0, 0, 1, 1], [], []>} : vector<16x128xf32>, vector<128x32xf32>, vector<16x32xf32> -> vector<16x32xf32>
    %c0_64 = arith.constant 0 : index
    %c1_65 = arith.constant 1 : index
    %c0_66 = arith.constant 0 : index
    %c0_67 = arith.constant 0 : index
    %65 = vector.load %arg11[%c0_64, %c1_65, %c0_66, %c0_67] : memref<1x4x1x32xf32, #tpu.memory_space<vmem>>, vector<1x1x1x32xf32>
    %66 = vector.shape_cast %65 : vector<1x1x1x32xf32> to vector<1x32xf32>
    %67 = vector.broadcast %66 : vector<1x32xf32> to vector<16x32xf32>
    %68 = arith.addf %64, %67 : vector<16x32xf32>
    %69 = tpu.transpose %61, [1, 0] : vector<16x32xf32> -> vector<32x16xf32>
    %cst_68 = arith.constant dense<0.000000e+00> : vector<16x16xf32>
    %70 = tpu.matmul %54, %69, %cst_68 {dimension_numbers = #tpu.dot_dimension_numbers<[1], [0], [0], [1], [0, 0, 1, 1], [], []>} : vector<16x32xf32>, vector<32x16xf32>, vector<16x16xf32> -> vector<16x16xf32>
    %cst_69 = arith.constant 0.176776692 : f32
    %71 = vector.broadcast %cst_69 : f32 to vector<16x16xf32>
    %72 = arith.mulf %70, %71 : vector<16x16xf32>
    %73 = arith.addf %72, %5 : vector<16x16xf32>
    %cst_70 = arith.constant dense<0xFF800000> : vector<16xf32>
    %74 = vector.multi_reduction <maximumf>, %73, %cst_70 [1] : vector<16x16xf32> to vector<16xf32>
    %75 = vector.shape_cast %74 : vector<16xf32> to vector<16x1xf32>
    %76 = vector.broadcast %75 : vector<16x1xf32> to vector<16x16xf32>
    %77 = arith.subf %73, %76 : vector<16x16xf32>
    %78 = math.exp %77 : vector<16x16xf32>
    %cst_71 = arith.constant dense<0.000000e+00> : vector<16xf32>
    %79 = vector.multi_reduction <add>, %78, %cst_71 [1] : vector<16x16xf32> to vector<16xf32>
    %80 = vector.shape_cast %79 : vector<16xf32> to vector<16x1xf32>
    %81 = tpu.reciprocal %80 {approx = true} : vector<16x1xf32> -> vector<16x1xf32>
    %82 = vector.broadcast %81 : vector<16x1xf32> to vector<16x16xf32>
    %83 = arith.mulf %78, %82 : vector<16x16xf32>
    %cst_72 = arith.constant dense<0.000000e+00> : vector<16x32xf32>
    %84 = tpu.matmul %83, %68, %cst_72 {dimension_numbers = #tpu.dot_dimension_numbers<[1], [0], [0], [1], [0, 0, 1, 1], [], []>} : vector<16x16xf32>, vector<16x32xf32>, vector<16x32xf32> -> vector<16x32xf32>
    %c0_73 = arith.constant 0 : index
    %c1_74 = arith.constant 1 : index
    %c0_75 = arith.constant 0 : index
    %c0_76 = arith.constant 0 : index
    %85 = vector.load %arg12[%c0_73, %c1_74, %c0_75, %c0_76] : memref<1x4x32x128xf32, #tpu.memory_space<vmem>>, vector<1x1x32x128xf32>
    %86 = vector.shape_cast %85 : vector<1x1x32x128xf32> to vector<32x128xf32>
    %cst_77 = arith.constant dense<0.000000e+00> : vector<16x128xf32>
    %87 = tpu.matmul %84, %86, %cst_77 {dimension_numbers = #tpu.dot_dimension_numbers<[1], [0], [0], [1], [0, 0, 1, 1], [], []>} : vector<16x32xf32>, vector<32x128xf32>, vector<16x128xf32> -> vector<16x128xf32>
    %88 = arith.addf %47, %87 : vector<16x128xf32>
    %c0_78 = arith.constant 0 : index
    %c2 = arith.constant 2 : index
    %c0_79 = arith.constant 0 : index
    %c0_80 = arith.constant 0 : index
    %89 = vector.load %arg6[%c0_78, %c2, %c0_79, %c0_80] : memref<1x4x128x32xf32, #tpu.memory_space<vmem>>, vector<1x1x128x32xf32>
    %90 = vector.shape_cast %89 : vector<1x1x128x32xf32> to vector<128x32xf32>
    %cst_81 = arith.constant dense<0.000000e+00> : vector<16x32xf32>
    %91 = tpu.matmul %3, %90, %cst_81 {dimension_numbers = #tpu.dot_dimension_numbers<[1], [0], [0], [1], [0, 0, 1, 1], [], []>} : vector<16x128xf32>, vector<128x32xf32>, vector<16x32xf32> -> vector<16x32xf32>
    %c0_82 = arith.constant 0 : index
    %c2_83 = arith.constant 2 : index
    %c0_84 = arith.constant 0 : index
    %c0_85 = arith.constant 0 : index
    %92 = vector.load %arg7[%c0_82, %c2_83, %c0_84, %c0_85] : memref<1x4x1x32xf32, #tpu.memory_space<vmem>>, vector<1x1x1x32xf32>
    %93 = vector.shape_cast %92 : vector<1x1x1x32xf32> to vector<1x32xf32>
    %94 = vector.broadcast %93 : vector<1x32xf32> to vector<16x32xf32>
    %95 = arith.addf %91, %94 : vector<16x32xf32>
    %c0_86 = arith.constant 0 : index
    %c2_87 = arith.constant 2 : index
    %c0_88 = arith.constant 0 : index
    %c0_89 = arith.constant 0 : index
    %96 = vector.load %arg8[%c0_86, %c2_87, %c0_88, %c0_89] : memref<1x4x128x32xf32, #tpu.memory_space<vmem>>, vector<1x1x128x32xf32>
    %97 = vector.shape_cast %96 : vector<1x1x128x32xf32> to vector<128x32xf32>
    %cst_90 = arith.constant dense<0.000000e+00> : vector<16x32xf32>
    %98 = tpu.matmul %3, %97, %cst_90 {dimension_numbers = #tpu.dot_dimension_numbers<[1], [0], [0], [1], [0, 0, 1, 1], [], []>} : vector<16x128xf32>, vector<128x32xf32>, vector<16x32xf32> -> vector<16x32xf32>
    %c0_91 = arith.constant 0 : index
    %c2_92 = arith.constant 2 : index
    %c0_93 = arith.constant 0 : index
    %c0_94 = arith.constant 0 : index
    %99 = vector.load %arg9[%c0_91, %c2_92, %c0_93, %c0_94] : memref<1x4x1x32xf32, #tpu.memory_space<vmem>>, vector<1x1x1x32xf32>
    %100 = vector.shape_cast %99 : vector<1x1x1x32xf32> to vector<1x32xf32>
    %101 = vector.broadcast %100 : vector<1x32xf32> to vector<16x32xf32>
    %102 = arith.addf %98, %101 : vector<16x32xf32>
    %c0_95 = arith.constant 0 : index
    %c2_96 = arith.constant 2 : index
    %c0_97 = arith.constant 0 : index
    %c0_98 = arith.constant 0 : index
    %103 = vector.load %arg10[%c0_95, %c2_96, %c0_97, %c0_98] : memref<1x4x128x32xf32, #tpu.memory_space<vmem>>, vector<1x1x128x32xf32>
    %104 = vector.shape_cast %103 : vector<1x1x128x32xf32> to vector<128x32xf32>
    %cst_99 = arith.constant dense<0.000000e+00> : vector<16x32xf32>
    %105 = tpu.matmul %3, %104, %cst_99 {dimension_numbers = #tpu.dot_dimension_numbers<[1], [0], [0], [1], [0, 0, 1, 1], [], []>} : vector<16x128xf32>, vector<128x32xf32>, vector<16x32xf32> -> vector<16x32xf32>
    %c0_100 = arith.constant 0 : index
    %c2_101 = arith.constant 2 : index
    %c0_102 = arith.constant 0 : index
    %c0_103 = arith.constant 0 : index
    %106 = vector.load %arg11[%c0_100, %c2_101, %c0_102, %c0_103] : memref<1x4x1x32xf32, #tpu.memory_space<vmem>>, vector<1x1x1x32xf32>
    %107 = vector.shape_cast %106 : vector<1x1x1x32xf32> to vector<1x32xf32>
    %108 = vector.broadcast %107 : vector<1x32xf32> to vector<16x32xf32>
    %109 = arith.addf %105, %108 : vector<16x32xf32>
    %110 = tpu.transpose %102, [1, 0] : vector<16x32xf32> -> vector<32x16xf32>
    %cst_104 = arith.constant dense<0.000000e+00> : vector<16x16xf32>
    %111 = tpu.matmul %95, %110, %cst_104 {dimension_numbers = #tpu.dot_dimension_numbers<[1], [0], [0], [1], [0, 0, 1, 1], [], []>} : vector<16x32xf32>, vector<32x16xf32>, vector<16x16xf32> -> vector<16x16xf32>
    %cst_105 = arith.constant 0.176776692 : f32
    %112 = vector.broadcast %cst_105 : f32 to vector<16x16xf32>
    %113 = arith.mulf %111, %112 : vector<16x16xf32>
    %114 = arith.addf %113, %5 : vector<16x16xf32>
    %cst_106 = arith.constant dense<0xFF800000> : vector<16xf32>
    %115 = vector.multi_reduction <maximumf>, %114, %cst_106 [1] : vector<16x16xf32> to vector<16xf32>
    %116 = vector.shape_cast %115 : vector<16xf32> to vector<16x1xf32>
    %117 = vector.broadcast %116 : vector<16x1xf32> to vector<16x16xf32>
    %118 = arith.subf %114, %117 : vector<16x16xf32>
    %119 = math.exp %118 : vector<16x16xf32>
    %cst_107 = arith.constant dense<0.000000e+00> : vector<16xf32>
    %120 = vector.multi_reduction <add>, %119, %cst_107 [1] : vector<16x16xf32> to vector<16xf32>
    %121 = vector.shape_cast %120 : vector<16xf32> to vector<16x1xf32>
    %122 = tpu.reciprocal %121 {approx = true} : vector<16x1xf32> -> vector<16x1xf32>
    %123 = vector.broadcast %122 : vector<16x1xf32> to vector<16x16xf32>
    %124 = arith.mulf %119, %123 : vector<16x16xf32>
    %cst_108 = arith.constant dense<0.000000e+00> : vector<16x32xf32>
    %125 = tpu.matmul %124, %109, %cst_108 {dimension_numbers = #tpu.dot_dimension_numbers<[1], [0], [0], [1], [0, 0, 1, 1], [], []>} : vector<16x16xf32>, vector<16x32xf32>, vector<16x32xf32> -> vector<16x32xf32>
    %c0_109 = arith.constant 0 : index
    %c2_110 = arith.constant 2 : index
    %c0_111 = arith.constant 0 : index
    %c0_112 = arith.constant 0 : index
    %126 = vector.load %arg12[%c0_109, %c2_110, %c0_111, %c0_112] : memref<1x4x32x128xf32, #tpu.memory_space<vmem>>, vector<1x1x32x128xf32>
    %127 = vector.shape_cast %126 : vector<1x1x32x128xf32> to vector<32x128xf32>
    %cst_113 = arith.constant dense<0.000000e+00> : vector<16x128xf32>
    %128 = tpu.matmul %125, %127, %cst_113 {dimension_numbers = #tpu.dot_dimension_numbers<[1], [0], [0], [1], [0, 0, 1, 1], [], []>} : vector<16x32xf32>, vector<32x128xf32>, vector<16x128xf32> -> vector<16x128xf32>
    %129 = arith.addf %88, %128 : vector<16x128xf32>
    %c0_114 = arith.constant 0 : index
    %c3 = arith.constant 3 : index
    %c0_115 = arith.constant 0 : index
    %c0_116 = arith.constant 0 : index
    %130 = vector.load %arg6[%c0_114, %c3, %c0_115, %c0_116] : memref<1x4x128x32xf32, #tpu.memory_space<vmem>>, vector<1x1x128x32xf32>
    %131 = vector.shape_cast %130 : vector<1x1x128x32xf32> to vector<128x32xf32>
    %cst_117 = arith.constant dense<0.000000e+00> : vector<16x32xf32>
    %132 = tpu.matmul %3, %131, %cst_117 {dimension_numbers = #tpu.dot_dimension_numbers<[1], [0], [0], [1], [0, 0, 1, 1], [], []>} : vector<16x128xf32>, vector<128x32xf32>, vector<16x32xf32> -> vector<16x32xf32>
    %c0_118 = arith.constant 0 : index
    %c3_119 = arith.constant 3 : index
    %c0_120 = arith.constant 0 : index
    %c0_121 = arith.constant 0 : index
    %133 = vector.load %arg7[%c0_118, %c3_119, %c0_120, %c0_121] : memref<1x4x1x32xf32, #tpu.memory_space<vmem>>, vector<1x1x1x32xf32>
    %134 = vector.shape_cast %133 : vector<1x1x1x32xf32> to vector<1x32xf32>
    %135 = vector.broadcast %134 : vector<1x32xf32> to vector<16x32xf32>
    %136 = arith.addf %132, %135 : vector<16x32xf32>
    %c0_122 = arith.constant 0 : index
    %c3_123 = arith.constant 3 : index
    %c0_124 = arith.constant 0 : index
    %c0_125 = arith.constant 0 : index
    %137 = vector.load %arg8[%c0_122, %c3_123, %c0_124, %c0_125] : memref<1x4x128x32xf32, #tpu.memory_space<vmem>>, vector<1x1x128x32xf32>
    %138 = vector.shape_cast %137 : vector<1x1x128x32xf32> to vector<128x32xf32>
    %cst_126 = arith.constant dense<0.000000e+00> : vector<16x32xf32>
    %139 = tpu.matmul %3, %138, %cst_126 {dimension_numbers = #tpu.dot_dimension_numbers<[1], [0], [0], [1], [0, 0, 1, 1], [], []>} : vector<16x128xf32>, vector<128x32xf32>, vector<16x32xf32> -> vector<16x32xf32>
    %c0_127 = arith.constant 0 : index
    %c3_128 = arith.constant 3 : index
    %c0_129 = arith.constant 0 : index
    %c0_130 = arith.constant 0 : index
    %140 = vector.load %arg9[%c0_127, %c3_128, %c0_129, %c0_130] : memref<1x4x1x32xf32, #tpu.memory_space<vmem>>, vector<1x1x1x32xf32>
    %141 = vector.shape_cast %140 : vector<1x1x1x32xf32> to vector<1x32xf32>
    %142 = vector.broadcast %141 : vector<1x32xf32> to vector<16x32xf32>
    %143 = arith.addf %139, %142 : vector<16x32xf32>
    %c0_131 = arith.constant 0 : index
    %c3_132 = arith.constant 3 : index
    %c0_133 = arith.constant 0 : index
    %c0_134 = arith.constant 0 : index
    %144 = vector.load %arg10[%c0_131, %c3_132, %c0_133, %c0_134] : memref<1x4x128x32xf32, #tpu.memory_space<vmem>>, vector<1x1x128x32xf32>
    %145 = vector.shape_cast %144 : vector<1x1x128x32xf32> to vector<128x32xf32>
    %cst_135 = arith.constant dense<0.000000e+00> : vector<16x32xf32>
    %146 = tpu.matmul %3, %145, %cst_135 {dimension_numbers = #tpu.dot_dimension_numbers<[1], [0], [0], [1], [0, 0, 1, 1], [], []>} : vector<16x128xf32>, vector<128x32xf32>, vector<16x32xf32> -> vector<16x32xf32>
    %c0_136 = arith.constant 0 : index
    %c3_137 = arith.constant 3 : index
    %c0_138 = arith.constant 0 : index
    %c0_139 = arith.constant 0 : index
    %147 = vector.load %arg11[%c0_136, %c3_137, %c0_138, %c0_139] : memref<1x4x1x32xf32, #tpu.memory_space<vmem>>, vector<1x1x1x32xf32>
    %148 = vector.shape_cast %147 : vector<1x1x1x32xf32> to vector<1x32xf32>
    %149 = vector.broadcast %148 : vector<1x32xf32> to vector<16x32xf32>
    %150 = arith.addf %146, %149 : vector<16x32xf32>
    %151 = tpu.transpose %143, [1, 0] : vector<16x32xf32> -> vector<32x16xf32>
    %cst_140 = arith.constant dense<0.000000e+00> : vector<16x16xf32>
    %152 = tpu.matmul %136, %151, %cst_140 {dimension_numbers = #tpu.dot_dimension_numbers<[1], [0], [0], [1], [0, 0, 1, 1], [], []>} : vector<16x32xf32>, vector<32x16xf32>, vector<16x16xf32> -> vector<16x16xf32>
    %cst_141 = arith.constant 0.176776692 : f32
    %153 = vector.broadcast %cst_141 : f32 to vector<16x16xf32>
    %154 = arith.mulf %152, %153 : vector<16x16xf32>
    %155 = arith.addf %154, %5 : vector<16x16xf32>
    %cst_142 = arith.constant dense<0xFF800000> : vector<16xf32>
    %156 = vector.multi_reduction <maximumf>, %155, %cst_142 [1] : vector<16x16xf32> to vector<16xf32>
    %157 = vector.shape_cast %156 : vector<16xf32> to vector<16x1xf32>
    %158 = vector.broadcast %157 : vector<16x1xf32> to vector<16x16xf32>
    %159 = arith.subf %155, %158 : vector<16x16xf32>
    %160 = math.exp %159 : vector<16x16xf32>
    %cst_143 = arith.constant dense<0.000000e+00> : vector<16xf32>
    %161 = vector.multi_reduction <add>, %160, %cst_143 [1] : vector<16x16xf32> to vector<16xf32>
    %162 = vector.shape_cast %161 : vector<16xf32> to vector<16x1xf32>
    %163 = tpu.reciprocal %162 {approx = true} : vector<16x1xf32> -> vector<16x1xf32>
    %164 = vector.broadcast %163 : vector<16x1xf32> to vector<16x16xf32>
    %165 = arith.mulf %160, %164 : vector<16x16xf32>
    %cst_144 = arith.constant dense<0.000000e+00> : vector<16x32xf32>
    %166 = tpu.matmul %165, %150, %cst_144 {dimension_numbers = #tpu.dot_dimension_numbers<[1], [0], [0], [1], [0, 0, 1, 1], [], []>} : vector<16x16xf32>, vector<16x32xf32>, vector<16x32xf32> -> vector<16x32xf32>
    %c0_145 = arith.constant 0 : index
    %c3_146 = arith.constant 3 : index
    %c0_147 = arith.constant 0 : index
    %c0_148 = arith.constant 0 : index
    %167 = vector.load %arg12[%c0_145, %c3_146, %c0_147, %c0_148] : memref<1x4x32x128xf32, #tpu.memory_space<vmem>>, vector<1x1x32x128xf32>
    %168 = vector.shape_cast %167 : vector<1x1x32x128xf32> to vector<32x128xf32>
    %cst_149 = arith.constant dense<0.000000e+00> : vector<16x128xf32>
    %169 = tpu.matmul %166, %168, %cst_149 {dimension_numbers = #tpu.dot_dimension_numbers<[1], [0], [0], [1], [0, 0, 1, 1], [], []>} : vector<16x32xf32>, vector<32x128xf32>, vector<16x128xf32> -> vector<16x128xf32>
    %170 = arith.addf %129, %169 : vector<16x128xf32>
    %c0_150 = arith.constant 0 : index
    %c0_151 = arith.constant 0 : index
    %c0_152 = arith.constant 0 : index
    %171 = vector.load %arg13[%c0_150, %c0_151, %c0_152] : memref<1x1x128xf32, #tpu.memory_space<vmem>>, vector<1x1x128xf32>
    %172 = vector.shape_cast %171 : vector<1x1x128xf32> to vector<1x128xf32>
    %173 = vector.broadcast %172 : vector<1x128xf32> to vector<16x128xf32>
    %174 = arith.addf %170, %173 : vector<16x128xf32>
    %175 = arith.addf %174, %3 : vector<16x128xf32>
    %c0_153 = arith.constant 0 : index
    %c0_154 = arith.constant 0 : index
    %c0_155 = arith.constant 0 : index
    %176 = vector.load %arg14[%c0_153, %c0_154, %c0_155] : memref<1x1x128xf32, #tpu.memory_space<vmem>>, vector<1x1x128xf32>
    %177 = vector.shape_cast %176 : vector<1x1x128xf32> to vector<1x128xf32>
    %c0_156 = arith.constant 0 : index
    %c0_157 = arith.constant 0 : index
    %c0_158 = arith.constant 0 : index
    %178 = vector.load %arg15[%c0_156, %c0_157, %c0_158] : memref<1x1x128xf32, #tpu.memory_space<vmem>>, vector<1x1x128xf32>
    %179 = vector.shape_cast %178 : vector<1x1x128xf32> to vector<1x128xf32>
    %cst_159 = arith.constant dense<0.000000e+00> : vector<16xf32>
    %180 = vector.multi_reduction <add>, %175, %cst_159 [1] : vector<16x128xf32> to vector<16xf32>
    %181 = vector.shape_cast %180 : vector<16xf32> to vector<16x1xf32>
    %cst_160 = arith.constant 1.280000e+02 : f32
    %182 = vector.broadcast %cst_160 : f32 to vector<16x1xf32>
    %183 = arith.divf %181, %182 : vector<16x1xf32>
    %184 = vector.broadcast %183 : vector<16x1xf32> to vector<16x128xf32>
    %185 = arith.subf %175, %184 : vector<16x128xf32>
    %186 = arith.mulf %185, %185 : vector<16x128xf32>
    %cst_161 = arith.constant dense<0.000000e+00> : vector<16xf32>
    %187 = vector.multi_reduction <add>, %186, %cst_161 [1] : vector<16x128xf32> to vector<16xf32>
    %188 = vector.shape_cast %187 : vector<16xf32> to vector<16x1xf32>
    %cst_162 = arith.constant 1.280000e+02 : f32
    %189 = vector.broadcast %cst_162 : f32 to vector<16x1xf32>
    %190 = arith.divf %188, %189 : vector<16x1xf32>
    %cst_163 = arith.constant 9.99999996E-13 : f32
    %191 = vector.broadcast %cst_163 : f32 to vector<16x1xf32>
    %192 = arith.addf %190, %191 : vector<16x1xf32>
    %193 = math.rsqrt %192 : vector<16x1xf32>
    %194 = vector.broadcast %193 : vector<16x1xf32> to vector<16x128xf32>
    %195 = arith.mulf %185, %194 : vector<16x128xf32>
    %196 = vector.broadcast %177 : vector<1x128xf32> to vector<16x128xf32>
    %197 = arith.mulf %195, %196 : vector<16x128xf32>
    %198 = vector.broadcast %179 : vector<1x128xf32> to vector<16x128xf32>
    %199 = arith.addf %197, %198 : vector<16x128xf32>
    %c0_164 = arith.constant 0 : index
    %c0_165 = arith.constant 0 : index
    %c0_166 = arith.constant 0 : index
    %200 = vector.load %arg16[%c0_164, %c0_165, %c0_166] : memref<1x128x512xf32, #tpu.memory_space<vmem>>, vector<1x128x512xf32>
    %201 = vector.shape_cast %200 : vector<1x128x512xf32> to vector<128x512xf32>
    %cst_167 = arith.constant dense<0.000000e+00> : vector<16x512xf32>
    %202 = tpu.matmul %199, %201, %cst_167 {dimension_numbers = #tpu.dot_dimension_numbers<[1], [0], [0], [1], [0, 0, 1, 1], [], []>} : vector<16x128xf32>, vector<128x512xf32>, vector<16x512xf32> -> vector<16x512xf32>
    %c0_168 = arith.constant 0 : index
    %c0_169 = arith.constant 0 : index
    %c0_170 = arith.constant 0 : index
    %203 = vector.load %arg17[%c0_168, %c0_169, %c0_170] : memref<1x1x512xf32, #tpu.memory_space<vmem>>, vector<1x1x512xf32>
    %204 = vector.shape_cast %203 : vector<1x1x512xf32> to vector<1x512xf32>
    %205 = vector.broadcast %204 : vector<1x512xf32> to vector<16x512xf32>
    %206 = arith.addf %202, %205 : vector<16x512xf32>
    %cst_171 = arith.constant 5.000000e-01 : f32
    %207 = vector.broadcast %cst_171 : f32 to vector<16x512xf32>
    %208 = arith.mulf %207, %206 : vector<16x512xf32>
    %cst_172 = arith.constant 4.471500e-02 : f32
    %209 = vector.broadcast %cst_172 : f32 to vector<16x512xf32>
    %210 = arith.mulf %209, %206 : vector<16x512xf32>
    %211 = arith.mulf %210, %206 : vector<16x512xf32>
    %212 = arith.mulf %211, %206 : vector<16x512xf32>
    %213 = arith.addf %206, %212 : vector<16x512xf32>
    %cst_173 = arith.constant 0.797884583 : f32
    %214 = vector.broadcast %cst_173 : f32 to vector<16x512xf32>
    %215 = arith.mulf %214, %213 : vector<16x512xf32>
    %216 = math.tanh %215 : vector<16x512xf32>
    %cst_174 = arith.constant 1.000000e+00 : f32
    %217 = vector.broadcast %cst_174 : f32 to vector<16x512xf32>
    %218 = arith.addf %217, %216 : vector<16x512xf32>
    %219 = arith.mulf %208, %218 : vector<16x512xf32>
    %c0_175 = arith.constant 0 : index
    %c0_176 = arith.constant 0 : index
    %c0_177 = arith.constant 0 : index
    %220 = vector.load %arg18[%c0_175, %c0_176, %c0_177] : memref<1x512x128xf32, #tpu.memory_space<vmem>>, vector<1x512x128xf32>
    %221 = vector.shape_cast %220 : vector<1x512x128xf32> to vector<512x128xf32>
    %cst_178 = arith.constant dense<0.000000e+00> : vector<16x128xf32>
    %222 = tpu.matmul %219, %221, %cst_178 {dimension_numbers = #tpu.dot_dimension_numbers<[1], [0], [0], [1], [0, 0, 1, 1], [], []>} : vector<16x512xf32>, vector<512x128xf32>, vector<16x128xf32> -> vector<16x128xf32>
    %c0_179 = arith.constant 0 : index
    %c0_180 = arith.constant 0 : index
    %c0_181 = arith.constant 0 : index
    %223 = vector.load %arg19[%c0_179, %c0_180, %c0_181] : memref<1x1x128xf32, #tpu.memory_space<vmem>>, vector<1x1x128xf32>
    %224 = vector.shape_cast %223 : vector<1x1x128xf32> to vector<1x128xf32>
    %225 = vector.broadcast %224 : vector<1x128xf32> to vector<16x128xf32>
    %226 = arith.addf %222, %225 : vector<16x128xf32>
    %227 = arith.addf %226, %199 : vector<16x128xf32>
    %c0_182 = arith.constant 0 : index
    %c0_183 = arith.constant 0 : index
    %c0_184 = arith.constant 0 : index
    %228 = vector.load %arg20[%c0_182, %c0_183, %c0_184] : memref<1x1x128xf32, #tpu.memory_space<vmem>>, vector<1x1x128xf32>
    %229 = vector.shape_cast %228 : vector<1x1x128xf32> to vector<1x128xf32>
    %c0_185 = arith.constant 0 : index
    %c0_186 = arith.constant 0 : index
    %c0_187 = arith.constant 0 : index
    %230 = vector.load %arg21[%c0_185, %c0_186, %c0_187] : memref<1x1x128xf32, #tpu.memory_space<vmem>>, vector<1x1x128xf32>
    %231 = vector.shape_cast %230 : vector<1x1x128xf32> to vector<1x128xf32>
    %cst_188 = arith.constant dense<0.000000e+00> : vector<16xf32>
    %232 = vector.multi_reduction <add>, %227, %cst_188 [1] : vector<16x128xf32> to vector<16xf32>
    %233 = vector.shape_cast %232 : vector<16xf32> to vector<16x1xf32>
    %cst_189 = arith.constant 1.280000e+02 : f32
    %234 = vector.broadcast %cst_189 : f32 to vector<16x1xf32>
    %235 = arith.divf %233, %234 : vector<16x1xf32>
    %236 = vector.broadcast %235 : vector<16x1xf32> to vector<16x128xf32>
    %237 = arith.subf %227, %236 : vector<16x128xf32>
    %238 = arith.mulf %237, %237 : vector<16x128xf32>
    %cst_190 = arith.constant dense<0.000000e+00> : vector<16xf32>
    %239 = vector.multi_reduction <add>, %238, %cst_190 [1] : vector<16x128xf32> to vector<16xf32>
    %240 = vector.shape_cast %239 : vector<16xf32> to vector<16x1xf32>
    %cst_191 = arith.constant 1.280000e+02 : f32
    %241 = vector.broadcast %cst_191 : f32 to vector<16x1xf32>
    %242 = arith.divf %240, %241 : vector<16x1xf32>
    %cst_192 = arith.constant 9.99999996E-13 : f32
    %243 = vector.broadcast %cst_192 : f32 to vector<16x1xf32>
    %244 = arith.addf %242, %243 : vector<16x1xf32>
    %245 = math.rsqrt %244 : vector<16x1xf32>
    %246 = vector.broadcast %245 : vector<16x1xf32> to vector<16x128xf32>
    %247 = arith.mulf %237, %246 : vector<16x128xf32>
    %248 = vector.broadcast %229 : vector<1x128xf32> to vector<16x128xf32>
    %249 = arith.mulf %247, %248 : vector<16x128xf32>
    %250 = vector.broadcast %231 : vector<1x128xf32> to vector<16x128xf32>
    %251 = arith.addf %249, %250 : vector<16x128xf32>
    %c0_193 = arith.constant 0 : index
    %c0_194 = arith.constant 0 : index
    %252 = vector.load %arg22[%c0_193, %c0_194] : memref<16x128xf32, #tpu.memory_space<vmem>>, vector<16x128xf32>
    tpu.vector_store %arg22[%c0_193, %c0_194], %251 {strides = array<i32>} : memref<16x128xf32, #tpu.memory_space<vmem>>, vector<16x128xf32>,
    return
  }
  func.func @transform_0(%arg0: i32, %arg1: i32) -> (i32, i32) {
    %c0_i32 = arith.constant 0 : i32
    %c0_i32_0 = arith.constant 0 : i32
    return %arg0, %c0_i32 : i32, i32
  }
  func.func @transform_1(%arg0: i32, %arg1: i32) -> (i32, i32, i32) {
    %c0_i32 = arith.constant 0 : i32
    %c0_i32_0 = arith.constant 0 : i32
    %c0_i32_1 = arith.constant 0 : i32
    return %arg0, %c0_i32, %c0_i32_0 : i32, i32, i32
  }
  func.func @transform_2(%arg0: i32, %arg1: i32) -> (i32, i32) {
    %c0_i32 = arith.constant 0 : i32
    %c0_i32_0 = arith.constant 0 : i32
    %c0_i32_1 = arith.constant 0 : i32
    return %c0_i32, %c0_i32_0 : i32, i32
  }
  func.func @transform_3(%arg0: i32, %arg1: i32) -> (i32, i32) {
    %c0_i32 = arith.constant 0 : i32
    %c0_i32_0 = arith.constant 0 : i32
    %c0_i32_1 = arith.constant 0 : i32
    return %c0_i32, %c0_i32_0 : i32, i32
  }
  func.func @transform_4(%arg0: i32, %arg1: i32) -> (i32, i32, i32, i32) {
    %c0_i32 = arith.constant 0 : i32
    %c0_i32_0 = arith.constant 0 : i32
    %c0_i32_1 = arith.constant 0 : i32
    %c0_i32_2 = arith.constant 0 : i32
    return %arg1, %c0_i32, %c0_i32_0, %c0_i32_1 : i32, i32, i32, i32
  }
  func.func @transform_5(%arg0: i32, %arg1: i32) -> (i32, i32, i32, i32) {
    %c0_i32 = arith.constant 0 : i32
    %c0_i32_0 = arith.constant 0 : i32
    %c0_i32_1 = arith.constant 0 : i32
    %c0_i32_2 = arith.constant 0 : i32
    return %arg1, %c0_i32, %c0_i32_0, %c0_i32_1 : i32, i32, i32, i32
  }
  func.func @transform_6(%arg0: i32, %arg1: i32) -> (i32, i32, i32, i32) {
    %c0_i32 = arith.constant 0 : i32
    %c0_i32_0 = arith.constant 0 : i32
    %c0_i32_1 = arith.constant 0 : i32
    %c0_i32_2 = arith.constant 0 : i32
    return %arg1, %c0_i32, %c0_i32_0, %c0_i32_1 : i32, i32, i32, i32
  }
  func.func @transform_7(%arg0: i32, %arg1: i32) -> (i32, i32, i32, i32) {
    %c0_i32 = arith.constant 0 : i32
    %c0_i32_0 = arith.constant 0 : i32
    %c0_i32_1 = arith.constant 0 : i32
    %c0_i32_2 = arith.constant 0 : i32
    return %arg1, %c0_i32, %c0_i32_0, %c0_i32_1 : i32, i32, i32, i32
  }
  func.func @transform_8(%arg0: i32, %arg1: i32) -> (i32, i32, i32, i32) {
    %c0_i32 = arith.constant 0 : i32
    %c0_i32_0 = arith.constant 0 : i32
    %c0_i32_1 = arith.constant 0 : i32
    %c0_i32_2 = arith.constant 0 : i32
    return %arg1, %c0_i32, %c0_i32_0, %c0_i32_1 : i32, i32, i32, i32
  }
  func.func @transform_9(%arg0: i32, %arg1: i32) -> (i32, i32, i32, i32) {
    %c0_i32 = arith.constant 0 : i32
    %c0_i32_0 = arith.constant 0 : i32
    %c0_i32_1 = arith.constant 0 : i32
    %c0_i32_2 = arith.constant 0 : i32
    return %arg1, %c0_i32, %c0_i32_0, %c0_i32_1 : i32, i32, i32, i32
  }
  func.func @transform_10(%arg0: i32, %arg1: i32) -> (i32, i32, i32, i32) {
    %c0_i32 = arith.constant 0 : i32
    %c0_i32_0 = arith.constant 0 : i32
    %c0_i32_1 = arith.constant 0 : i32
    %c0_i32_2 = arith.constant 0 : i32
    return %arg1, %c0_i32, %c0_i32_0, %c0_i32_1 : i32, i32, i32, i32
  }
  func.func @transform_11(%arg0: i32, %arg1: i32) -> (i32, i32, i32) {
    %c0_i32 = arith.constant 0 : i32
    %c0_i32_0 = arith.constant 0 : i32
    %c0_i32_1 = arith.constant 0 : i32
    return %arg1, %c0_i32, %c0_i32_0 : i32, i32, i32
  }
  func.func @transform_12(%arg0: i32, %arg1: i32) -> (i32, i32, i32) {
    %c0_i32 = arith.constant 0 : i32
    %c0_i32_0 = arith.constant 0 : i32
    %c0_i32_1 = arith.constant 0 : i32
    return %arg1, %c0_i32, %c0_i32_0 : i32, i32, i32
  }
  func.func @transform_13(%arg0: i32, %arg1: i32) -> (i32, i32, i32) {
    %c0_i32 = arith.constant 0 : i32
    %c0_i32_0 = arith.constant 0 : i32
    %c0_i32_1 = arith.constant 0 : i32
    return %arg1, %c0_i32, %c0_i32_0 : i32, i32, i32
  }
  func.func @transform_14(%arg0: i32, %arg1: i32) -> (i32, i32, i32) {
    %c0_i32 = arith.constant 0 : i32
    %c0_i32_0 = arith.constant 0 : i32
    %c0_i32_1 = arith.constant 0 : i32
    return %arg1, %c0_i32, %c0_i32_0 : i32, i32, i32
  }
  func.func @transform_15(%arg0: i32, %arg1: i32) -> (i32, i32, i32) {
    %c0_i32 = arith.constant 0 : i32
    %c0_i32_0 = arith.constant 0 : i32
    %c0_i32_1 = arith.constant 0 : i32
    return %arg1, %c0_i32, %c0_i32_0 : i32, i32, i32
  }
  func.func @transform_16(%arg0: i32, %arg1: i32) -> (i32, i32, i32) {
    %c0_i32 = arith.constant 0 : i32
    %c0_i32_0 = arith.constant 0 : i32
    %c0_i32_1 = arith.constant 0 : i32
    return %arg1, %c0_i32, %c0_i32_0 : i32, i32, i32
  }
  func.func @transform_17(%arg0: i32, %arg1: i32) -> (i32, i32, i32) {
    %c0_i32 = arith.constant 0 : i32
    %c0_i32_0 = arith.constant 0 : i32
    %c0_i32_1 = arith.constant 0 : i32
    return %arg1, %c0_i32, %c0_i32_0 : i32, i32, i32
  }
  func.func @transform_18(%arg0: i32, %arg1: i32) -> (i32, i32, i32) {
    %c0_i32 = arith.constant 0 : i32
    %c0_i32_0 = arith.constant 0 : i32
    %c0_i32_1 = arith.constant 0 : i32
    return %arg1, %c0_i32, %c0_i32_0 : i32, i32, i32
  }
  func.func @transform_19(%arg0: i32, %arg1: i32) -> (i32, i32, i32) {
    %c0_i32 = arith.constant 0 : i32
    %c0_i32_0 = arith.constant 0 : i32
    %c0_i32_1 = arith.constant 0 : i32
    return %arg1, %c0_i32, %c0_i32_0 : i32, i32, i32
  }
  func.func @transform_20(%arg0: i32, %arg1: i32) -> (i32, i32) {
    %c0_i32 = arith.constant 0 : i32
    %c0_i32_0 = arith.constant 0 : i32
    return %arg0, %c0_i32 : i32, i32
  }
}

</mosaic_0001>

<llo_original>
// kernel: bert_classifier_forward.1
$region0: #{bert_classifier_forward.1}
  #allocation0 [shape = 'u32[]', space=smem, size = 0x4, offset = 0x4, fixed_abs, tag = 'smem constant byte address 0x4 - core index']
  #allocation1 [shape = 'u32[144,128]{1,0:T(1,128)}', space=vmem, size = 0x12000, scoped, tag = 'internal scratch']
  %s0 = inlined_call_operand.vmem [shape: f32[32,128], index: 0, kind: input, shape index: {}]
  %s1 = inlined_call_operand.vmem [shape: f32[2,16,16], index: 1, kind: input, shape index: {}]
  %s2 = inlined_call_operand.vmem [shape: f32[1,128], index: 2, kind: input, shape index: {}]
  %s3 = inlined_call_operand.vmem [shape: f32[1,128], index: 3, kind: input, shape index: {}]
  %s4 = inlined_call_operand.vmem [shape: f32[2,4,128,32], index: 4, kind: input, shape index: {}]
  %s5 = inlined_call_operand.vmem [shape: f32[2,4,1,32], index: 5, kind: input, shape index: {}]
  %s6 = inlined_call_operand.vmem [shape: f32[2,4,128,32], index: 6, kind: input, shape index: {}]
  %s7 = inlined_call_operand.vmem [shape: f32[2,4,1,32], index: 7, kind: input, shape index: {}]
  %s8 = inlined_call_operand.vmem [shape: f32[2,4,128,32], index: 8, kind: input, shape index: {}]
  %s9 = inlined_call_operand.vmem [shape: f32[2,4,1,32], index: 9, kind: input, shape index: {}]
  %s10 = inlined_call_operand.vmem [shape: f32[2,4,32,128], index: 10, kind: input, shape index: {}]
  %s11 = inlined_call_operand.vmem [shape: f32[2,1,128], index: 11, kind: input, shape index: {}]
  %s12 = inlined_call_operand.vmem [shape: f32[2,1,128], index: 12, kind: input, shape index: {}]
  %s13 = inlined_call_operand.vmem [shape: f32[2,1,128], index: 13, kind: input, shape index: {}]
  %s14 = inlined_call_operand.vmem [shape: f32[2,128,512], index: 14, kind: input, shape index: {}]
  %s15 = inlined_call_operand.vmem [shape: f32[2,1,512], index: 15, kind: input, shape index: {}]
  %s16 = inlined_call_operand.vmem [shape: f32[2,512,128], index: 16, kind: input, shape index: {}]
  %s17 = inlined_call_operand.vmem [shape: f32[2,1,128], index: 17, kind: input, shape index: {}]
  %s18 = inlined_call_operand.vmem [shape: f32[2,1,128], index: 18, kind: input, shape index: {}]
  %s19 = inlined_call_operand.vmem [shape: f32[2,1,128], index: 19, kind: input, shape index: {}]
  %s20 = inlined_call_operand.vmem [shape: f32[32,128], index: 20, kind: output, shape index: {}]
  %s21 = sld [smem:[#allocation0]]
  $region117: #{bert_classifier_forward.1} parent=0
    _
  %s23 = ssub.s32 1, %s21
  %s24 = scalar_select 0, %s23, %s21
  loop: start=0, step=1, limit=6
  $region2: #{bert_classifier_forward.1} parent=0 // loop_pre_header
    _
  $region3: #{bert_classifier_forward.1} parent=0 // loop_header
    %s26 = sphi 0, %s30
    %p27 = scmp.ge.s32.totalorder %s26, 6
    %s33 = sphi 0, %s45
    %s34 = sphi 0, %s41
    %s35 = sphi 0, %s33
    %s36 = sphi 0, %s34
    %s37 = sphi 0, %s35
    %s38 = sphi 0, %s36
    %s48 = sphi 0, %s50
    %s51 = sphi 0, %s48
    %s52 = sphi 0, %s51
    %s68 = sphi 0, %s52
    %s74 = sphi 0, %s76
    %s77 = sphi 0, %s74
    %s78 = sphi 0, %s77
    %s94 = sphi 0, %s78
    %s98 = sphi 0, %s98
    %s100 = sphi 0, %s98
    %s101 = sphi 0, %s100
    %s115 = sphi 0, %s101
    %s119 = sphi 0, %s119
    %s121 = sphi 0, %s119
    %s122 = sphi 0, %s121
    %s136 = sphi 0, %s122
    %s142 = sphi 0, %s144
    %s145 = sphi 0, %s142
    %s146 = sphi 0, %s145
    %s162 = sphi 0, %s146
    %s168 = sphi 0, %s170
    %s171 = sphi 0, %s168
    %s172 = sphi 0, %s171
    %s188 = sphi 0, %s172
    %s194 = sphi 0, %s196
    %s197 = sphi 0, %s194
    %s198 = sphi 0, %s197
    %s214 = sphi 0, %s198
    %s220 = sphi 0, %s222
    %s223 = sphi 0, %s220
    %s224 = sphi 0, %s223
    %s240 = sphi 0, %s224
    %s246 = sphi 0, %s248
    %s249 = sphi 0, %s246
    %s250 = sphi 0, %s249
    %s266 = sphi 0, %s250
    %s272 = sphi 0, %s274
    %s275 = sphi 0, %s272
    %s276 = sphi 0, %s275
    %s292 = sphi 0, %s276
    %s298 = sphi 0, %s300
    %s301 = sphi 0, %s298
    %s302 = sphi 0, %s301
    %s318 = sphi 0, %s302
    %s324 = sphi 0, %s326
    %s327 = sphi 0, %s324
    %s328 = sphi 0, %s327
    %s344 = sphi 0, %s328
    %s350 = sphi 0, %s352
    %s353 = sphi 0, %s350
    %s354 = sphi 0, %s353
    %s370 = sphi 0, %s354
    %s376 = sphi 0, %s378
    %s379 = sphi 0, %s376
    %s380 = sphi 0, %s379
    %s396 = sphi 0, %s380
    %s402 = sphi 0, %s404
    %s405 = sphi 0, %s402
    %s406 = sphi 0, %s405
    %s422 = sphi 0, %s406
    %s428 = sphi 0, %s430
    %s431 = sphi 0, %s428
    %s432 = sphi 0, %s431
    %s448 = sphi 0, %s432
    %s454 = sphi 0, %s456
    %s457 = sphi 0, %s454
    %s458 = sphi 0, %s457
    %s474 = sphi 0, %s458
    %s480 = sphi 0, %s482
    %s483 = sphi 0, %s480
    %s484 = sphi 0, %s483
    %s500 = sphi 0, %s484
    %s506 = sphi 0, %s508
    %s509 = sphi 0, %s506
    %s510 = sphi 0, %s509
    %s526 = sphi 0, %s510
    %s532 = sphi 0, %s534
    %s535 = sphi 0, %s532
    %s536 = sphi 0, %s535
    %s552 = sphi 0, %s536
    %s558 = sphi 0, %s560
    %s561 = sphi 0, %s558
    %s562 = sphi 0, %s561
    %s578 = sphi 0, %s562
  $region4: #{bert_classifier_forward.1} parent=0 // loop_header_branch
    %29 = sbr.rel (%p27) target = $region8
  $region5: #{bert_classifier_forward.1} parent=0 // loop_body
    %s31 = ssub.s32 %s26, 1
    %s32 = ssub.s32 %s26, 2
    %s39 = sadd.s32 1, %s34
    %p40 = scmp.ge.s32.totalorder %s39, 2
    %s41 = scalar_select %p40, 0, %s39
    %s42 = sadd.s32 1, %s33
    %s43 = scalar_select %p40, %s42, %s33
    %p44 = scmp.ge.s32.totalorder %s43, 2
    %s45 = scalar_select %p44, 0, %s43
    %s46 = ssub.s32 %s33, %s45
    %p47 = scmp.eq.s32.totalorder %s46, 0
    %s49 = sadd.s32 %s48, 1
    %s50 = scalar_select %p47, %s48, %s49
    %p53 = pneg %p47
    %p54 = scmp.eq.s32.totalorder %s26, 3
    %p55 = por %p53, %p54
    %p56 = scmp.ne.s32.totalorder %s48, %s51
    %p57 = scmp.eq.s32.totalorder %s26, 0
    %p58 = por %p56, %p57
    %p59 = scmp.ne.s32.totalorder %s48, %s51
    %p60 = scmp.eq.s32.totalorder %s31, 3
    %p61 = por %p59, %p60
    %p62 = scmp.ne.s32.totalorder %s51, %s52
    %p63 = scmp.eq.s32.totalorder %s31, 0
    %p64 = por %p62, %p63
    %p65 = scmp.ne.s32.totalorder %s51, %s52
    %p66 = scmp.eq.s32.totalorder %s32, 3
    %p67 = por %p65, %p66
    %p69 = scmp.ne.s32.totalorder %s52, %s68
    %p70 = scmp.eq.s32.totalorder %s32, 0
    %p71 = por %p69, %p70
    %s72 = ssub.s32 %s33, %s45
    %p73 = scmp.eq.s32.totalorder %s72, 0
    %s75 = sadd.s32 %s74, 1
    %s76 = scalar_select %p73, %s74, %s75
    %p79 = pneg %p73
    %p80 = scmp.eq.s32.totalorder %s26, 3
    %p81 = por %p79, %p80
    %p82 = scmp.ne.s32.totalorder %s74, %s77
    %p83 = scmp.eq.s32.totalorder %s26, 0
    %p84 = por %p82, %p83
    %p85 = scmp.ne.s32.totalorder %s74, %s77
    %p86 = scmp.eq.s32.totalorder %s31, 3
    %p87 = por %p85, %p86
    %p88 = scmp.ne.s32.totalorder %s77, %s78
    %p89 = scmp.eq.s32.totalorder %s31, 0
    %p90 = por %p88, %p89
    %p91 = scmp.ne.s32.totalorder %s77, %s78
    %p92 = scmp.eq.s32.totalorder %s32, 3
    %p93 = por %p91, %p92
    %p95 = scmp.ne.s32.totalorder %s78, %s94
    %p96 = scmp.eq.s32.totalorder %s32, 0
    %p97 = por %p95, %p96
    %s99 = sadd.s32 %s98, 1
    %p102 = scmp.eq.s32.totalorder %s26, 3
    %p103 = scmp.ne.s32.totalorder %s98, %s100
    %p104 = scmp.eq.s32.totalorder %s26, 0
    %p105 = por %p103, %p104
    %p106 = scmp.ne.s32.totalorder %s98, %s100
    %p107 = scmp.eq.s32.totalorder %s31, 3
    %p108 = por %p106, %p107
    %p109 = scmp.ne.s32.totalorder %s100, %s101
    %p110 = scmp.eq.s32.totalorder %s31, 0
    %p111 = por %p109, %p110
    %p112 = scmp.ne.s32.totalorder %s100, %s101
    %p113 = scmp.eq.s32.totalorder %s32, 3
    %p114 = por %p112, %p113
    %p116 = scmp.ne.s32.totalorder %s101, %s115
    %p117 = scmp.eq.s32.totalorder %s32, 0
    %p118 = por %p116, %p117
    %s120 = sadd.s32 %s119, 1
    %p123 = scmp.eq.s32.totalorder %s26, 3
    %p124 = scmp.ne.s32.totalorder %s119, %s121
    %p125 = scmp.eq.s32.totalorder %s26, 0
    %p126 = por %p124, %p125
    %p127 = scmp.ne.s32.totalorder %s119, %s121
    %p128 = scmp.eq.s32.totalorder %s31, 3
    %p129 = por %p127, %p128
    %p130 = scmp.ne.s32.totalorder %s121, %s122
    %p131 = scmp.eq.s32.totalorder %s31, 0
    %p132 = por %p130, %p131
    %p133 = scmp.ne.s32.totalorder %s121, %s122
    %p134 = scmp.eq.s32.totalorder %s32, 3
    %p135 = por %p133, %p134
    %p137 = scmp.ne.s32.totalorder %s122, %s136
    %p138 = scmp.eq.s32.totalorder %s32, 0
    %p139 = por %p137, %p138
    %s140 = ssub.s32 %s34, %s41
    %p141 = scmp.eq.s32.totalorder %s140, 0
    %s143 = sadd.s32 %s142, 1
    %s144 = scalar_select %p141, %s142, %s143
    %p147 = pneg %p141
    %p148 = scmp.eq.s32.totalorder %s26, 3
    %p149 = por %p147, %p148
    %p150 = scmp.ne.s32.totalorder %s142, %s145
    %p151 = scmp.eq.s32.totalorder %s26, 0
    %p152 = por %p150, %p151
    %p153 = scmp.ne.s32.totalorder %s142, %s145
    %p154 = scmp.eq.s32.totalorder %s31, 3
    %p155 = por %p153, %p154
    %p156 = scmp.ne.s32.totalorder %s145, %s146
    %p157 = scmp.eq.s32.totalorder %s31, 0
    %p158 = por %p156, %p157
    %p159 = scmp.ne.s32.totalorder %s145, %s146
    %p160 = scmp.eq.s32.totalorder %s32, 3
    %p161 = por %p159, %p160
    %p163 = scmp.ne.s32.totalorder %s146, %s162
    %p164 = scmp.eq.s32.totalorder %s32, 0
    %p165 = por %p163, %p164
    %s166 = ssub.s32 %s34, %s41
    %p167 = scmp.eq.s32.totalorder %s166, 0
    %s169 = sadd.s32 %s168, 1
    %s170 = scalar_select %p167, %s168, %s169
    %p173 = pneg %p167
    %p174 = scmp.eq.s32.totalorder %s26, 3
    %p175 = por %p173, %p174
    %p176 = scmp.ne.s32.totalorder %s168, %s171
    %p177 = scmp.eq.s32.totalorder %s26, 0
    %p178 = por %p176, %p177
    %p179 = scmp.ne.s32.totalorder %s168, %s171
    %p180 = scmp.eq.s32.totalorder %s31, 3
    %p181 = por %p179, %p180
    %p182 = scmp.ne.s32.totalorder %s171, %s172
    %p183 = scmp.eq.s32.totalorder %s31, 0
    %p184 = por %p182, %p183
    %p185 = scmp.ne.s32.totalorder %s171, %s172
    %p186 = scmp.eq.s32.totalorder %s32, 3
    %p187 = por %p185, %p186
    %p189 = scmp.ne.s32.totalorder %s172, %s188
    %p190 = scmp.eq.s32.totalorder %s32, 0
    %p191 = por %p189, %p190
    %s192 = ssub.s32 %s34, %s41
    %p193 = scmp.eq.s32.totalorder %s192, 0
    %s195 = sadd.s32 %s194, 1
    %s196 = scalar_select %p193, %s194, %s195
    %p199 = pneg %p193
    %p200 = scmp.eq.s32.totalorder %s26, 3
    %p201 = por %p199, %p200
    %p202 = scmp.ne.s32.totalorder %s194, %s197
    %p203 = scmp.eq.s32.totalorder %s26, 0
    %p204 = por %p202, %p203
    %p205 = scmp.ne.s32.totalorder %s194, %s197
    %p206 = scmp.eq.s32.totalorder %s31, 3
    %p207 = por %p205, %p206
    %p208 = scmp.ne.s32.totalorder %s197, %s198
    %p209 = scmp.eq.s32.totalorder %s31, 0
    %p210 = por %p208, %p209
    %p211 = scmp.ne.s32.totalorder %s197, %s198
    %p212 = scmp.eq.s32.totalorder %s32, 3
    %p213 = por %p211, %p212
    %p215 = scmp.ne.s32.totalorder %s198, %s214
    %p216 = scmp.eq.s32.totalorder %s32, 0
    %p217 = por %p215, %p216
    %s218 = ssub.s32 %s34, %s41
    %p219 = scmp.eq.s32.totalorder %s218, 0
    %s221 = sadd.s32 %s220, 1
    %s222 = scalar_select %p219, %s220, %s221
    %p225 = pneg %p219
    %p226 = scmp.eq.s32.totalorder %s26, 3
    %p227 = por %p225, %p226
    %p228 = scmp.ne.s32.totalorder %s220, %s223
    %p229 = scmp.eq.s32.totalorder %s26, 0
    %p230 = por %p228, %p229
    %p231 = scmp.ne.s32.totalorder %s220, %s223
    %p232 = scmp.eq.s32.totalorder %s31, 3
    %p233 = por %p231, %p232
    %p234 = scmp.ne.s32.totalorder %s223, %s224
    %p235 = scmp.eq.s32.totalorder %s31, 0
    %p236 = por %p234, %p235
    %p237 = scmp.ne.s32.totalorder %s223, %s224
    %p238 = scmp.eq.s32.totalorder %s32, 3
    %p239 = por %p237, %p238
    %p241 = scmp.ne.s32.totalorder %s224, %s240
    %p242 = scmp.eq.s32.totalorder %s32, 0
    %p243 = por %p241, %p242
    %s244 = ssub.s32 %s34, %s41
    %p245 = scmp.eq.s32.totalorder %s244, 0
    %s247 = sadd.s32 %s246, 1
    %s248 = scalar_select %p245, %s246, %s247
    %p251 = pneg %p245
    %p252 = scmp.eq.s32.totalorder %s26, 3
    %p253 = por %p251, %p252
    %p254 = scmp.ne.s32.totalorder %s246, %s249
    %p255 = scmp.eq.s32.totalorder %s26, 0
    %p256 = por %p254, %p255
    %p257 = scmp.ne.s32.totalorder %s246, %s249
    %p258 = scmp.eq.s32.totalorder %s31, 3
    %p259 = por %p257, %p258
    %p260 = scmp.ne.s32.totalorder %s249, %s250
    %p261 = scmp.eq.s32.totalorder %s31, 0
    %p262 = por %p260, %p261
    %p263 = scmp.ne.s32.totalorder %s249, %s250
    %p264 = scmp.eq.s32.totalorder %s32, 3
    %p265 = por %p263, %p264
    %p267 = scmp.ne.s32.totalorder %s250, %s266
    %p268 = scmp.eq.s32.totalorder %s32, 0
    %p269 = por %p267, %p268
    %s270 = ssub.s32 %s34, %s41
    %p271 = scmp.eq.s32.totalorder %s270, 0
    %s273 = sadd.s32 %s272, 1
    %s274 = scalar_select %p271, %s272, %s273
    %p277 = pneg %p271
    %p278 = scmp.eq.s32.totalorder %s26, 3
    %p279 = por %p277, %p278
    %p280 = scmp.ne.s32.totalorder %s272, %s275
    %p281 = scmp.eq.s32.totalorder %s26, 0
    %p282 = por %p280, %p281
    %p283 = scmp.ne.s32.totalorder %s272, %s275
    %p284 = scmp.eq.s32.totalorder %s31, 3
    %p285 = por %p283, %p284
    %p286 = scmp.ne.s32.totalorder %s275, %s276
    %p287 = scmp.eq.s32.totalorder %s31, 0
    %p288 = por %p286, %p287
    %p289 = scmp.ne.s32.totalorder %s275, %s276
    %p290 = scmp.eq.s32.totalorder %s32, 3
    %p291 = por %p289, %p290
    %p293 = scmp.ne.s32.totalorder %s276, %s292
    %p294 = scmp.eq.s32.totalorder %s32, 0
    %p295 = por %p293, %p294
    %s296 = ssub.s32 %s34, %s41
    %p297 = scmp.eq.s32.totalorder %s296, 0
    %s299 = sadd.s32 %s298, 1
    %s300 = scalar_select %p297, %s298, %s299
    %p303 = pneg %p297
    %p304 = scmp.eq.s32.totalorder %s26, 3
    %p305 = por %p303, %p304
    %p306 = scmp.ne.s32.totalorder %s298, %s301
    %p307 = scmp.eq.s32.totalorder %s26, 0
    %p308 = por %p306, %p307
    %p309 = scmp.ne.s32.totalorder %s298, %s301
    %p310 = scmp.eq.s32.totalorder %s31, 3
    %p311 = por %p309, %p310
    %p312 = scmp.ne.s32.totalorder %s301, %s302
    %p313 = scmp.eq.s32.totalorder %s31, 0
    %p314 = por %p312, %p313
    %p315 = scmp.ne.s32.totalorder %s301, %s302
    %p316 = scmp.eq.s32.totalorder %s32, 3
    %p317 = por %p315, %p316
    %p319 = scmp.ne.s32.totalorder %s302, %s318
    %p320 = scmp.eq.s32.totalorder %s32, 0
    %p321 = por %p319, %p320
    %s322 = ssub.s32 %s34, %s41
    %p323 = scmp.eq.s32.totalorder %s322, 0
    %s325 = sadd.s32 %s324, 1
    %s326 = scalar_select %p323, %s324, %s325
    %p329 = pneg %p323
    %p330 = scmp.eq.s32.totalorder %s26, 3
    %p331 = por %p329, %p330
    %p332 = scmp.ne.s32.totalorder %s324, %s327
    %p333 = scmp.eq.s32.totalorder %s26, 0
    %p334 = por %p332, %p333
    %p335 = scmp.ne.s32.totalorder %s324, %s327
    %p336 = scmp.eq.s32.totalorder %s31, 3
    %p337 = por %p335, %p336
    %p338 = scmp.ne.s32.totalorder %s327, %s328
    %p339 = scmp.eq.s32.totalorder %s31, 0
    %p340 = por %p338, %p339
    %p341 = scmp.ne.s32.totalorder %s327, %s328
    %p342 = scmp.eq.s32.totalorder %s32, 3
    %p343 = por %p341, %p342
    %p345 = scmp.ne.s32.totalorder %s328, %s344
    %p346 = scmp.eq.s32.totalorder %s32, 0
    %p347 = por %p345, %p346
    %s348 = ssub.s32 %s34, %s41
    %p349 = scmp.eq.s32.totalorder %s348, 0
    %s351 = sadd.s32 %s350, 1
    %s352 = scalar_select %p349, %s350, %s351
    %p355 = pneg %p349
    %p356 = scmp.eq.s32.totalorder %s26, 3
    %p357 = por %p355, %p356
    %p358 = scmp.ne.s32.totalorder %s350, %s353
    %p359 = scmp.eq.s32.totalorder %s26, 0
    %p360 = por %p358, %p359
    %p361 = scmp.ne.s32.totalorder %s350, %s353
    %p362 = scmp.eq.s32.totalorder %s31, 3
    %p363 = por %p361, %p362
    %p364 = scmp.ne.s32.totalorder %s353, %s354
    %p365 = scmp.eq.s32.totalorder %s31, 0
    %p366 = por %p364, %p365
    %p367 = scmp.ne.s32.totalorder %s353, %s354
    %p368 = scmp.eq.s32.totalorder %s32, 3
    %p369 = por %p367, %p368
    %p371 = scmp.ne.s32.totalorder %s354, %s370
    %p372 = scmp.eq.s32.totalorder %s32, 0
    %p373 = por %p371, %p372
    %s374 = ssub.s32 %s34, %s41
    %p375 = scmp.eq.s32.totalorder %s374, 0
    %s377 = sadd.s32 %s376, 1
    %s378 = scalar_select %p375, %s376, %s377
    %p381 = pneg %p375
    %p382 = scmp.eq.s32.totalorder %s26, 3
    %p383 = por %p381, %p382
    %p384 = scmp.ne.s32.totalorder %s376, %s379
    %p385 = scmp.eq.s32.totalorder %s26, 0
    %p386 = por %p384, %p385
    %p387 = scmp.ne.s32.totalorder %s376, %s379
    %p388 = scmp.eq.s32.totalorder %s31, 3
    %p389 = por %p387, %p388
    %p390 = scmp.ne.s32.totalorder %s379, %s380
    %p391 = scmp.eq.s32.totalorder %s31, 0
    %p392 = por %p390, %p391
    %p393 = scmp.ne.s32.totalorder %s379, %s380
    %p394 = scmp.eq.s32.totalorder %s32, 3
    %p395 = por %p393, %p394
    %p397 = scmp.ne.s32.totalorder %s380, %s396
    %p398 = scmp.eq.s32.totalorder %s32, 0
    %p399 = por %p397, %p398
    %s400 = ssub.s32 %s34, %s41
    %p401 = scmp.eq.s32.totalorder %s400, 0
    %s403 = sadd.s32 %s402, 1
    %s404 = scalar_select %p401, %s402, %s403
    %p407 = pneg %p401
    %p408 = scmp.eq.s32.totalorder %s26, 3
    %p409 = por %p407, %p408
    %p410 = scmp.ne.s32.totalorder %s402, %s405
    %p411 = scmp.eq.s32.totalorder %s26, 0
    %p412 = por %p410, %p411
    %p413 = scmp.ne.s32.totalorder %s402, %s405
    %p414 = scmp.eq.s32.totalorder %s31, 3
    %p415 = por %p413, %p414
    %p416 = scmp.ne.s32.totalorder %s405, %s406
    %p417 = scmp.eq.s32.totalorder %s31, 0
    %p418 = por %p416, %p417
    %p419 = scmp.ne.s32.totalorder %s405, %s406
    %p420 = scmp.eq.s32.totalorder %s32, 3
    %p421 = por %p419, %p420
    %p423 = scmp.ne.s32.totalorder %s406, %s422
    %p424 = scmp.eq.s32.totalorder %s32, 0
    %p425 = por %p423, %p424
    %s426 = ssub.s32 %s34, %s41
    %p427 = scmp.eq.s32.totalorder %s426, 0
    %s429 = sadd.s32 %s428, 1
    %s430 = scalar_select %p427, %s428, %s429
    %p433 = pneg %p427
    %p434 = scmp.eq.s32.totalorder %s26, 3
    %p435 = por %p433, %p434
    %p436 = scmp.ne.s32.totalorder %s428, %s431
    %p437 = scmp.eq.s32.totalorder %s26, 0
    %p438 = por %p436, %p437
    %p439 = scmp.ne.s32.totalorder %s428, %s431
    %p440 = scmp.eq.s32.totalorder %s31, 3
    %p441 = por %p439, %p440
    %p442 = scmp.ne.s32.totalorder %s431, %s432
    %p443 = scmp.eq.s32.totalorder %s31, 0
    %p444 = por %p442, %p443
    %p445 = scmp.ne.s32.totalorder %s431, %s432
    %p446 = scmp.eq.s32.totalorder %s32, 3
    %p447 = por %p445, %p446
    %p449 = scmp.ne.s32.totalorder %s432, %s448
    %p450 = scmp.eq.s32.totalorder %s32, 0
    %p451 = por %p449, %p450
    %s452 = ssub.s32 %s34, %s41
    %p453 = scmp.eq.s32.totalorder %s452, 0
    %s455 = sadd.s32 %s454, 1
    %s456 = scalar_select %p453, %s454, %s455
    %p459 = pneg %p453
    %p460 = scmp.eq.s32.totalorder %s26, 3
    %p461 = por %p459, %p460
    %p462 = scmp.ne.s32.totalorder %s454, %s457
    %p463 = scmp.eq.s32.totalorder %s26, 0
    %p464 = por %p462, %p463
    %p465 = scmp.ne.s32.totalorder %s454, %s457
    %p466 = scmp.eq.s32.totalorder %s31, 3
    %p467 = por %p465, %p466
    %p468 = scmp.ne.s32.totalorder %s457, %s458
    %p469 = scmp.eq.s32.totalorder %s31, 0
    %p470 = por %p468, %p469
    %p471 = scmp.ne.s32.totalorder %s457, %s458
    %p472 = scmp.eq.s32.totalorder %s32, 3
    %p473 = por %p471, %p472
    %p475 = scmp.ne.s32.totalorder %s458, %s474
    %p476 = scmp.eq.s32.totalorder %s32, 0
    %p477 = por %p475, %p476
    %s478 = ssub.s32 %s34, %s41
    %p479 = scmp.eq.s32.totalorder %s478, 0
    %s481 = sadd.s32 %s480, 1
    %s482 = scalar_select %p479, %s480, %s481
    %p485 = pneg %p479
    %p486 = scmp.eq.s32.totalorder %s26, 3
    %p487 = por %p485, %p486
    %p488 = scmp.ne.s32.totalorder %s480, %s483
    %p489 = scmp.eq.s32.totalorder %s26, 0
    %p490 = por %p488, %p489
    %p491 = scmp.ne.s32.totalorder %s480, %s483
    %p492 = scmp.eq.s32.totalorder %s31, 3
    %p493 = por %p491, %p492
    %p494 = scmp.ne.s32.totalorder %s483, %s484
    %p495 = scmp.eq.s32.totalorder %s31, 0
    %p496 = por %p494, %p495
    %p497 = scmp.ne.s32.totalorder %s483, %s484
    %p498 = scmp.eq.s32.totalorder %s32, 3
    %p499 = por %p497, %p498
    %p501 = scmp.ne.s32.totalorder %s484, %s500
    %p502 = scmp.eq.s32.totalorder %s32, 0
    %p503 = por %p501, %p502
    %s504 = ssub.s32 %s34, %s41
    %p505 = scmp.eq.s32.totalorder %s504, 0
    %s507 = sadd.s32 %s506, 1
    %s508 = scalar_select %p505, %s506, %s507
    %p511 = pneg %p505
    %p512 = scmp.eq.s32.totalorder %s26, 3
    %p513 = por %p511, %p512
    %p514 = scmp.ne.s32.totalorder %s506, %s509
    %p515 = scmp.eq.s32.totalorder %s26, 0
    %p516 = por %p514, %p515
    %p517 = scmp.ne.s32.totalorder %s506, %s509
    %p518 = scmp.eq.s32.totalorder %s31, 3
    %p519 = por %p517, %p518
    %p520 = scmp.ne.s32.totalorder %s509, %s510
    %p521 = scmp.eq.s32.totalorder %s31, 0
    %p522 = por %p520, %p521
    %p523 = scmp.ne.s32.totalorder %s509, %s510
    %p524 = scmp.eq.s32.totalorder %s32, 3
    %p525 = por %p523, %p524
    %p527 = scmp.ne.s32.totalorder %s510, %s526
    %p528 = scmp.eq.s32.totalorder %s32, 0
    %p529 = por %p527, %p528
    %s530 = ssub.s32 %s34, %s41
    %p531 = scmp.eq.s32.totalorder %s530, 0
    %s533 = sadd.s32 %s532, 1
    %s534 = scalar_select %p531, %s532, %s533
    %p537 = pneg %p531
    %p538 = scmp.eq.s32.totalorder %s26, 3
    %p539 = por %p537, %p538
    %p540 = scmp.ne.s32.totalorder %s532, %s535
    %p541 = scmp.eq.s32.totalorder %s26, 0
    %p542 = por %p540, %p541
    %p543 = scmp.ne.s32.totalorder %s532, %s535
    %p544 = scmp.eq.s32.totalorder %s31, 3
    %p545 = por %p543, %p544
    %p546 = scmp.ne.s32.totalorder %s535, %s536
    %p547 = scmp.eq.s32.totalorder %s31, 0
    %p548 = por %p546, %p547
    %p549 = scmp.ne.s32.totalorder %s535, %s536
    %p550 = scmp.eq.s32.totalorder %s32, 3
    %p551 = por %p549, %p550
    %p553 = scmp.ne.s32.totalorder %s536, %s552
    %p554 = scmp.eq.s32.totalorder %s32, 0
    %p555 = por %p553, %p554
    %s556 = ssub.s32 %s33, %s45
    %p557 = scmp.eq.s32.totalorder %s556, 0
    %s559 = sadd.s32 %s558, 1
    %s560 = scalar_select %p557, %s558, %s559
    %p563 = pneg %p557
    %p564 = scmp.eq.s32.totalorder %s26, 3
    %p565 = por %p563, %p564
    %p566 = scmp.ne.s32.totalorder %s558, %s561
    %p567 = scmp.eq.s32.totalorder %s26, 0
    %p568 = por %p566, %p567
    %p569 = scmp.ne.s32.totalorder %s558, %s561
    %p570 = scmp.eq.s32.totalorder %s31, 3
    %p571 = por %p569, %p570
    %p572 = scmp.ne.s32.totalorder %s561, %s562
    %p573 = scmp.eq.s32.totalorder %s31, 0
    %p574 = por %p572, %p573
    %p575 = scmp.ne.s32.totalorder %s561, %s562
    %p576 = scmp.eq.s32.totalorder %s32, 3
    %p577 = por %p575, %p576
    %p579 = scmp.ne.s32.totalorder %s562, %s578
    %p580 = scmp.eq.s32.totalorder %s32, 0
    %p581 = por %p579, %p580
    %p582 = scmp.le.s32.totalorder 1, %s26
    %p583 = scmp.lt.s32.totalorder %s26, 5
    %p584 = pnand %p582, %p583
    %p585 = pneg %p584
    // Predicated region
    $region9: #{bert_classifier_forward.1} parent=5 // pred_check
      _
    $region10: #{bert_classifier_forward.1} parent=5 // pred_check_branch
      %587 = sbr.rel (%p584) target = $region12
    $region11: #{bert_classifier_forward.1} parent=5 // pred_region
      %s588 = ssub.s32 %s26, 1
      // Predicated region
      $region13: #{bert_classifier_forward.1} parent=11 // pred_check
        %p589 = pneg %p111
      $region14: #{bert_classifier_forward.1} parent=11 // pred_check_branch
        %591 = sbr.rel (%p589) target = $region16
      $region15: #{bert_classifier_forward.1} parent=11 // pred_region
        _
      $region16: #{bert_classifier_forward.1} parent=11 // pred_fallthru
        _
      // Predicated region
      $region17: #{bert_classifier_forward.1} parent=11 // pred_check
        %p592 = pneg %p132
      $region18: #{bert_classifier_forward.1} parent=11 // pred_check_branch
        %594 = sbr.rel (%p592) target = $region20
      $region19: #{bert_classifier_forward.1} parent=11 // pred_region
        _
      $region20: #{bert_classifier_forward.1} parent=11 // pred_fallthru
        _
    $region12: #{bert_classifier_forward.1} parent=5 // pred_fallthru
      _
    %p595 = scmp.lt.s32.totalorder %s26, 4
    // Predicated region
    $region21: #{bert_classifier_forward.1} parent=5 // pred_check
      %p596 = pneg %p595
    $region22: #{bert_classifier_forward.1} parent=5 // pred_check_branch
      %598 = sbr.rel (%p596) target = $region24
    $region23: #{bert_classifier_forward.1} parent=5 // pred_region
      // Predicated region
      $region25: #{bert_classifier_forward.1} parent=23 // pred_check
        %p599 = pneg %p58
      $region26: #{bert_classifier_forward.1} parent=23 // pred_check_branch
        %601 = sbr.rel (%p599) target = $region28
      $region27: #{bert_classifier_forward.1} parent=23 // pred_region
        %s602 = smul.u32 2, %s33
        %p603 = scmp.lt.s32.totalorder %s602, 3
        %s604 = scalar_select %p603, %s602, 3
        %s605 = smul.addr %s604, 8
        %s606 = scalar_lea.vmem %s0, %s605
        %s607 = smul.u32 2, %s33
      $region28: #{bert_classifier_forward.1} parent=23 // pred_fallthru
        _
      // Predicated region
      $region29: #{bert_classifier_forward.1} parent=23 // pred_check
        %p608 = pneg %p84
      $region30: #{bert_classifier_forward.1} parent=23 // pred_check_branch
        %610 = sbr.rel (%p608) target = $region32
      $region31: #{bert_classifier_forward.1} parent=23 // pred_region
        %p611 = scmp.lt.s32.totalorder %s33, 1
        %s612 = scalar_select %p611, %s33, 1
        %s613 = smul.addr %s612, 2
        %s614 = smul.addr %s613, 8
        %s615 = scalar_lea.vmem %s1, %s614
      $region32: #{bert_classifier_forward.1} parent=23 // pred_fallthru
        _
      // Predicated region
      $region33: #{bert_classifier_forward.1} parent=23 // pred_check
        %p616 = pneg %p152
      $region34: #{bert_classifier_forward.1} parent=23 // pred_check_branch
        %618 = sbr.rel (%p616) target = $region36
      $region35: #{bert_classifier_forward.1} parent=23 // pred_region
        %p619 = scmp.lt.s32.totalorder %s34, 1
        %s620 = scalar_select %p619, %s34, 1
        %s621 = smul.addr %s620, 64
        %s622 = smul.addr %s621, 8
        %s623 = scalar_lea.vmem %s4, %s622
      $region36: #{bert_classifier_forward.1} parent=23 // pred_fallthru
        _
      // Predicated region
      $region37: #{bert_classifier_forward.1} parent=23 // pred_check
        %p624 = pneg %p178
      $region38: #{bert_classifier_forward.1} parent=23 // pred_check_branch
        %626 = sbr.rel (%p624) target = $region40
      $region39: #{bert_classifier_forward.1} parent=23 // pred_region
        %p627 = scmp.lt.s32.totalorder %s34, 1
        %s628 = scalar_select %p627, %s34, 1
        %s629 = smul.addr %s628, 4
        %s630 = scalar_lea.vmem %s5, %s629
      $region40: #{bert_classifier_forward.1} parent=23 // pred_fallthru
        _
      // Predicated region
      $region41: #{bert_classifier_forward.1} parent=23 // pred_check
        %p631 = pneg %p204
      $region42: #{bert_classifier_forward.1} parent=23 // pred_check_branch
        %633 = sbr.rel (%p631) target = $region44
      $region43: #{bert_classifier_forward.1} parent=23 // pred_region
        %p634 = scmp.lt.s32.totalorder %s34, 1
        %s635 = scalar_select %p634, %s34, 1
        %s636 = smul.addr %s635, 64
        %s637 = smul.addr %s636, 8
        %s638 = scalar_lea.vmem %s6, %s637
      $region44: #{bert_classifier_forward.1} parent=23 // pred_fallthru
        _
      // Predicated region
      $region45: #{bert_classifier_forward.1} parent=23 // pred_check
        %p639 = pneg %p230
      $region46: #{bert_classifier_forward.1} parent=23 // pred_check_branch
        %641 = sbr.rel (%p639) target = $region48
      $region47: #{bert_classifier_forward.1} parent=23 // pred_region
        %p642 = scmp.lt.s32.totalorder %s34, 1
        %s643 = scalar_select %p642, %s34, 1
        %s644 = smul.addr %s643, 4
        %s645 = scalar_lea.vmem %s7, %s644
      $region48: #{bert_classifier_forward.1} parent=23 // pred_fallthru
        _
      // Predicated region
      $region49: #{bert_classifier_forward.1} parent=23 // pred_check
        %p646 = pneg %p256
      $region50: #{bert_classifier_forward.1} parent=23 // pred_check_branch
        %648 = sbr.rel (%p646) target = $region52
      $region51: #{bert_classifier_forward.1} parent=23 // pred_region
        %p649 = scmp.lt.s32.totalorder %s34, 1
        %s650 = scalar_select %p649, %s34, 1
        %s651 = smul.addr %s650, 64
        %s652 = smul.addr %s651, 8
        %s653 = scalar_lea.vmem %s8, %s652
      $region52: #{bert_classifier_forward.1} parent=23 // pred_fallthru
        _
      // Predicated region
      $region53: #{bert_classifier_forward.1} parent=23 // pred_check
        %p654 = pneg %p282
      $region54: #{bert_classifier_forward.1} parent=23 // pred_check_branch
        %656 = sbr.rel (%p654) target = $region56
      $region55: #{bert_classifier_forward.1} parent=23 // pred_region
        %p657 = scmp.lt.s32.totalorder %s34, 1
        %s658 = scalar_select %p657, %s34, 1
        %s659 = smul.addr %s658, 4
        %s660 = scalar_lea.vmem %s9, %s659
      $region56: #{bert_classifier_forward.1} parent=23 // pred_fallthru
        _
      // Predicated region
      $region57: #{bert_classifier_forward.1} parent=23 // pred_check
        %p661 = pneg %p308
      $region58: #{bert_classifier_forward.1} parent=23 // pred_check_branch
        %663 = sbr.rel (%p661) target = $region60
      $region59: #{bert_classifier_forward.1} parent=23 // pred_region
        %p664 = scmp.lt.s32.totalorder %s34, 1
        %s665 = scalar_select %p664, %s34, 1
        %s666 = smul.addr %s665, 16
        %s667 = smul.addr %s666, 8
        %s668 = scalar_lea.vmem %s10, %s667
      $region60: #{bert_classifier_forward.1} parent=23 // pred_fallthru
        _
      // Predicated region
      $region61: #{bert_classifier_forward.1} parent=23 // pred_check
        %p669 = pneg %p334
      $region62: #{bert_classifier_forward.1} parent=23 // pred_check_branch
        %671 = sbr.rel (%p669) target = $region64
      $region63: #{bert_classifier_forward.1} parent=23 // pred_region
        %p672 = scmp.lt.s32.totalorder %s34, 1
        %s673 = scalar_select %p672, %s34, 1
        %s674 = scalar_lea.vmem %s11, %s673
      $region64: #{bert_classifier_forward.1} parent=23 // pred_fallthru
        _
      // Predicated region
      $region65: #{bert_classifier_forward.1} parent=23 // pred_check
        %p675 = pneg %p360
      $region66: #{bert_classifier_forward.1} parent=23 // pred_check_branch
        %677 = sbr.rel (%p675) target = $region68
      $region67: #{bert_classifier_forward.1} parent=23 // pred_region
        %p678 = scmp.lt.s32.totalorder %s34, 1
        %s679 = scalar_select %p678, %s34, 1
        %s680 = scalar_lea.vmem %s12, %s679
      $region68: #{bert_classifier_forward.1} parent=23 // pred_fallthru
        _
      // Predicated region
      $region69: #{bert_classifier_forward.1} parent=23 // pred_check
        %p681 = pneg %p386
      $region70: #{bert_classifier_forward.1} parent=23 // pred_check_branch
        %683 = sbr.rel (%p681) target = $region72
      $region71: #{bert_classifier_forward.1} parent=23 // pred_region
        %p684 = scmp.lt.s32.totalorder %s34, 1
        %s685 = scalar_select %p684, %s34, 1
        %s686 = scalar_lea.vmem %s13, %s685
      $region72: #{bert_classifier_forward.1} parent=23 // pred_fallthru
        _
      // Predicated region
      $region73: #{bert_classifier_forward.1} parent=23 // pred_check
        %p687 = pneg %p412
      $region74: #{bert_classifier_forward.1} parent=23 // pred_check_branch
        %689 = sbr.rel (%p687) target = $region76
      $region75: #{bert_classifier_forward.1} parent=23 // pred_region
        %p690 = scmp.lt.s32.totalorder %s34, 1
        %s691 = scalar_select %p690, %s34, 1
        %s692 = smul.addr %s691, 64
        %s693 = smul.addr %s692, 8
        %s694 = scalar_lea.vmem %s14, %s693
      $region76: #{bert_classifier_forward.1} parent=23 // pred_fallthru
        _
      // Predicated region
      $region77: #{bert_classifier_forward.1} parent=23 // pred_check
        %p695 = pneg %p438
      $region78: #{bert_classifier_forward.1} parent=23 // pred_check_branch
        %697 = sbr.rel (%p695) target = $region80
      $region79: #{bert_classifier_forward.1} parent=23 // pred_region
        %p698 = scmp.lt.s32.totalorder %s34, 1
        %s699 = scalar_select %p698, %s34, 1
        %s700 = smul.addr %s699, 4
        %s701 = scalar_lea.vmem %s15, %s700
      $region80: #{bert_classifier_forward.1} parent=23 // pred_fallthru
        _
      // Predicated region
      $region81: #{bert_classifier_forward.1} parent=23 // pred_check
        %p702 = pneg %p464
      $region82: #{bert_classifier_forward.1} parent=23 // pred_check_branch
        %704 = sbr.rel (%p702) target = $region84
      $region83: #{bert_classifier_forward.1} parent=23 // pred_region
        %p705 = scmp.lt.s32.totalorder %s34, 1
        %s706 = scalar_select %p705, %s34, 1
        %s707 = smul.addr %s706, 64
        %s708 = smul.addr %s707, 8
        %s709 = scalar_lea.vmem %s16, %s708
      $region84: #{bert_classifier_forward.1} parent=23 // pred_fallthru
        _
      // Predicated region
      $region85: #{bert_classifier_forward.1} parent=23 // pred_check
        %p710 = pneg %p490
      $region86: #{bert_classifier_forward.1} parent=23 // pred_check_branch
        %712 = sbr.rel (%p710) target = $region88
      $region87: #{bert_classifier_forward.1} parent=23 // pred_region
        %p713 = scmp.lt.s32.totalorder %s34, 1
        %s714 = scalar_select %p713, %s34, 1
        %s715 = scalar_lea.vmem %s17, %s714
      $region88: #{bert_classifier_forward.1} parent=23 // pred_fallthru
        _
      // Predicated region
      $region89: #{bert_classifier_forward.1} parent=23 // pred_check
        %p716 = pneg %p516
      $region90: #{bert_classifier_forward.1} parent=23 // pred_check_branch
        %718 = sbr.rel (%p716) target = $region92
      $region91: #{bert_classifier_forward.1} parent=23 // pred_region
        %p719 = scmp.lt.s32.totalorder %s34, 1
        %s720 = scalar_select %p719, %s34, 1
        %s721 = scalar_lea.vmem %s18, %s720
      $region92: #{bert_classifier_forward.1} parent=23 // pred_fallthru
        _
      // Predicated region
      $region93: #{bert_classifier_forward.1} parent=23 // pred_check
        %p722 = pneg %p542
      $region94: #{bert_classifier_forward.1} parent=23 // pred_check_branch
        %724 = sbr.rel (%p722) target = $region96
      $region95: #{bert_classifier_forward.1} parent=23 // pred_region
        %p725 = scmp.lt.s32.totalorder %s34, 1
        %s726 = scalar_select %p725, %s34, 1
        %s727 = scalar_lea.vmem %s19, %s726
      $region96: #{bert_classifier_forward.1} parent=23 // pred_fallthru
        _
    $region24: #{bert_classifier_forward.1} parent=5 // pred_fallthru
      _
    %p728 = scmp.le.s32.totalorder 1, %s26
    %p729 = scmp.lt.s32.totalorder %s26, 5
    %p730 = pnand %p728, %p729
    %p731 = pneg %p730
    // Predicated region
    $region97: #{bert_classifier_forward.1} parent=5 // pred_check
      _
    $region98: #{bert_classifier_forward.1} parent=5 // pred_check_branch
      %733 = sbr.rel (%p730) target = $region100
    $region99: #{bert_classifier_forward.1} parent=5 // pred_region
      %s734 = ssub.s32 %s26, 1
      %s735 = smul.u32 2, %s35
      %p736 = scmp.lt.s32.totalorder %s735, 3
      %s737 = scalar_select %p736, %s735, 3
      %s738 = smul.addr %s737, 8
      %s739 = scalar_lea.vmem %s0, %s738
      %p740 = pneg %p64
      %p741 = pneg %p61
      %p742 = scmp.lt.s32.totalorder %s35, 1
      %s743 = scalar_select %p742, %s35, 1
      %s744 = smul.addr %s743, 2
      %s745 = smul.addr %s744, 8
      %s746 = scalar_lea.vmem %s1, %s745
      %p747 = pneg %p90
      %p748 = pneg %p87
      %p749 = pneg %p111
      %p750 = pneg %p108
      %p751 = pneg %p132
      %p752 = pneg %p129
      %p753 = scmp.lt.s32.totalorder %s36, 1
      %s754 = scalar_select %p753, %s36, 1
      %s755 = smul.addr %s754, 64
      %s756 = smul.addr %s755, 8
      %s757 = scalar_lea.vmem %s4, %s756
      %p758 = pneg %p158
      %p759 = pneg %p155
      %p760 = scmp.lt.s32.totalorder %s36, 1
      %s761 = scalar_select %p760, %s36, 1
      %s762 = smul.addr %s761, 4
      %s763 = scalar_lea.vmem %s5, %s762
      %p764 = pneg %p184
      %p765 = pneg %p181
      %p766 = scmp.lt.s32.totalorder %s36, 1
      %s767 = scalar_select %p766, %s36, 1
      %s768 = smul.addr %s767, 64
      %s769 = smul.addr %s768, 8
      %s770 = scalar_lea.vmem %s6, %s769
      %p771 = pneg %p210
      %p772 = pneg %p207
      %p773 = scmp.lt.s32.totalorder %s36, 1
      %s774 = scalar_select %p773, %s36, 1
      %s775 = smul.addr %s774, 4
      %s776 = scalar_lea.vmem %s7, %s775
      %p777 = pneg %p236
      %p778 = pneg %p233
      %p779 = scmp.lt.s32.totalorder %s36, 1
      %s780 = scalar_select %p779, %s36, 1
      %s781 = smul.addr %s780, 64
      %s782 = smul.addr %s781, 8
      %s783 = scalar_lea.vmem %s8, %s782
      %p784 = pneg %p262
      %p785 = pneg %p259
      %p786 = scmp.lt.s32.totalorder %s36, 1
      %s787 = scalar_select %p786, %s36, 1
      %s788 = smul.addr %s787, 4
      %s789 = scalar_lea.vmem %s9, %s788
      %p790 = pneg %p288
      %p791 = pneg %p285
      %p792 = scmp.lt.s32.totalorder %s36, 1
      %s793 = scalar_select %p792, %s36, 1
      %s794 = smul.addr %s793, 16
      %s795 = smul.addr %s794, 8
      %s796 = scalar_lea.vmem %s10, %s795
      %p797 = pneg %p314
      %p798 = pneg %p311
      %p799 = scmp.lt.s32.totalorder %s36, 1
      %s800 = scalar_select %p799, %s36, 1
      %s801 = scalar_lea.vmem %s11, %s800
      %p802 = pneg %p340
      %p803 = pneg %p337
      %p804 = scmp.lt.s32.totalorder %s36, 1
      %s805 = scalar_select %p804, %s36, 1
      %s806 = scalar_lea.vmem %s12, %s805
      %p807 = pneg %p366
      %p808 = pneg %p363
      %p809 = scmp.lt.s32.totalorder %s36, 1
      %s810 = scalar_select %p809, %s36, 1
      %s811 = scalar_lea.vmem %s13, %s810
      %p812 = pneg %p392
      %p813 = pneg %p389
      %p814 = scmp.lt.s32.totalorder %s36, 1
      %s815 = scalar_select %p814, %s36, 1
      %s816 = smul.addr %s815, 64
      %s817 = smul.addr %s816, 8
      %s818 = scalar_lea.vmem %s14, %s817
      %p819 = pneg %p418
      %p820 = pneg %p415
      %p821 = scmp.lt.s32.totalorder %s36, 1
      %s822 = scalar_select %p821, %s36, 1
      %s823 = smul.addr %s822, 4
      %s824 = scalar_lea.vmem %s15, %s823
      %p825 = pneg %p444
      %p826 = pneg %p441
      %p827 = scmp.lt.s32.totalorder %s36, 1
      %s828 = scalar_select %p827, %s36, 1
      %s829 = smul.addr %s828, 64
      %s830 = smul.addr %s829, 8
      %s831 = scalar_lea.vmem %s16, %s830
      %p832 = pneg %p470
      %p833 = pneg %p467
      %p834 = scmp.lt.s32.totalorder %s36, 1
      %s835 = scalar_select %p834, %s36, 1
      %s836 = scalar_lea.vmem %s17, %s835
      %p837 = pneg %p496
      %p838 = pneg %p493
      %p839 = scmp.lt.s32.totalorder %s36, 1
      %s840 = scalar_select %p839, %s36, 1
      %s841 = scalar_lea.vmem %s18, %s840
      %p842 = pneg %p522
      %p843 = pneg %p519
      %p844 = scmp.lt.s32.totalorder %s36, 1
      %s845 = scalar_select %p844, %s36, 1
      %s846 = scalar_lea.vmem %s19, %s845
      %p847 = pneg %p548
      %p848 = pneg %p545
      %p849 = pneg %p574
      %p850 = pneg %p571
      %s851 = smul.u32 2, %s35
      %p852 = scmp.lt.s32.totalorder %s851, 3
      %s853 = scalar_select %p852, %s851, 3
      %s854 = smul.addr %s853, 8
      %s855 = scalar_lea.vmem %s20, %s854
      %s856 = smul.u32 2, %s35
      %p857 = scmp.lt.s32.totalorder %s856, 3
      %s858 = scalar_select %p857, %s856, 3
      %s859 = smul.addr %s858, 8
      %s860 = scalar_lea.vmem %s0, %s859
      %s861 = smul.u32 2, %s35
      %p862 = scmp.lt.s32.totalorder %s35, 1
      %s863 = scalar_select %p862, %s35, 1
      %s864 = smul.addr %s863, 2
      %s865 = smul.addr %s864, 8
      %s866 = scalar_lea.vmem %s1, %s865
      %p867 = scmp.lt.s32.totalorder %s36, 1
      %s868 = scalar_select %p867, %s36, 1
      %s869 = smul.addr %s868, 64
      %s870 = smul.addr %s869, 8
      %s871 = scalar_lea.vmem %s4, %s870
      %p872 = scmp.lt.s32.totalorder %s36, 1
      %s873 = scalar_select %p872, %s36, 1
      %s874 = smul.addr %s873, 4
      %s875 = scalar_lea.vmem %s5, %s874
      %p876 = scmp.lt.s32.totalorder %s36, 1
      %s877 = scalar_select %p876, %s36, 1
      %s878 = smul.addr %s877, 64
      %s879 = smul.addr %s878, 8
      %s880 = scalar_lea.vmem %s6, %s879
      %p881 = scmp.lt.s32.totalorder %s36, 1
      %s882 = scalar_select %p881, %s36, 1
      %s883 = smul.addr %s882, 4
      %s884 = scalar_lea.vmem %s7, %s883
      %p885 = scmp.lt.s32.totalorder %s36, 1
      %s886 = scalar_select %p885, %s36, 1
      %s887 = smul.addr %s886, 64
      %s888 = smul.addr %s887, 8
      %s889 = scalar_lea.vmem %s8, %s888
      %p890 = scmp.lt.s32.totalorder %s36, 1
      %s891 = scalar_select %p890, %s36, 1
      %s892 = smul.addr %s891, 4
      %s893 = scalar_lea.vmem %s9, %s892
      %p894 = scmp.lt.s32.totalorder %s36, 1
      %s895 = scalar_select %p894, %s36, 1
      %s896 = smul.addr %s895, 16
      %s897 = smul.addr %s896, 8
      %s898 = scalar_lea.vmem %s10, %s897
      %p899 = scmp.lt.s32.totalorder %s36, 1
      %s900 = scalar_select %p899, %s36, 1
      %s901 = scalar_lea.vmem %s11, %s900
      %p902 = scmp.lt.s32.totalorder %s36, 1
      %s903 = scalar_select %p902, %s36, 1
      %s904 = scalar_lea.vmem %s12, %s903
      %p905 = scmp.lt.s32.totalorder %s36, 1
      %s906 = scalar_select %p905, %s36, 1
      %s907 = scalar_lea.vmem %s13, %s906
      %p908 = scmp.lt.s32.totalorder %s36, 1
      %s909 = scalar_select %p908, %s36, 1
      %s910 = smul.addr %s909, 64
      %s911 = smul.addr %s910, 8
      %s912 = scalar_lea.vmem %s14, %s911
      %p913 = scmp.lt.s32.totalorder %s36, 1
      %s914 = scalar_select %p913, %s36, 1
      %s915 = smul.addr %s914, 4
      %s916 = scalar_lea.vmem %s15, %s915
      %p917 = scmp.lt.s32.totalorder %s36, 1
      %s918 = scalar_select %p917, %s36, 1
      %s919 = smul.addr %s918, 64
      %s920 = smul.addr %s919, 8
      %s921 = scalar_lea.vmem %s16, %s920
      %p922 = scmp.lt.s32.totalorder %s36, 1
      %s923 = scalar_select %p922, %s36, 1
      %s924 = scalar_lea.vmem %s17, %s923
      %p925 = scmp.lt.s32.totalorder %s36, 1
      %s926 = scalar_select %p925, %s36, 1
      %s927 = scalar_lea.vmem %s18, %s926
      %p928 = scmp.lt.s32.totalorder %s36, 1
      %s929 = scalar_select %p928, %s36, 1
      %s930 = scalar_lea.vmem %s19, %s929
      %s931 = smul.u32 2, %s35
      %p932 = scmp.lt.s32.totalorder %s931, 3
      %s933 = scalar_select %p932, %s931, 3
      %s934 = smul.addr %s933, 8
      %s935 = scalar_lea.vmem %s20, %s934
      %s936 = smul.u32 2, %s35
      %p937 = scmp.eq.s32.totalorder %s36, 0
      // Predicated region
      $region101: #{bert_classifier_forward.1} parent=99 // pred_check
        %p938 = pneg %p937
      $region102: #{bert_classifier_forward.1} parent=99 // pred_check_branch
        %940 = sbr.rel (%p938) target = $region104
      $region103: #{bert_classifier_forward.1} parent=99 // pred_region
        %v941 = vld [vmem:[%s860] sm:$0xff]
        %v942 = vld [vmem:[%s860 + $0x8] sm:$0xff]
        %v943 = vld [vmem:[%s2] sm:$0x1]
        %v944 = vld [vmem:[%s3] sm:$0x1]
        %945 = vadd.xlane.f32.xlu0 %v941
        %v946 = vpop.xlane.xlu0 %945
        %947 = vadd.xlane.f32.xlu0 %v942
        %v948 = vpop.xlane.xlu0 %947
        %v949 = vrcp.pop 128.0
        %v950 = vmul.f32 %v946, %v949
        %v951 = vmul.f32 %v948, %v949
        %v952 = vsub.f32 %v941, %v950
        %v953 = vsub.f32 %v942, %v951
        %v954 = vmul.f32 %v952, %v952
        %v955 = vmul.f32 %v953, %v953
        %956 = vadd.xlane.f32.xlu0 %v954
        %v957 = vpop.xlane.xlu0 %956
        %958 = vadd.xlane.f32.xlu0 %v955
        %v959 = vpop.xlane.xlu0 %958
        %v960 = vmul.f32 %v957, %v949
        %v961 = vmul.f32 %v959, %v949
        %v962 = vadd.f32 %v960, 1e-12
        %v963 = vadd.f32 %v961, 1e-12
        %v964 = vrsqrt.pop %v962
        %v965 = vrsqrt.pop %v963
        %v966 = vmul.f32 %v952, %v964
        %v967 = vmul.f32 %v953, %v965
        %v969 = vlaneseq
        %v970 = vshrl.u32 %v969, 7
        %v971 = vsub.s32 0, %v970
        %v972 = vrot.slane %v943, %v971
        %v974 = vmul.f32 %v966, %v972
        %v975 = vmul.f32 %v967, %v972
        %v977 = vlaneseq
        %v978 = vshrl.u32 %v977, 7
        %v979 = vsub.s32 0, %v978
        %v980 = vrot.slane %v944, %v979
        %v982 = vadd.f32 %v974, %v980
        %v983 = vadd.f32 %v975, %v980
        %984 = vst [vmem:[%s935] sm:$0xff] %v982
        %985 = vst [vmem:[%s935 + $0x8] sm:$0xff] %v983
      $region104: #{bert_classifier_forward.1} parent=99 // pred_fallthru
        _
      %v986 = vld [vmem:[%s935] sm:$0xff]
      %v987 = vld [vmem:[%s935 + $0x8] sm:$0xff]
      %v988 = vld [vmem:[%s866] sm:$0xff]
      %v989 = vld [vmem:[%s866 + $0x8] sm:$0xff]
      %v990 = vld [vmem:[%s871] sm:$0xff]
      %v991 = vld [vmem:[%s871 + $0x8] sm:$0xff]
      %v992 = vld [vmem:[%s871 + $0x10] sm:$0xff]
      %v993 = vld [vmem:[%s871 + $0x18] sm:$0xff]
      %v994 = vld [vmem:[%s871 + $0x20] sm:$0xff]
      %v995 = vld [vmem:[%s871 + $0x28] sm:$0xff]
      %v996 = vld [vmem:[%s871 + $0x30] sm:$0xff]
      %v997 = vld [vmem:[%s871 + $0x38] sm:$0xff]
      %v998 = vld [vmem:[%s871 + $0x40] sm:$0xff]
      %v999 = vld [vmem:[%s871 + $0x48] sm:$0xff]
      %v1000 = vld [vmem:[%s871 + $0x50] sm:$0xff]
      %v1001 = vld [vmem:[%s871 + $0x58] sm:$0xff]
      %v1002 = vld [vmem:[%s871 + $0x60] sm:$0xff]
      %v1003 = vld [vmem:[%s871 + $0x68] sm:$0xff]
      %v1004 = vld [vmem:[%s871 + $0x70] sm:$0xff]
      %v1005 = vld [vmem:[%s871 + $0x78] sm:$0xff]
      %v1006 = vld [vmem:[%s875] sm:$0x1]
      %v1008 = vlaneseq
      %v1009 = vshrl.u32 %v1008, 7
      %v1010 = vsub.s32 0, %v1009
      %v1011 = vrot.slane %v1006, %v1010
      %1013 = vmatprep.subr.mxu0 0.0
      %1014 = vmatpush1.msra.mxu0 %v1005
      %1015 = vmatprep.subr.mxu0 0.0
      %1016 = vmatpush1.msra.mxu0 %v1004
      %1017 = vmatprep.subr.mxu0 0.0
      %1018 = vmatpush1.msra.mxu0 %v1003
      %1019 = vmatprep.subr.mxu0 0.0
      %1020 = vmatpush1.msra.mxu0 %v1002
      %1021 = vmatprep.subr.mxu0 0.0
      %1022 = vmatpush1.msra.mxu0 %v1001
      %1023 = vmatprep.subr.mxu0 0.0
      %1024 = vmatpush1.msra.mxu0 %v1000
      %1025 = vmatprep.subr.mxu0 0.0
      %1026 = vmatpush1.msra.mxu0 %v999
      %1027 = vmatprep.subr.mxu0 0.0
      %1028 = vmatpush1.msra.mxu0 %v998
      %1029 = vmatprep.subr.mxu0 0.0
      %1030 = vmatpush1.msra.mxu0 %v997
      %1031 = vmatprep.subr.mxu0 0.0
      %1032 = vmatpush1.msra.mxu0 %v996
      %1033 = vmatprep.subr.mxu0 0.0
      %1034 = vmatpush1.msra.mxu0 %v995
      %1035 = vmatprep.subr.mxu0 0.0
      %1036 = vmatpush1.msra.mxu0 %v994
      %1037 = vmatprep.subr.mxu0 0.0
      %1038 = vmatpush1.msra.mxu0 %v993
      %1039 = vmatprep.subr.mxu0 0.0
      %1040 = vmatpush1.msra.mxu0 %v992
      %1041 = vmatprep.subr.mxu0 0.0
      %1042 = vmatpush1.msra.mxu0 %v991
      %1043 = vmatprep.subr.mxu0 0.0
      %1044 = vmatpush1.msra.mxu0 %v990
      %1045 = vmatprep.subr.mxu0 0.0
      %1046 = vmatpush2.msra.mxu0 0.0
      %1047 = vmatprep.subr.mxu0 0.0
      %1048 = vmatpush2.msra.mxu0 0.0
      %1049 = vmatprep.subr.mxu0 0.0
      %1050 = vmatpush2.msra.mxu0 0.0
      %1051 = vmatprep.subr.mxu0 0.0
      %1052 = vmatpush2.msra.mxu0 0.0
      %1053 = vmatprep.subr.mxu0 0.0
      %1054 = vmatpush2.msra.mxu0 0.0
      %1055 = vmatprep.subr.mxu0 0.0
      %1056 = vmatpush2.msra.mxu0 0.0
      %1057 = vmatprep.subr.mxu0 0.0
      %1058 = vmatpush2.msra.mxu0 0.0
      %1059 = vmatprep.subr.mxu0 0.0
      %1060 = vmatpush2.msra.mxu0 0.0
      %1061 = vmatprep.subr.mxu0 0.0
      %1062 = vmatpush2.msra.mxu0 0.0
      %1063 = vmatprep.subr.mxu0 0.0
      %1064 = vmatpush2.msra.mxu0 0.0
      %1065 = vmatprep.subr.mxu0 0.0
      %1066 = vmatpush2.msra.mxu0 0.0
      %1067 = vmatprep.subr.mxu0 0.0
      %1068 = vmatpush2.msra.mxu0 0.0
      %1069 = vmatprep.subr.mxu0 0.0
      %1070 = vmatpush2.msra.mxu0 0.0
      %1071 = vmatprep.subr.mxu0 0.0
      %1072 = vmatpush2.msra.mxu0 0.0
      %1073 = vmatprep.subr.mxu0 0.0
      %1074 = vmatpush2.msra.mxu0 0.0
      %1075 = vmatprep.subr.mxu0 0.0
      %1076 = vmatpush2.msra.mxu0 0.0
      %1077 = vmatprep.mubr.f32.mxu0 0.0
      %1078 = vmatmul.mubr.f32.gmra.mxu0 %v986
      %v1079 = vpop.f32.mrf.mxu0
      %v1080 = vadd.f32 %v1011, %v1079
      %v1081 = vpop.f32.mrf.mxu0
      %1082 = vmatprep.mubr.f32.mxu0 0.0
      %1083 = vmatmul.mubr.f32.gmra.mxu0 %v987
      %v1084 = vpop.f32.mrf.mxu0
      %v1085 = vadd.f32 %v1011, %v1084
      %v1086 = vpop.f32.mrf.mxu0
      %1087 = vdwg.mxu0
      %v1088 = vld [vmem:[%s880] sm:$0xff]
      %v1089 = vld [vmem:[%s880 + $0x8] sm:$0xff]
      %v1090 = vld [vmem:[%s880 + $0x10] sm:$0xff]
      %v1091 = vld [vmem:[%s880 + $0x18] sm:$0xff]
      %v1092 = vld [vmem:[%s880 + $0x20] sm:$0xff]
      %v1093 = vld [vmem:[%s880 + $0x28] sm:$0xff]
      %v1094 = vld [vmem:[%s880 + $0x30] sm:$0xff]
      %v1095 = vld [vmem:[%s880 + $0x38] sm:$0xff]
      %v1096 = vld [vmem:[%s880 + $0x40] sm:$0xff]
      %v1097 = vld [vmem:[%s880 + $0x48] sm:$0xff]
      %v1098 = vld [vmem:[%s880 + $0x50] sm:$0xff]
      %v1099 = vld [vmem:[%s880 + $0x58] sm:$0xff]
      %v1100 = vld [vmem:[%s880 + $0x60] sm:$0xff]
      %v1101 = vld [vmem:[%s880 + $0x68] sm:$0xff]
      %v1102 = vld [vmem:[%s880 + $0x70] sm:$0xff]
      %v1103 = vld [vmem:[%s880 + $0x78] sm:$0xff]
      %v1104 = vld [vmem:[%s884] sm:$0x1]
      %v1106 = vlaneseq
      %v1107 = vshrl.u32 %v1106, 7
      %v1108 = vsub.s32 0, %v1107
      %v1109 = vrot.slane %v1104, %v1108
      %1111 = vmatprep.subr.mxu0 0.0
      %1112 = vmatpush1.msra.mxu0 %v1103
      %1113 = vmatprep.subr.mxu0 0.0
      %1114 = vmatpush1.msra.mxu0 %v1102
      %1115 = vmatprep.subr.mxu0 0.0
      %1116 = vmatpush1.msra.mxu0 %v1101
      %1117 = vmatprep.subr.mxu0 0.0
      %1118 = vmatpush1.msra.mxu0 %v1100
      %1119 = vmatprep.subr.mxu0 0.0
      %1120 = vmatpush1.msra.mxu0 %v1099
      %1121 = vmatprep.subr.mxu0 0.0
      %1122 = vmatpush1.msra.mxu0 %v1098
      %1123 = vmatprep.subr.mxu0 0.0
      %1124 = vmatpush1.msra.mxu0 %v1097
      %1125 = vmatprep.subr.mxu0 0.0
      %1126 = vmatpush1.msra.mxu0 %v1096
      %1127 = vmatprep.subr.mxu0 0.0
      %1128 = vmatpush1.msra.mxu0 %v1095
      %1129 = vmatprep.subr.mxu0 0.0
      %1130 = vmatpush1.msra.mxu0 %v1094
      %1131 = vmatprep.subr.mxu0 0.0
      %1132 = vmatpush1.msra.mxu0 %v1093
      %1133 = vmatprep.subr.mxu0 0.0
      %1134 = vmatpush1.msra.mxu0 %v1092
      %1135 = vmatprep.subr.mxu0 0.0
      %1136 = vmatpush1.msra.mxu0 %v1091
      %1137 = vmatprep.subr.mxu0 0.0
      %1138 = vmatpush1.msra.mxu0 %v1090
      %1139 = vmatprep.subr.mxu0 0.0
      %1140 = vmatpush1.msra.mxu0 %v1089
      %1141 = vmatprep.subr.mxu0 0.0
      %1142 = vmatpush1.msra.mxu0 %v1088
      %1143 = vmatprep.subr.mxu0 0.0
      %1144 = vmatpush2.msra.mxu0 0.0
      %1145 = vmatprep.subr.mxu0 0.0
      %1146 = vmatpush2.msra.mxu0 0.0
      %1147 = vmatprep.subr.mxu0 0.0
      %1148 = vmatpush2.msra.mxu0 0.0
      %1149 = vmatprep.subr.mxu0 0.0
      %1150 = vmatpush2.msra.mxu0 0.0
      %1151 = vmatprep.subr.mxu0 0.0
      %1152 = vmatpush2.msra.mxu0 0.0
      %1153 = vmatprep.subr.mxu0 0.0
      %1154 = vmatpush2.msra.mxu0 0.0
      %1155 = vmatprep.subr.mxu0 0.0
      %1156 = vmatpush2.msra.mxu0 0.0
      %1157 = vmatprep.subr.mxu0 0.0
      %1158 = vmatpush2.msra.mxu0 0.0
      %1159 = vmatprep.subr.mxu0 0.0
      %1160 = vmatpush2.msra.mxu0 0.0
      %1161 = vmatprep.subr.mxu0 0.0
      %1162 = vmatpush2.msra.mxu0 0.0
      %1163 = vmatprep.subr.mxu0 0.0
      %1164 = vmatpush2.msra.mxu0 0.0
      %1165 = vmatprep.subr.mxu0 0.0
      %1166 = vmatpush2.msra.mxu0 0.0
      %1167 = vmatprep.subr.mxu0 0.0
      %1168 = vmatpush2.msra.mxu0 0.0
      %1169 = vmatprep.subr.mxu0 0.0
      %1170 = vmatpush2.msra.mxu0 0.0
      %1171 = vmatprep.subr.mxu0 0.0
      %1172 = vmatpush2.msra.mxu0 0.0
      %1173 = vmatprep.subr.mxu0 0.0
      %1174 = vmatpush2.msra.mxu0 0.0
      %1175 = vmatprep.mubr.f32.mxu0 0.0
      %1176 = vmatmul.mubr.f32.gmra.mxu0 %v986
      %v1177 = vpop.f32.mrf.mxu0
      %v1178 = vadd.f32 %v1109, %v1177
      %v1179 = vpop.f32.mrf.mxu0
      %1180 = vmatprep.mubr.f32.mxu0 0.0
      %1181 = vmatmul.mubr.f32.gmra.mxu0 %v987
      %v1182 = vpop.f32.mrf.mxu0
      %v1183 = vadd.f32 %v1109, %v1182
      %v1184 = vpop.f32.mrf.mxu0
      %1185 = vdwg.mxu0
      %v1186 = vld [vmem:[%s889] sm:$0xff]
      %v1187 = vld [vmem:[%s889 + $0x8] sm:$0xff]
      %v1188 = vld [vmem:[%s889 + $0x10] sm:$0xff]
      %v1189 = vld [vmem:[%s889 + $0x18] sm:$0xff]
      %v1190 = vld [vmem:[%s889 + $0x20] sm:$0xff]
      %v1191 = vld [vmem:[%s889 + $0x28] sm:$0xff]
      %v1192 = vld [vmem:[%s889 + $0x30] sm:$0xff]
      %v1193 = vld [vmem:[%s889 + $0x38] sm:$0xff]
      %v1194 = vld [vmem:[%s889 + $0x40] sm:$0xff]
      %v1195 = vld [vmem:[%s889 + $0x48] sm:$0xff]
      %v1196 = vld [vmem:[%s889 + $0x50] sm:$0xff]
      %v1197 = vld [vmem:[%s889 + $0x58] sm:$0xff]
      %v1198 = vld [vmem:[%s889 + $0x60] sm:$0xff]
      %v1199 = vld [vmem:[%s889 + $0x68] sm:$0xff]
      %v1200 = vld [vmem:[%s889 + $0x70] sm:$0xff]
      %v1201 = vld [vmem:[%s889 + $0x78] sm:$0xff]
      %v1202 = vld [vmem:[%s893] sm:$0x1]
      %v1204 = vlaneseq
      %v1205 = vshrl.u32 %v1204, 7
      %v1206 = vsub.s32 0, %v1205
      %v1207 = vrot.slane %v1202, %v1206
      %1209 = vmatprep.subr.mxu0 0.0
      %1210 = vmatpush1.msra.mxu0 %v1201
      %1211 = vmatprep.subr.mxu0 0.0
      %1212 = vmatpush1.msra.mxu0 %v1200
      %1213 = vmatprep.subr.mxu0 0.0
      %1214 = vmatpush1.msra.mxu0 %v1199
      %1215 = vmatprep.subr.mxu0 0.0
      %1216 = vmatpush1.msra.mxu0 %v1198
      %1217 = vmatprep.subr.mxu0 0.0
      %1218 = vmatpush1.msra.mxu0 %v1197
      %1219 = vmatprep.subr.mxu0 0.0
      %1220 = vmatpush1.msra.mxu0 %v1196
      %1221 = vmatprep.subr.mxu0 0.0
      %1222 = vmatpush1.msra.mxu0 %v1195
      %1223 = vmatprep.subr.mxu0 0.0
      %1224 = vmatpush1.msra.mxu0 %v1194
      %1225 = vmatprep.subr.mxu0 0.0
      %1226 = vmatpush1.msra.mxu0 %v1193
      %1227 = vmatprep.subr.mxu0 0.0
      %1228 = vmatpush1.msra.mxu0 %v1192
      %1229 = vmatprep.subr.mxu0 0.0
      %1230 = vmatpush1.msra.mxu0 %v1191
      %1231 = vmatprep.subr.mxu0 0.0
      %1232 = vmatpush1.msra.mxu0 %v1190
      %1233 = vmatprep.subr.mxu0 0.0
      %1234 = vmatpush1.msra.mxu0 %v1189
      %1235 = vmatprep.subr.mxu0 0.0
      %1236 = vmatpush1.msra.mxu0 %v1188
      %1237 = vmatprep.subr.mxu0 0.0
      %1238 = vmatpush1.msra.mxu0 %v1187
      %1239 = vmatprep.subr.mxu0 0.0
      %1240 = vmatpush1.msra.mxu0 %v1186
      %1241 = vmatprep.subr.mxu0 0.0
      %1242 = vmatpush2.msra.mxu0 0.0
      %1243 = vmatprep.subr.mxu0 0.0
      %1244 = vmatpush2.msra.mxu0 0.0
      %1245 = vmatprep.subr.mxu0 0.0
      %1246 = vmatpush2.msra.mxu0 0.0
      %1247 = vmatprep.subr.mxu0 0.0
      %1248 = vmatpush2.msra.mxu0 0.0
      %1249 = vmatprep.subr.mxu0 0.0
      %1250 = vmatpush2.msra.mxu0 0.0
      %1251 = vmatprep.subr.mxu0 0.0
      %1252 = vmatpush2.msra.mxu0 0.0
      %1253 = vmatprep.subr.mxu0 0.0
      %1254 = vmatpush2.msra.mxu0 0.0
      %1255 = vmatprep.subr.mxu0 0.0
      %1256 = vmatpush2.msra.mxu0 0.0
      %1257 = vmatprep.subr.mxu0 0.0
      %1258 = vmatpush2.msra.mxu0 0.0
      %1259 = vmatprep.subr.mxu0 0.0
      %1260 = vmatpush2.msra.mxu0 0.0
      %1261 = vmatprep.subr.mxu0 0.0
      %1262 = vmatpush2.msra.mxu0 0.0
      %1263 = vmatprep.subr.mxu0 0.0
      %1264 = vmatpush2.msra.mxu0 0.0
      %1265 = vmatprep.subr.mxu0 0.0
      %1266 = vmatpush2.msra.mxu0 0.0
      %1267 = vmatprep.subr.mxu0 0.0
      %1268 = vmatpush2.msra.mxu0 0.0
      %1269 = vmatprep.subr.mxu0 0.0
      %1270 = vmatpush2.msra.mxu0 0.0
      %1271 = vmatprep.subr.mxu0 0.0
      %1272 = vmatpush2.msra.mxu0 0.0
      %1273 = vmatprep.mubr.f32.mxu0 0.0
      %1274 = vmatmul.mubr.f32.gmra.mxu0 %v986
      %v1275 = vpop.f32.mrf.mxu0
      %v1276 = vadd.f32 %v1207, %v1275
      %v1277 = vpop.f32.mrf.mxu0
      %1278 = vmatprep.mubr.f32.mxu0 0.0
      %1279 = vmatmul.mubr.f32.gmra.mxu0 %v987
      %v1280 = vpop.f32.mrf.mxu0
      %v1281 = vadd.f32 %v1207, %v1280
      %v1282 = vpop.f32.mrf.mxu0
      %1283 = vdwg.mxu0
      %vm1284 = vcmask 261120
      %v1286 = vsel %vm1284, %v1080, 0
      %v1289 = vsel %vm1284, %v1085, 0
      %v1292 = vsel %vm1284, %v1178, 0
      %v1295 = vsel %vm1284, %v1183, 0
      %1297 = vmatprep.subr.mxu0 0.0
      %1298 = vmatpush1.xpose.msra.mxu0 0.0
      %1299 = vmatprep.subr.mxu0 0.0
      %1300 = vmatpush1.xpose.msra.mxu0 0.0
      %1301 = vmatprep.subr.mxu0 0.0
      %1302 = vmatpush1.xpose.msra.mxu0 0.0
      %1303 = vmatprep.subr.mxu0 0.0
      %1304 = vmatpush1.xpose.msra.mxu0 0.0
      %1305 = vmatprep.subr.mxu0 0.0
      %1306 = vmatpush1.xpose.msra.mxu0 0.0
      %1307 = vmatprep.subr.mxu0 0.0
      %1308 = vmatpush1.xpose.msra.mxu0 0.0
      %1309 = vmatprep.subr.mxu0 0.0
      %1310 = vmatpush1.xpose.msra.mxu0 0.0
      %1311 = vmatprep.subr.mxu0 0.0
      %1312 = vmatpush1.xpose.msra.mxu0 0.0
      %1313 = vmatprep.subr.mxu0 0.0
      %1314 = vmatpush1.xpose.msra.mxu0 0.0
      %1315 = vmatprep.subr.mxu0 0.0
      %1316 = vmatpush1.xpose.msra.mxu0 0.0
      %1317 = vmatprep.subr.mxu0 0.0
      %1318 = vmatpush1.xpose.msra.mxu0 0.0
      %1319 = vmatprep.subr.mxu0 0.0
      %1320 = vmatpush1.xpose.msra.mxu0 0.0
      %1321 = vmatprep.subr.mxu0 0.0
      %1322 = vmatpush1.xpose.msra.mxu0 0.0
      %1323 = vmatprep.subr.mxu0 0.0
      %1324 = vmatpush1.xpose.msra.mxu0 0.0
      %1325 = vmatprep.subr.mxu0 0.0
      %1326 = vmatpush1.xpose.msra.mxu0 %v1295
      %1327 = vmatprep.subr.mxu0 0.0
      %1328 = vmatpush1.xpose.msra.mxu0 %v1292
      %1329 = vmatprep.subr.mxu0 0.0
      %1330 = vmatpush2.xpose.msra.mxu0 0.0
      %1331 = vmatprep.subr.mxu0 0.0
      %1332 = vmatpush2.xpose.msra.mxu0 0.0
      %1333 = vmatprep.subr.mxu0 0.0
      %1334 = vmatpush2.xpose.msra.mxu0 0.0
      %1335 = vmatprep.subr.mxu0 0.0
      %1336 = vmatpush2.xpose.msra.mxu0 0.0
      %1337 = vmatprep.subr.mxu0 0.0
      %1338 = vmatpush2.xpose.msra.mxu0 0.0
      %1339 = vmatprep.subr.mxu0 0.0
      %1340 = vmatpush2.xpose.msra.mxu0 0.0
      %1341 = vmatprep.subr.mxu0 0.0
      %1342 = vmatpush2.xpose.msra.mxu0 0.0
      %1343 = vmatprep.subr.mxu0 0.0
      %1344 = vmatpush2.xpose.msra.mxu0 0.0
      %1345 = vmatprep.subr.mxu0 0.0
      %1346 = vmatpush2.xpose.msra.mxu0 0.0
      %1347 = vmatprep.subr.mxu0 0.0
      %1348 = vmatpush2.xpose.msra.mxu0 0.0
      %1349 = vmatprep.subr.mxu0 0.0
      %1350 = vmatpush2.xpose.msra.mxu0 0.0
      %1351 = vmatprep.subr.mxu0 0.0
      %1352 = vmatpush2.xpose.msra.mxu0 0.0
      %1353 = vmatprep.subr.mxu0 0.0
      %1354 = vmatpush2.xpose.msra.mxu0 0.0
      %1355 = vmatprep.subr.mxu0 0.0
      %1356 = vmatpush2.xpose.msra.mxu0 0.0
      %1357 = vmatprep.subr.mxu0 0.0
      %1358 = vmatpush2.xpose.msra.mxu0 0.0
      %1359 = vmatprep.subr.mxu0 0.0
      %1360 = vmatpush2.xpose.msra.mxu0 0.0
      %1361 = vmatprep.mubr.f32.mxu0 0.0
      %1362 = vmatmul.mubr.f32.gmra.mxu0 %v1286
      %v1363 = vpop.f32.mrf.mxu0
      %v1364 = vadd.f32 0.0, %v1363
      %v1365 = vpop.f32.mrf.mxu0
      %1366 = vmatprep.mubr.f32.mxu0 0.0
      %1367 = vmatmul.mubr.f32.gmra.mxu0 %v1289
      %v1368 = vpop.f32.mrf.mxu0
      %v1369 = vadd.f32 0.0, %v1368
      %v1370 = vpop.f32.mrf.mxu0
      %1371 = vdwg.mxu0
      %v1372 = vmul.f32 %v1364, 0.17677669
      %v1373 = vmul.f32 %v1369, 0.17677669
      %v1374 = vadd.f32 %v1372, %v988
      %v1375 = vadd.f32 %v1373, %v989
      %vm1376 = vcmask 130048
      %v1377 = vsel %vm1376, %v1374, -inf
      %1378 = vmax.xlane.f32.xlu0 %v1377
      %v1379 = vpop.xlane.xlu0 %1378
      %v1380 = vsel %vm1376, %v1375, -inf
      %1381 = vmax.xlane.f32.xlu0 %v1380
      %v1382 = vpop.xlane.xlu0 %1381
      %v1383 = vsub.f32 %v1374, %v1379
      %v1384 = vsub.f32 %v1375, %v1382
      %v1385 = vmul.f32 %v1383, 1.442695
      %v1386 = vpow.pop %v1385
      %v1387 = vmul.f32 %v1384, 1.442695
      %v1388 = vpow.pop %v1387
      %v1389 = vsel %vm1376, %v1386, 0.0
      %1390 = vadd.xlane.f32.xlu0 %v1389
      %v1391 = vpop.xlane.xlu0 %1390
      %v1392 = vsel %vm1376, %v1388, 0.0
      %1393 = vadd.xlane.f32.xlu0 %v1392
      %v1394 = vpop.xlane.xlu0 %1393
      %v1395 = vrcp.pop %v1391
      %v1396 = vrcp.pop %v1394
      %v1397 = vmul.f32 %v1386, %v1395
      %v1398 = vmul.f32 %v1388, %v1396
      %v1400 = vsel %vm1376, %v1397, 0
      %v1403 = vsel %vm1376, %v1398, 0
      %1405 = vmatprep.subr.mxu0 0.0
      %1406 = vmatpush1.msra.mxu0 0.0
      %1407 = vmatprep.subr.mxu0 0.0
      %1408 = vmatpush1.msra.mxu0 0.0
      %1409 = vmatprep.subr.mxu0 0.0
      %1410 = vmatpush1.msra.mxu0 0.0
      %1411 = vmatprep.subr.mxu0 0.0
      %1412 = vmatpush1.msra.mxu0 0.0
      %1413 = vmatprep.subr.mxu0 0.0
      %1414 = vmatpush1.msra.mxu0 0.0
      %1415 = vmatprep.subr.mxu0 0.0
      %1416 = vmatpush1.msra.mxu0 0.0
      %1417 = vmatprep.subr.mxu0 0.0
      %1418 = vmatpush1.msra.mxu0 0.0
      %1419 = vmatprep.subr.mxu0 0.0
      %1420 = vmatpush1.msra.mxu0 0.0
      %1421 = vmatprep.subr.mxu0 0.0
      %1422 = vmatpush1.msra.mxu0 0.0
      %1423 = vmatprep.subr.mxu0 0.0
      %1424 = vmatpush1.msra.mxu0 0.0
      %1425 = vmatprep.subr.mxu0 0.0
      %1426 = vmatpush1.msra.mxu0 0.0
      %1427 = vmatprep.subr.mxu0 0.0
      %1428 = vmatpush1.msra.mxu0 0.0
      %1429 = vmatprep.subr.mxu0 0.0
      %1430 = vmatpush1.msra.mxu0 0.0
      %1431 = vmatprep.subr.mxu0 0.0
      %1432 = vmatpush1.msra.mxu0 0.0
      %1433 = vmatprep.subr.mxu0 0.0
      %1434 = vmatpush1.msra.mxu0 %v1281
      %1435 = vmatprep.subr.mxu0 0.0
      %1436 = vmatpush1.msra.mxu0 %v1276
      %1437 = vmatprep.subr.mxu0 0.0
      %1438 = vmatpush2.msra.mxu0 0.0
      %1439 = vmatprep.subr.mxu0 0.0
      %1440 = vmatpush2.msra.mxu0 0.0
      %1441 = vmatprep.subr.mxu0 0.0
      %1442 = vmatpush2.msra.mxu0 0.0
      %1443 = vmatprep.subr.mxu0 0.0
      %1444 = vmatpush2.msra.mxu0 0.0
      %1445 = vmatprep.subr.mxu0 0.0
      %1446 = vmatpush2.msra.mxu0 0.0
      %1447 = vmatprep.subr.mxu0 0.0
      %1448 = vmatpush2.msra.mxu0 0.0
      %1449 = vmatprep.subr.mxu0 0.0
      %1450 = vmatpush2.msra.mxu0 0.0
      %1451 = vmatprep.subr.mxu0 0.0
      %1452 = vmatpush2.msra.mxu0 0.0
      %1453 = vmatprep.subr.mxu0 0.0
      %1454 = vmatpush2.msra.mxu0 0.0
      %1455 = vmatprep.subr.mxu0 0.0
      %1456 = vmatpush2.msra.mxu0 0.0
      %1457 = vmatprep.subr.mxu0 0.0
      %1458 = vmatpush2.msra.mxu0 0.0
      %1459 = vmatprep.subr.mxu0 0.0
      %1460 = vmatpush2.msra.mxu0 0.0
      %1461 = vmatprep.subr.mxu0 0.0
      %1462 = vmatpush2.msra.mxu0 0.0
      %1463 = vmatprep.subr.mxu0 0.0
      %1464 = vmatpush2.msra.mxu0 0.0
      %1465 = vmatprep.subr.mxu0 0.0
      %1466 = vmatpush2.msra.mxu0 0.0
      %1467 = vmatprep.subr.mxu0 0.0
      %1468 = vmatpush2.msra.mxu0 0.0
      %1469 = vmatprep.mubr.f32.mxu0 0.0
      %1470 = vmatmul.mubr.f32.gmra.mxu0 %v1400
      %v1471 = vpop.f32.mrf.mxu0
      %v1472 = vadd.f32 0.0, %v1471
      %v1473 = vpop.f32.mrf.mxu0
      %1474 = vmatprep.mubr.f32.mxu0 0.0
      %1475 = vmatmul.mubr.f32.gmra.mxu0 %v1403
      %v1476 = vpop.f32.mrf.mxu0
      %v1477 = vadd.f32 0.0, %v1476
      %v1478 = vpop.f32.mrf.mxu0
      %1479 = vdwg.mxu0
      %v1480 = vld [vmem:[%s898] sm:$0xff]
      %v1481 = vld [vmem:[%s898 + $0x8] sm:$0xff]
      %v1482 = vld [vmem:[%s898 + $0x10] sm:$0xff]
      %v1483 = vld [vmem:[%s898 + $0x18] sm:$0xff]
      %s1484 = scalar_lea.vmem %s871, 128
      %v1485 = vld [vmem:[%s1484] sm:$0xff]
      %v1486 = vld [vmem:[%s1484 + $0x8] sm:$0xff]
      %v1487 = vld [vmem:[%s1484 + $0x10] sm:$0xff]
      %v1488 = vld [vmem:[%s1484 + $0x18] sm:$0xff]
      %v1489 = vld [vmem:[%s1484 + $0x20] sm:$0xff]
      %v1490 = vld [vmem:[%s1484 + $0x28] sm:$0xff]
      %v1491 = vld [vmem:[%s1484 + $0x30] sm:$0xff]
      %v1492 = vld [vmem:[%s1484 + $0x38] sm:$0xff]
      %v1493 = vld [vmem:[%s1484 + $0x40] sm:$0xff]
      %v1494 = vld [vmem:[%s1484 + $0x48] sm:$0xff]
      %v1495 = vld [vmem:[%s1484 + $0x50] sm:$0xff]
      %v1496 = vld [vmem:[%s1484 + $0x58] sm:$0xff]
      %v1497 = vld [vmem:[%s1484 + $0x60] sm:$0xff]
      %v1498 = vld [vmem:[%s1484 + $0x68] sm:$0xff]
      %v1499 = vld [vmem:[%s1484 + $0x70] sm:$0xff]
      %v1500 = vld [vmem:[%s1484 + $0x78] sm:$0xff]
      %s1501 = scalar_lea.vmem %s875, 1
      %v1502 = vld [vmem:[%s1501] sm:$0x1]
      %v1504 = vlaneseq
      %v1505 = vshrl.u32 %v1504, 7
      %v1506 = vsub.s32 0, %v1505
      %v1507 = vrot.slane %v1502, %v1506
      %1509 = vmatprep.subr.mxu0 0.0
      %1510 = vmatpush1.msra.mxu0 %v1500
      %1511 = vmatprep.subr.mxu0 0.0
      %1512 = vmatpush1.msra.mxu0 %v1499
      %1513 = vmatprep.subr.mxu0 0.0
      %1514 = vmatpush1.msra.mxu0 %v1498
      %1515 = vmatprep.subr.mxu0 0.0
      %1516 = vmatpush1.msra.mxu0 %v1497
      %1517 = vmatprep.subr.mxu0 0.0
      %1518 = vmatpush1.msra.mxu0 %v1496
      %1519 = vmatprep.subr.mxu0 0.0
      %1520 = vmatpush1.msra.mxu0 %v1495
      %1521 = vmatprep.subr.mxu0 0.0
      %1522 = vmatpush1.msra.mxu0 %v1494
      %1523 = vmatprep.subr.mxu0 0.0
      %1524 = vmatpush1.msra.mxu0 %v1493
      %1525 = vmatprep.subr.mxu0 0.0
      %1526 = vmatpush1.msra.mxu0 %v1492
      %1527 = vmatprep.subr.mxu0 0.0
      %1528 = vmatpush1.msra.mxu0 %v1491
      %1529 = vmatprep.subr.mxu0 0.0
      %1530 = vmatpush1.msra.mxu0 %v1490
      %1531 = vmatprep.subr.mxu0 0.0
      %1532 = vmatpush1.msra.mxu0 %v1489
      %1533 = vmatprep.subr.mxu0 0.0
      %1534 = vmatpush1.msra.mxu0 %v1488
      %1535 = vmatprep.subr.mxu0 0.0
      %1536 = vmatpush1.msra.mxu0 %v1487
      %1537 = vmatprep.subr.mxu0 0.0
      %1538 = vmatpush1.msra.mxu0 %v1486
      %1539 = vmatprep.subr.mxu0 0.0
      %1540 = vmatpush1.msra.mxu0 %v1485
      %1541 = vmatprep.subr.mxu0 0.0
      %1542 = vmatpush2.msra.mxu0 0.0
      %1543 = vmatprep.subr.mxu0 0.0
      %1544 = vmatpush2.msra.mxu0 0.0
      %1545 = vmatprep.subr.mxu0 0.0
      %1546 = vmatpush2.msra.mxu0 0.0
      %1547 = vmatprep.subr.mxu0 0.0
      %1548 = vmatpush2.msra.mxu0 0.0
      %1549 = vmatprep.subr.mxu0 0.0
      %1550 = vmatpush2.msra.mxu0 0.0
      %1551 = vmatprep.subr.mxu0 0.0
      %1552 = vmatpush2.msra.mxu0 0.0
      %1553 = vmatprep.subr.mxu0 0.0
      %1554 = vmatpush2.msra.mxu0 0.0
      %1555 = vmatprep.subr.mxu0 0.0
      %1556 = vmatpush2.msra.mxu0 0.0
      %1557 = vmatprep.subr.mxu0 0.0
      %1558 = vmatpush2.msra.mxu0 0.0
      %1559 = vmatprep.subr.mxu0 0.0
      %1560 = vmatpush2.msra.mxu0 0.0
      %1561 = vmatprep.subr.mxu0 0.0
      %1562 = vmatpush2.msra.mxu0 0.0
      %1563 = vmatprep.subr.mxu0 0.0
      %1564 = vmatpush2.msra.mxu0 0.0
      %1565 = vmatprep.subr.mxu0 0.0
      %1566 = vmatpush2.msra.mxu0 0.0
      %1567 = vmatprep.subr.mxu0 0.0
      %1568 = vmatpush2.msra.mxu0 0.0
      %1569 = vmatprep.subr.mxu0 0.0
      %1570 = vmatpush2.msra.mxu0 0.0
      %1571 = vmatprep.subr.mxu0 0.0
      %1572 = vmatpush2.msra.mxu0 0.0
      %1573 = vmatprep.mubr.f32.mxu0 0.0
      %1574 = vmatmul.mubr.f32.gmra.mxu0 %v986
      %v1575 = vpop.f32.mrf.mxu0
      %v1576 = vadd.f32 %v1507, %v1575
      %v1577 = vpop.f32.mrf.mxu0
      %1578 = vmatprep.mubr.f32.mxu0 0.0
      %1579 = vmatmul.mubr.f32.gmra.mxu0 %v987
      %v1580 = vpop.f32.mrf.mxu0
      %v1581 = vadd.f32 %v1507, %v1580
      %v1582 = vpop.f32.mrf.mxu0
      %1583 = vdwg.mxu0
      %s1584 = scalar_lea.vmem %s880, 128
      %v1585 = vld [vmem:[%s1584] sm:$0xff]
      %v1586 = vld [vmem:[%s1584 + $0x8] sm:$0xff]
      %v1587 = vld [vmem:[%s1584 + $0x10] sm:$0xff]
      %v1588 = vld [vmem:[%s1584 + $0x18] sm:$0xff]
      %v1589 = vld [vmem:[%s1584 + $0x20] sm:$0xff]
      %v1590 = vld [vmem:[%s1584 + $0x28] sm:$0xff]
      %v1591 = vld [vmem:[%s1584 + $0x30] sm:$0xff]
      %v1592 = vld [vmem:[%s1584 + $0x38] sm:$0xff]
      %v1593 = vld [vmem:[%s1584 + $0x40] sm:$0xff]
      %v1594 = vld [vmem:[%s1584 + $0x48] sm:$0xff]
      %v1595 = vld [vmem:[%s1584 + $0x50] sm:$0xff]
      %v1596 = vld [vmem:[%s1584 + $0x58] sm:$0xff]
      %v1597 = vld [vmem:[%s1584 + $0x60] sm:$0xff]
      %v1598 = vld [vmem:[%s1584 + $0x68] sm:$0xff]
      %v1599 = vld [vmem:[%s1584 + $0x70] sm:$0xff]
      %v1600 = vld [vmem:[%s1584 + $0x78] sm:$0xff]
      %s1601 = scalar_lea.vmem %s884, 1
      %v1602 = vld [vmem:[%s1601] sm:$0x1]
      %v1604 = vlaneseq
      %v1605 = vshrl.u32 %v1604, 7
      %v1606 = vsub.s32 0, %v1605
      %v1607 = vrot.slane %v1602, %v1606
      %1609 = vmatprep.subr.mxu0 0.0
      %1610 = vmatpush1.msra.mxu0 %v1600
      %1611 = vmatprep.subr.mxu0 0.0
      %1612 = vmatpush1.msra.mxu0 %v1599
      %1613 = vmatprep.subr.mxu0 0.0
      %1614 = vmatpush1.msra.mxu0 %v1598
      %1615 = vmatprep.subr.mxu0 0.0
      %1616 = vmatpush1.msra.mxu0 %v1597
      %1617 = vmatprep.subr.mxu0 0.0
      %1618 = vmatpush1.msra.mxu0 %v1596
      %1619 = vmatprep.subr.mxu0 0.0
      %1620 = vmatpush1.msra.mxu0 %v1595
      %1621 = vmatprep.subr.mxu0 0.0
      %1622 = vmatpush1.msra.mxu0 %v1594
      %1623 = vmatprep.subr.mxu0 0.0
      %1624 = vmatpush1.msra.mxu0 %v1593
      %1625 = vmatprep.subr.mxu0 0.0
      %1626 = vmatpush1.msra.mxu0 %v1592
      %1627 = vmatprep.subr.mxu0 0.0
      %1628 = vmatpush1.msra.mxu0 %v1591
      %1629 = vmatprep.subr.mxu0 0.0
      %1630 = vmatpush1.msra.mxu0 %v1590
      %1631 = vmatprep.subr.mxu0 0.0
      %1632 = vmatpush1.msra.mxu0 %v1589
      %1633 = vmatprep.subr.mxu0 0.0
      %1634 = vmatpush1.msra.mxu0 %v1588
      %1635 = vmatprep.subr.mxu0 0.0
      %1636 = vmatpush1.msra.mxu0 %v1587
      %1637 = vmatprep.subr.mxu0 0.0
      %1638 = vmatpush1.msra.mxu0 %v1586
      %1639 = vmatprep.subr.mxu0 0.0
      %1640 = vmatpush1.msra.mxu0 %v1585
      %1641 = vmatprep.subr.mxu0 0.0
      %1642 = vmatpush2.msra.mxu0 0.0
      %1643 = vmatprep.subr.mxu0 0.0
      %1644 = vmatpush2.msra.mxu0 0.0
      %1645 = vmatprep.subr.mxu0 0.0
      %1646 = vmatpush2.msra.mxu0 0.0
      %1647 = vmatprep.subr.mxu0 0.0
      %1648 = vmatpush2.msra.mxu0 0.0
      %1649 = vmatprep.subr.mxu0 0.0
      %1650 = vmatpush2.msra.mxu0 0.0
      %1651 = vmatprep.subr.mxu0 0.0
      %1652 = vmatpush2.msra.mxu0 0.0
      %1653 = vmatprep.subr.mxu0 0.0
      %1654 = vmatpush2.msra.mxu0 0.0
      %1655 = vmatprep.subr.mxu0 0.0
      %1656 = vmatpush2.msra.mxu0 0.0
      %1657 = vmatprep.subr.mxu0 0.0
      %1658 = vmatpush2.msra.mxu0 0.0
      %1659 = vmatprep.subr.mxu0 0.0
      %1660 = vmatpush2.msra.mxu0 0.0
      %1661 = vmatprep.subr.mxu0 0.0
      %1662 = vmatpush2.msra.mxu0 0.0
      %1663 = vmatprep.subr.mxu0 0.0
      %1664 = vmatpush2.msra.mxu0 0.0
      %1665 = vmatprep.subr.mxu0 0.0
      %1666 = vmatpush2.msra.mxu0 0.0
      %1667 = vmatprep.subr.mxu0 0.0
      %1668 = vmatpush2.msra.mxu0 0.0
      %1669 = vmatprep.subr.mxu0 0.0
      %1670 = vmatpush2.msra.mxu0 0.0
      %1671 = vmatprep.subr.mxu0 0.0
      %1672 = vmatpush2.msra.mxu0 0.0
      %1673 = vmatprep.mubr.f32.mxu0 0.0
      %1674 = vmatmul.mubr.f32.gmra.mxu0 %v986
      %v1675 = vpop.f32.mrf.mxu0
      %v1676 = vadd.f32 %v1607, %v1675
      %v1677 = vpop.f32.mrf.mxu0
      %1678 = vmatprep.mubr.f32.mxu0 0.0
      %1679 = vmatmul.mubr.f32.gmra.mxu0 %v987
      %v1680 = vpop.f32.mrf.mxu0
      %v1681 = vadd.f32 %v1607, %v1680
      %v1682 = vpop.f32.mrf.mxu0
      %1683 = vdwg.mxu0
      %s1684 = scalar_lea.vmem %s889, 128
      %v1685 = vld [vmem:[%s1684] sm:$0xff]
      %v1686 = vld [vmem:[%s1684 + $0x8] sm:$0xff]
      %v1687 = vld [vmem:[%s1684 + $0x10] sm:$0xff]
      %v1688 = vld [vmem:[%s1684 + $0x18] sm:$0xff]
      %v1689 = vld [vmem:[%s1684 + $0x20] sm:$0xff]
      %v1690 = vld [vmem:[%s1684 + $0x28] sm:$0xff]
      %v1691 = vld [vmem:[%s1684 + $0x30] sm:$0xff]
      %v1692 = vld [vmem:[%s1684 + $0x38] sm:$0xff]
      %v1693 = vld [vmem:[%s1684 + $0x40] sm:$0xff]
      %v1694 = vld [vmem:[%s1684 + $0x48] sm:$0xff]
      %v1695 = vld [vmem:[%s1684 + $0x50] sm:$0xff]
      %v1696 = vld [vmem:[%s1684 + $0x58] sm:$0xff]
      %v1697 = vld [vmem:[%s1684 + $0x60] sm:$0xff]
      %v1698 = vld [vmem:[%s1684 + $0x68] sm:$0xff]
      %v1699 = vld [vmem:[%s1684 + $0x70] sm:$0xff]
      %v1700 = vld [vmem:[%s1684 + $0x78] sm:$0xff]
      %s1701 = scalar_lea.vmem %s893, 1
      %v1702 = vld [vmem:[%s1701] sm:$0x1]
      %v1704 = vlaneseq
      %v1705 = vshrl.u32 %v1704, 7
      %v1706 = vsub.s32 0, %v1705
      %v1707 = vrot.slane %v1702, %v1706
      %1709 = vmatprep.subr.mxu0 0.0
      %1710 = vmatpush1.msra.mxu0 %v1700
      %1711 = vmatprep.subr.mxu0 0.0
      %1712 = vmatpush1.msra.mxu0 %v1699
      %1713 = vmatprep.subr.mxu0 0.0
      %1714 = vmatpush1.msra.mxu0 %v1698
      %1715 = vmatprep.subr.mxu0 0.0
      %1716 = vmatpush1.msra.mxu0 %v1697
      %1717 = vmatprep.subr.mxu0 0.0
      %1718 = vmatpush1.msra.mxu0 %v1696
      %1719 = vmatprep.subr.mxu0 0.0
      %1720 = vmatpush1.msra.mxu0 %v1695
      %1721 = vmatprep.subr.mxu0 0.0
      %1722 = vmatpush1.msra.mxu0 %v1694
      %1723 = vmatprep.subr.mxu0 0.0
      %1724 = vmatpush1.msra.mxu0 %v1693
      %1725 = vmatprep.subr.mxu0 0.0
      %1726 = vmatpush1.msra.mxu0 %v1692
      %1727 = vmatprep.subr.mxu0 0.0
      %1728 = vmatpush1.msra.mxu0 %v1691
      %1729 = vmatprep.subr.mxu0 0.0
      %1730 = vmatpush1.msra.mxu0 %v1690
      %1731 = vmatprep.subr.mxu0 0.0
      %1732 = vmatpush1.msra.mxu0 %v1689
      %1733 = vmatprep.subr.mxu0 0.0
      %1734 = vmatpush1.msra.mxu0 %v1688
      %1735 = vmatprep.subr.mxu0 0.0
      %1736 = vmatpush1.msra.mxu0 %v1687
      %1737 = vmatprep.subr.mxu0 0.0
      %1738 = vmatpush1.msra.mxu0 %v1686
      %1739 = vmatprep.subr.mxu0 0.0
      %1740 = vmatpush1.msra.mxu0 %v1685
      %1741 = vmatprep.subr.mxu0 0.0
      %1742 = vmatpush2.msra.mxu0 0.0
      %1743 = vmatprep.subr.mxu0 0.0
      %1744 = vmatpush2.msra.mxu0 0.0
      %1745 = vmatprep.subr.mxu0 0.0
      %1746 = vmatpush2.msra.mxu0 0.0
      %1747 = vmatprep.subr.mxu0 0.0
      %1748 = vmatpush2.msra.mxu0 0.0
      %1749 = vmatprep.subr.mxu0 0.0
      %1750 = vmatpush2.msra.mxu0 0.0
      %1751 = vmatprep.subr.mxu0 0.0
      %1752 = vmatpush2.msra.mxu0 0.0
      %1753 = vmatprep.subr.mxu0 0.0
      %1754 = vmatpush2.msra.mxu0 0.0
      %1755 = vmatprep.subr.mxu0 0.0
      %1756 = vmatpush2.msra.mxu0 0.0
      %1757 = vmatprep.subr.mxu0 0.0
      %1758 = vmatpush2.msra.mxu0 0.0
      %1759 = vmatprep.subr.mxu0 0.0
      %1760 = vmatpush2.msra.mxu0 0.0
      %1761 = vmatprep.subr.mxu0 0.0
      %1762 = vmatpush2.msra.mxu0 0.0
      %1763 = vmatprep.subr.mxu0 0.0
      %1764 = vmatpush2.msra.mxu0 0.0
      %1765 = vmatprep.subr.mxu0 0.0
      %1766 = vmatpush2.msra.mxu0 0.0
      %1767 = vmatprep.subr.mxu0 0.0
      %1768 = vmatpush2.msra.mxu0 0.0
      %1769 = vmatprep.subr.mxu0 0.0
      %1770 = vmatpush2.msra.mxu0 0.0
      %1771 = vmatprep.subr.mxu0 0.0
      %1772 = vmatpush2.msra.mxu0 0.0
      %1773 = vmatprep.mubr.f32.mxu0 0.0
      %1774 = vmatmul.mubr.f32.gmra.mxu0 %v986
      %v1775 = vpop.f32.mrf.mxu0
      %v1776 = vadd.f32 %v1707, %v1775
      %v1777 = vpop.f32.mrf.mxu0
      %1778 = vmatprep.mubr.f32.mxu0 0.0
      %1779 = vmatmul.mubr.f32.gmra.mxu0 %v987
      %v1780 = vpop.f32.mrf.mxu0
      %v1781 = vadd.f32 %v1707, %v1780
      %v1782 = vpop.f32.mrf.mxu0
      %1783 = vdwg.mxu0
      %v1785 = vsel %vm1284, %v1576, 0
      %v1788 = vsel %vm1284, %v1581, 0
      %v1791 = vsel %vm1284, %v1676, 0
      %v1794 = vsel %vm1284, %v1681, 0
      %1796 = vmatprep.subr.mxu0 0.0
      %1797 = vmatpush1.xpose.msra.mxu0 0.0
      %1798 = vmatprep.subr.mxu0 0.0
      %1799 = vmatpush1.xpose.msra.mxu0 0.0
      %1800 = vmatprep.subr.mxu0 0.0
      %1801 = vmatpush1.xpose.msra.mxu0 0.0
      %1802 = vmatprep.subr.mxu0 0.0
      %1803 = vmatpush1.xpose.msra.mxu0 0.0
      %1804 = vmatprep.subr.mxu0 0.0
      %1805 = vmatpush1.xpose.msra.mxu0 0.0
      %1806 = vmatprep.subr.mxu0 0.0
      %1807 = vmatpush1.xpose.msra.mxu0 0.0
      %1808 = vmatprep.subr.mxu0 0.0
      %1809 = vmatpush1.xpose.msra.mxu0 0.0
      %1810 = vmatprep.subr.mxu0 0.0
      %1811 = vmatpush1.xpose.msra.mxu0 0.0
      %1812 = vmatprep.subr.mxu0 0.0
      %1813 = vmatpush1.xpose.msra.mxu0 0.0
      %1814 = vmatprep.subr.mxu0 0.0
      %1815 = vmatpush1.xpose.msra.mxu0 0.0
      %1816 = vmatprep.subr.mxu0 0.0
      %1817 = vmatpush1.xpose.msra.mxu0 0.0
      %1818 = vmatprep.subr.mxu0 0.0
      %1819 = vmatpush1.xpose.msra.mxu0 0.0
      %1820 = vmatprep.subr.mxu0 0.0
      %1821 = vmatpush1.xpose.msra.mxu0 0.0
      %1822 = vmatprep.subr.mxu0 0.0
      %1823 = vmatpush1.xpose.msra.mxu0 0.0
      %1824 = vmatprep.subr.mxu0 0.0
      %1825 = vmatpush1.xpose.msra.mxu0 %v1794
      %1826 = vmatprep.subr.mxu0 0.0
      %1827 = vmatpush1.xpose.msra.mxu0 %v1791
      %1828 = vmatprep.subr.mxu0 0.0
      %1829 = vmatpush2.xpose.msra.mxu0 0.0
      %1830 = vmatprep.subr.mxu0 0.0
      %1831 = vmatpush2.xpose.msra.mxu0 0.0
      %1832 = vmatprep.subr.mxu0 0.0
      %1833 = vmatpush2.xpose.msra.mxu0 0.0
      %1834 = vmatprep.subr.mxu0 0.0
      %1835 = vmatpush2.xpose.msra.mxu0 0.0
      %1836 = vmatprep.subr.mxu0 0.0
      %1837 = vmatpush2.xpose.msra.mxu0 0.0
      %1838 = vmatprep.subr.mxu0 0.0
      %1839 = vmatpush2.xpose.msra.mxu0 0.0
      %1840 = vmatprep.subr.mxu0 0.0
      %1841 = vmatpush2.xpose.msra.mxu0 0.0
      %1842 = vmatprep.subr.mxu0 0.0
      %1843 = vmatpush2.xpose.msra.mxu0 0.0
      %1844 = vmatprep.subr.mxu0 0.0
      %1845 = vmatpush2.xpose.msra.mxu0 0.0
      %1846 = vmatprep.subr.mxu0 0.0
      %1847 = vmatpush2.xpose.msra.mxu0 0.0
      %1848 = vmatprep.subr.mxu0 0.0
      %1849 = vmatpush2.xpose.msra.mxu0 0.0
      %1850 = vmatprep.subr.mxu0 0.0
      %1851 = vmatpush2.xpose.msra.mxu0 0.0
      %1852 = vmatprep.subr.mxu0 0.0
      %1853 = vmatpush2.xpose.msra.mxu0 0.0
      %1854 = vmatprep.subr.mxu0 0.0
      %1855 = vmatpush2.xpose.msra.mxu0 0.0
      %1856 = vmatprep.subr.mxu0 0.0
      %1857 = vmatpush2.xpose.msra.mxu0 0.0
      %1858 = vmatprep.subr.mxu0 0.0
      %1859 = vmatpush2.xpose.msra.mxu0 0.0
      %1860 = vmatprep.mubr.f32.mxu0 0.0
      %1861 = vmatmul.mubr.f32.gmra.mxu0 %v1785
      %v1862 = vpop.f32.mrf.mxu0
      %v1863 = vadd.f32 0.0, %v1862
      %v1864 = vpop.f32.mrf.mxu0
      %1865 = vmatprep.mubr.f32.mxu0 0.0
      %1866 = vmatmul.mubr.f32.gmra.mxu0 %v1788
      %v1867 = vpop.f32.mrf.mxu0
      %v1868 = vadd.f32 0.0, %v1867
      %v1869 = vpop.f32.mrf.mxu0
      %1870 = vdwg.mxu0
      %v1871 = vmul.f32 %v1863, 0.17677669
      %v1872 = vmul.f32 %v1868, 0.17677669
      %v1873 = vadd.f32 %v1871, %v988
      %v1874 = vadd.f32 %v1872, %v989
      %v1875 = vsel %vm1376, %v1873, -inf
      %1876 = vmax.xlane.f32.xlu0 %v1875
      %v1877 = vpop.xlane.xlu0 %1876
      %v1878 = vsel %vm1376, %v1874, -inf
      %1879 = vmax.xlane.f32.xlu0 %v1878
      %v1880 = vpop.xlane.xlu0 %1879
      %v1881 = vsub.f32 %v1873, %v1877
      %v1882 = vsub.f32 %v1874, %v1880
      %v1883 = vmul.f32 %v1881, 1.442695
      %v1884 = vpow.pop %v1883
      %v1885 = vmul.f32 %v1882, 1.442695
      %v1886 = vpow.pop %v1885
      %v1887 = vsel %vm1376, %v1884, 0.0
      %1888 = vadd.xlane.f32.xlu0 %v1887
      %v1889 = vpop.xlane.xlu0 %1888
      %v1890 = vsel %vm1376, %v1886, 0.0
      %1891 = vadd.xlane.f32.xlu0 %v1890
      %v1892 = vpop.xlane.xlu0 %1891
      %v1893 = vrcp.pop %v1889
      %v1894 = vrcp.pop %v1892
      %v1895 = vmul.f32 %v1884, %v1893
      %v1896 = vmul.f32 %v1886, %v1894
      %v1898 = vsel %vm1376, %v1895, 0
      %v1901 = vsel %vm1376, %v1896, 0
      %1903 = vmatprep.subr.mxu0 0.0
      %1904 = vmatpush1.msra.mxu0 0.0
      %1905 = vmatprep.subr.mxu0 0.0
      %1906 = vmatpush1.msra.mxu0 0.0
      %1907 = vmatprep.subr.mxu0 0.0
      %1908 = vmatpush1.msra.mxu0 0.0
      %1909 = vmatprep.subr.mxu0 0.0
      %1910 = vmatpush1.msra.mxu0 0.0
      %1911 = vmatprep.subr.mxu0 0.0
      %1912 = vmatpush1.msra.mxu0 0.0
      %1913 = vmatprep.subr.mxu0 0.0
      %1914 = vmatpush1.msra.mxu0 0.0
      %1915 = vmatprep.subr.mxu0 0.0
      %1916 = vmatpush1.msra.mxu0 0.0
      %1917 = vmatprep.subr.mxu0 0.0
      %1918 = vmatpush1.msra.mxu0 0.0
      %1919 = vmatprep.subr.mxu0 0.0
      %1920 = vmatpush1.msra.mxu0 0.0
      %1921 = vmatprep.subr.mxu0 0.0
      %1922 = vmatpush1.msra.mxu0 0.0
      %1923 = vmatprep.subr.mxu0 0.0
      %1924 = vmatpush1.msra.mxu0 0.0
      %1925 = vmatprep.subr.mxu0 0.0
      %1926 = vmatpush1.msra.mxu0 0.0
      %1927 = vmatprep.subr.mxu0 0.0
      %1928 = vmatpush1.msra.mxu0 0.0
      %1929 = vmatprep.subr.mxu0 0.0
      %1930 = vmatpush1.msra.mxu0 0.0
      %1931 = vmatprep.subr.mxu0 0.0
      %1932 = vmatpush1.msra.mxu0 %v1781
      %1933 = vmatprep.subr.mxu0 0.0
      %1934 = vmatpush1.msra.mxu0 %v1776
      %1935 = vmatprep.subr.mxu0 0.0
      %1936 = vmatpush2.msra.mxu0 0.0
      %1937 = vmatprep.subr.mxu0 0.0
      %1938 = vmatpush2.msra.mxu0 0.0
      %1939 = vmatprep.subr.mxu0 0.0
      %1940 = vmatpush2.msra.mxu0 0.0
      %1941 = vmatprep.subr.mxu0 0.0
      %1942 = vmatpush2.msra.mxu0 0.0
      %1943 = vmatprep.subr.mxu0 0.0
      %1944 = vmatpush2.msra.mxu0 0.0
      %1945 = vmatprep.subr.mxu0 0.0
      %1946 = vmatpush2.msra.mxu0 0.0
      %1947 = vmatprep.subr.mxu0 0.0
      %1948 = vmatpush2.msra.mxu0 0.0
      %1949 = vmatprep.subr.mxu0 0.0
      %1950 = vmatpush2.msra.mxu0 0.0
      %1951 = vmatprep.subr.mxu0 0.0
      %1952 = vmatpush2.msra.mxu0 0.0
      %1953 = vmatprep.subr.mxu0 0.0
      %1954 = vmatpush2.msra.mxu0 0.0
      %1955 = vmatprep.subr.mxu0 0.0
      %1956 = vmatpush2.msra.mxu0 0.0
      %1957 = vmatprep.subr.mxu0 0.0
      %1958 = vmatpush2.msra.mxu0 0.0
      %1959 = vmatprep.subr.mxu0 0.0
      %1960 = vmatpush2.msra.mxu0 0.0
      %1961 = vmatprep.subr.mxu0 0.0
      %1962 = vmatpush2.msra.mxu0 0.0
      %1963 = vmatprep.subr.mxu0 0.0
      %1964 = vmatpush2.msra.mxu0 0.0
      %1965 = vmatprep.subr.mxu0 0.0
      %1966 = vmatpush2.msra.mxu0 0.0
      %1967 = vmatprep.mubr.f32.mxu0 0.0
      %1968 = vmatmul.mubr.f32.gmra.mxu0 %v1898
      %v1969 = vpop.f32.mrf.mxu0
      %v1970 = vadd.f32 0.0, %v1969
      %v1971 = vpop.f32.mrf.mxu0
      %1972 = vmatprep.mubr.f32.mxu0 0.0
      %1973 = vmatmul.mubr.f32.gmra.mxu0 %v1901
      %v1974 = vpop.f32.mrf.mxu0
      %v1975 = vadd.f32 0.0, %v1974
      %v1976 = vpop.f32.mrf.mxu0
      %1977 = vdwg.mxu0
      %s1978 = scalar_lea.vmem %s898, 32
      %v1979 = vld [vmem:[%s1978] sm:$0xff]
      %v1980 = vld [vmem:[%s1978 + $0x8] sm:$0xff]
      %v1981 = vld [vmem:[%s1978 + $0x10] sm:$0xff]
      %v1982 = vld [vmem:[%s1978 + $0x18] sm:$0xff]
      %v1984 = vsel %vm1284, %v1970, 0
      %v1987 = vsel %vm1284, %v1975, 0
      %1989 = vmatprep.subr.mxu0 0.0
      %1990 = vmatpush1.msra.mxu0 0.0
      %1991 = vmatprep.subr.mxu0 0.0
      %1992 = vmatpush1.msra.mxu0 0.0
      %1993 = vmatprep.subr.mxu0 0.0
      %1994 = vmatpush1.msra.mxu0 0.0
      %1995 = vmatprep.subr.mxu0 0.0
      %1996 = vmatpush1.msra.mxu0 0.0
      %1997 = vmatprep.subr.mxu0 0.0
      %1998 = vmatpush1.msra.mxu0 0.0
      %1999 = vmatprep.subr.mxu0 0.0
      %2000 = vmatpush1.msra.mxu0 0.0
      %2001 = vmatprep.subr.mxu0 0.0
      %2002 = vmatpush1.msra.mxu0 0.0
      %2003 = vmatprep.subr.mxu0 0.0
      %2004 = vmatpush1.msra.mxu0 0.0
      %2005 = vmatprep.subr.mxu0 0.0
      %2006 = vmatpush1.msra.mxu0 0.0
      %2007 = vmatprep.subr.mxu0 0.0
      %2008 = vmatpush1.msra.mxu0 0.0
      %2009 = vmatprep.subr.mxu0 0.0
      %2010 = vmatpush1.msra.mxu0 0.0
      %2011 = vmatprep.subr.mxu0 0.0
      %2012 = vmatpush1.msra.mxu0 0.0
      %2013 = vmatprep.subr.mxu0 0.0
      %2014 = vmatpush1.msra.mxu0 %v1982
      %2015 = vmatprep.subr.mxu0 0.0
      %2016 = vmatpush1.msra.mxu0 %v1981
      %2017 = vmatprep.subr.mxu0 0.0
      %2018 = vmatpush1.msra.mxu0 %v1980
      %2019 = vmatprep.subr.mxu0 0.0
      %2020 = vmatpush1.msra.mxu0 %v1979
      %2021 = vmatprep.subr.mxu0 0.0
      %2022 = vmatpush2.msra.mxu0 0.0
      %2023 = vmatprep.subr.mxu0 0.0
      %2024 = vmatpush2.msra.mxu0 0.0
      %2025 = vmatprep.subr.mxu0 0.0
      %2026 = vmatpush2.msra.mxu0 0.0
      %2027 = vmatprep.subr.mxu0 0.0
      %2028 = vmatpush2.msra.mxu0 0.0
      %2029 = vmatprep.subr.mxu0 0.0
      %2030 = vmatpush2.msra.mxu0 0.0
      %2031 = vmatprep.subr.mxu0 0.0
      %2032 = vmatpush2.msra.mxu0 0.0
      %2033 = vmatprep.subr.mxu0 0.0
      %2034 = vmatpush2.msra.mxu0 0.0
      %2035 = vmatprep.subr.mxu0 0.0
      %2036 = vmatpush2.msra.mxu0 0.0
      %2037 = vmatprep.subr.mxu0 0.0
      %2038 = vmatpush2.msra.mxu0 0.0
      %2039 = vmatprep.subr.mxu0 0.0
      %2040 = vmatpush2.msra.mxu0 0.0
      %2041 = vmatprep.subr.mxu0 0.0
      %2042 = vmatpush2.msra.mxu0 0.0
      %2043 = vmatprep.subr.mxu0 0.0
      %2044 = vmatpush2.msra.mxu0 0.0
      %2045 = vmatprep.subr.mxu0 0.0
      %2046 = vmatpush2.msra.mxu0 0.0
      %2047 = vmatprep.subr.mxu0 0.0
      %2048 = vmatpush2.msra.mxu0 0.0
      %2049 = vmatprep.subr.mxu0 0.0
      %2050 = vmatpush2.msra.mxu0 0.0
      %2051 = vmatprep.subr.mxu0 0.0
      %2052 = vmatpush2.msra.mxu0 0.0
      %2053 = vmatprep.mubr.f32.mxu0 0.0
      %2054 = vmatmul.mubr.f32.gmra.mxu0 %v1984
      %v2055 = vpop.f32.mrf.mxu0
      %v2056 = vadd.f32 0.0, %v2055
      %v2057 = vpop.f32.mrf.mxu0
      %2058 = vmatprep.mubr.f32.mxu0 0.0
      %2059 = vmatmul.mubr.f32.gmra.mxu0 %v1987
      %v2060 = vpop.f32.mrf.mxu0
      %v2061 = vadd.f32 0.0, %v2060
      %v2062 = vpop.f32.mrf.mxu0
      %2063 = vdwg.mxu0
      %v2065 = vsel %vm1284, %v1472, 0
      %v2068 = vsel %vm1284, %v1477, 0
      %2070 = vmatprep.subr.mxu0 0.0
      %2071 = vmatpush1.msra.mxu0 0.0
      %2072 = vmatprep.subr.mxu0 0.0
      %2073 = vmatpush1.msra.mxu0 0.0
      %2074 = vmatprep.subr.mxu0 0.0
      %2075 = vmatpush1.msra.mxu0 0.0
      %2076 = vmatprep.subr.mxu0 0.0
      %2077 = vmatpush1.msra.mxu0 0.0
      %2078 = vmatprep.subr.mxu0 0.0
      %2079 = vmatpush1.msra.mxu0 0.0
      %2080 = vmatprep.subr.mxu0 0.0
      %2081 = vmatpush1.msra.mxu0 0.0
      %2082 = vmatprep.subr.mxu0 0.0
      %2083 = vmatpush1.msra.mxu0 0.0
      %2084 = vmatprep.subr.mxu0 0.0
      %2085 = vmatpush1.msra.mxu0 0.0
      %2086 = vmatprep.subr.mxu0 0.0
      %2087 = vmatpush1.msra.mxu0 0.0
      %2088 = vmatprep.subr.mxu0 0.0
      %2089 = vmatpush1.msra.mxu0 0.0
      %2090 = vmatprep.subr.mxu0 0.0
      %2091 = vmatpush1.msra.mxu0 0.0
      %2092 = vmatprep.subr.mxu0 0.0
      %2093 = vmatpush1.msra.mxu0 0.0
      %2094 = vmatprep.subr.mxu0 0.0
      %2095 = vmatpush1.msra.mxu0 %v1483
      %2096 = vmatprep.subr.mxu0 0.0
      %2097 = vmatpush1.msra.mxu0 %v1482
      %2098 = vmatprep.subr.mxu0 0.0
      %2099 = vmatpush1.msra.mxu0 %v1481
      %2100 = vmatprep.subr.mxu0 0.0
      %2101 = vmatpush1.msra.mxu0 %v1480
      %2102 = vmatprep.subr.mxu0 0.0
      %2103 = vmatpush2.msra.mxu0 0.0
      %2104 = vmatprep.subr.mxu0 0.0
      %2105 = vmatpush2.msra.mxu0 0.0
      %2106 = vmatprep.subr.mxu0 0.0
      %2107 = vmatpush2.msra.mxu0 0.0
      %2108 = vmatprep.subr.mxu0 0.0
      %2109 = vmatpush2.msra.mxu0 0.0
      %2110 = vmatprep.subr.mxu0 0.0
      %2111 = vmatpush2.msra.mxu0 0.0
      %2112 = vmatprep.subr.mxu0 0.0
      %2113 = vmatpush2.msra.mxu0 0.0
      %2114 = vmatprep.subr.mxu0 0.0
      %2115 = vmatpush2.msra.mxu0 0.0
      %2116 = vmatprep.subr.mxu0 0.0
      %2117 = vmatpush2.msra.mxu0 0.0
      %2118 = vmatprep.subr.mxu0 0.0
      %2119 = vmatpush2.msra.mxu0 0.0
      %2120 = vmatprep.subr.mxu0 0.0
      %2121 = vmatpush2.msra.mxu0 0.0
      %2122 = vmatprep.subr.mxu0 0.0
      %2123 = vmatpush2.msra.mxu0 0.0
      %2124 = vmatprep.subr.mxu0 0.0
      %2125 = vmatpush2.msra.mxu0 0.0
      %2126 = vmatprep.subr.mxu0 0.0
      %2127 = vmatpush2.msra.mxu0 0.0
      %2128 = vmatprep.subr.mxu0 0.0
      %2129 = vmatpush2.msra.mxu0 0.0
      %2130 = vmatprep.subr.mxu0 0.0
      %2131 = vmatpush2.msra.mxu0 0.0
      %2132 = vmatprep.subr.mxu0 0.0
      %2133 = vmatpush2.msra.mxu0 0.0
      %2134 = vmatprep.mubr.f32.mxu0 0.0
      %2135 = vmatmul.mubr.f32.gmra.mxu0 %v2065
      %v2136 = vpop.f32.mrf.mxu0
      %v2137 = vadd.f32 %v2056, %v2136
      %v2138 = vpop.f32.mrf.mxu0
      %2139 = vmatprep.mubr.f32.mxu0 0.0
      %2140 = vmatmul.mubr.f32.gmra.mxu0 %v2068
      %v2141 = vpop.f32.mrf.mxu0
      %v2142 = vadd.f32 %v2061, %v2141
      %v2143 = vpop.f32.mrf.mxu0
      %2144 = vdwg.mxu0
      %s2145 = scalar_lea.vmem %s871, 256
      %v2146 = vld [vmem:[%s2145] sm:$0xff]
      %v2147 = vld [vmem:[%s2145 + $0x8] sm:$0xff]
      %v2148 = vld [vmem:[%s2145 + $0x10] sm:$0xff]
      %v2149 = vld [vmem:[%s2145 + $0x18] sm:$0xff]
      %v2150 = vld [vmem:[%s2145 + $0x20] sm:$0xff]
      %v2151 = vld [vmem:[%s2145 + $0x28] sm:$0xff]
      %v2152 = vld [vmem:[%s2145 + $0x30] sm:$0xff]
      %v2153 = vld [vmem:[%s2145 + $0x38] sm:$0xff]
      %v2154 = vld [vmem:[%s2145 + $0x40] sm:$0xff]
      %v2155 = vld [vmem:[%s2145 + $0x48] sm:$0xff]
      %v2156 = vld [vmem:[%s2145 + $0x50] sm:$0xff]
      %v2157 = vld [vmem:[%s2145 + $0x58] sm:$0xff]
      %v2158 = vld [vmem:[%s2145 + $0x60] sm:$0xff]
      %v2159 = vld [vmem:[%s2145 + $0x68] sm:$0xff]
      %v2160 = vld [vmem:[%s2145 + $0x70] sm:$0xff]
      %v2161 = vld [vmem:[%s2145 + $0x78] sm:$0xff]
      %s2162 = scalar_lea.vmem %s875, 2
      %v2163 = vld [vmem:[%s2162] sm:$0x1]
      %v2165 = vlaneseq
      %v2166 = vshrl.u32 %v2165, 7
      %v2167 = vsub.s32 0, %v2166
      %v2168 = vrot.slane %v2163, %v2167
      %2170 = vmatprep.subr.mxu0 0.0
      %2171 = vmatpush1.msra.mxu0 %v2161
      %2172 = vmatprep.subr.mxu0 0.0
      %2173 = vmatpush1.msra.mxu0 %v2160
      %2174 = vmatprep.subr.mxu0 0.0
      %2175 = vmatpush1.msra.mxu0 %v2159
      %2176 = vmatprep.subr.mxu0 0.0
      %2177 = vmatpush1.msra.mxu0 %v2158
      %2178 = vmatprep.subr.mxu0 0.0
      %2179 = vmatpush1.msra.mxu0 %v2157
      %2180 = vmatprep.subr.mxu0 0.0
      %2181 = vmatpush1.msra.mxu0 %v2156
      %2182 = vmatprep.subr.mxu0 0.0
      %2183 = vmatpush1.msra.mxu0 %v2155
      %2184 = vmatprep.subr.mxu0 0.0
      %2185 = vmatpush1.msra.mxu0 %v2154
      %2186 = vmatprep.subr.mxu0 0.0
      %2187 = vmatpush1.msra.mxu0 %v2153
      %2188 = vmatprep.subr.mxu0 0.0
      %2189 = vmatpush1.msra.mxu0 %v2152
      %2190 = vmatprep.subr.mxu0 0.0
      %2191 = vmatpush1.msra.mxu0 %v2151
      %2192 = vmatprep.subr.mxu0 0.0
      %2193 = vmatpush1.msra.mxu0 %v2150
      %2194 = vmatprep.subr.mxu0 0.0
      %2195 = vmatpush1.msra.mxu0 %v2149
      %2196 = vmatprep.subr.mxu0 0.0
      %2197 = vmatpush1.msra.mxu0 %v2148
      %2198 = vmatprep.subr.mxu0 0.0
      %2199 = vmatpush1.msra.mxu0 %v2147
      %2200 = vmatprep.subr.mxu0 0.0
      %2201 = vmatpush1.msra.mxu0 %v2146
      %2202 = vmatprep.subr.mxu0 0.0
      %2203 = vmatpush2.msra.mxu0 0.0
      %2204 = vmatprep.subr.mxu0 0.0
      %2205 = vmatpush2.msra.mxu0 0.0
      %2206 = vmatprep.subr.mxu0 0.0
      %2207 = vmatpush2.msra.mxu0 0.0
      %2208 = vmatprep.subr.mxu0 0.0
      %2209 = vmatpush2.msra.mxu0 0.0
      %2210 = vmatprep.subr.mxu0 0.0
      %2211 = vmatpush2.msra.mxu0 0.0
      %2212 = vmatprep.subr.mxu0 0.0
      %2213 = vmatpush2.msra.mxu0 0.0
      %2214 = vmatprep.subr.mxu0 0.0
      %2215 = vmatpush2.msra.mxu0 0.0
      %2216 = vmatprep.subr.mxu0 0.0
      %2217 = vmatpush2.msra.mxu0 0.0
      %2218 = vmatprep.subr.mxu0 0.0
      %2219 = vmatpush2.msra.mxu0 0.0
      %2220 = vmatprep.subr.mxu0 0.0
      %2221 = vmatpush2.msra.mxu0 0.0
      %2222 = vmatprep.subr.mxu0 0.0
      %2223 = vmatpush2.msra.mxu0 0.0
      %2224 = vmatprep.subr.mxu0 0.0
      %2225 = vmatpush2.msra.mxu0 0.0
      %2226 = vmatprep.subr.mxu0 0.0
      %2227 = vmatpush2.msra.mxu0 0.0
      %2228 = vmatprep.subr.mxu0 0.0
      %2229 = vmatpush2.msra.mxu0 0.0
      %2230 = vmatprep.subr.mxu0 0.0
      %2231 = vmatpush2.msra.mxu0 0.0
      %2232 = vmatprep.subr.mxu0 0.0
      %2233 = vmatpush2.msra.mxu0 0.0
      %2234 = vmatprep.mubr.f32.mxu0 0.0
      %2235 = vmatmul.mubr.f32.gmra.mxu0 %v986
      %v2236 = vpop.f32.mrf.mxu0
      %v2237 = vadd.f32 %v2168, %v2236
      %v2238 = vpop.f32.mrf.mxu0
      %2239 = vmatprep.mubr.f32.mxu0 0.0
      %2240 = vmatmul.mubr.f32.gmra.mxu0 %v987
      %v2241 = vpop.f32.mrf.mxu0
      %v2242 = vadd.f32 %v2168, %v2241
      %v2243 = vpop.f32.mrf.mxu0
      %2244 = vdwg.mxu0
      %s2245 = scalar_lea.vmem %s880, 256
      %v2246 = vld [vmem:[%s2245] sm:$0xff]
      %v2247 = vld [vmem:[%s2245 + $0x8] sm:$0xff]
      %v2248 = vld [vmem:[%s2245 + $0x10] sm:$0xff]
      %v2249 = vld [vmem:[%s2245 + $0x18] sm:$0xff]
      %v2250 = vld [vmem:[%s2245 + $0x20] sm:$0xff]
      %v2251 = vld [vmem:[%s2245 + $0x28] sm:$0xff]
      %v2252 = vld [vmem:[%s2245 + $0x30] sm:$0xff]
      %v2253 = vld [vmem:[%s2245 + $0x38] sm:$0xff]
      %v2254 = vld [vmem:[%s2245 + $0x40] sm:$0xff]
      %v2255 = vld [vmem:[%s2245 + $0x48] sm:$0xff]
      %v2256 = vld [vmem:[%s2245 + $0x50] sm:$0xff]
      %v2257 = vld [vmem:[%s2245 + $0x58] sm:$0xff]
      %v2258 = vld [vmem:[%s2245 + $0x60] sm:$0xff]
      %v2259 = vld [vmem:[%s2245 + $0x68] sm:$0xff]
      %v2260 = vld [vmem:[%s2245 + $0x70] sm:$0xff]
      %v2261 = vld [vmem:[%s2245 + $0x78] sm:$0xff]
      %s2262 = scalar_lea.vmem %s884, 2
      %v2263 = vld [vmem:[%s2262] sm:$0x1]
      %v2265 = vlaneseq
      %v2266 = vshrl.u32 %v2265, 7
      %v2267 = vsub.s32 0, %v2266
      %v2268 = vrot.slane %v2263, %v2267
      %2270 = vmatprep.subr.mxu0 0.0
      %2271 = vmatpush1.msra.mxu0 %v2261
      %2272 = vmatprep.subr.mxu0 0.0
      %2273 = vmatpush1.msra.mxu0 %v2260
      %2274 = vmatprep.subr.mxu0 0.0
      %2275 = vmatpush1.msra.mxu0 %v2259
      %2276 = vmatprep.subr.mxu0 0.0
      %2277 = vmatpush1.msra.mxu0 %v2258
      %2278 = vmatprep.subr.mxu0 0.0
      %2279 = vmatpush1.msra.mxu0 %v2257
      %2280 = vmatprep.subr.mxu0 0.0
      %2281 = vmatpush1.msra.mxu0 %v2256
      %2282 = vmatprep.subr.mxu0 0.0
      %2283 = vmatpush1.msra.mxu0 %v2255
      %2284 = vmatprep.subr.mxu0 0.0
      %2285 = vmatpush1.msra.mxu0 %v2254
      %2286 = vmatprep.subr.mxu0 0.0
      %2287 = vmatpush1.msra.mxu0 %v2253
      %2288 = vmatprep.subr.mxu0 0.0
      %2289 = vmatpush1.msra.mxu0 %v2252
      %2290 = vmatprep.subr.mxu0 0.0
      %2291 = vmatpush1.msra.mxu0 %v2251
      %2292 = vmatprep.subr.mxu0 0.0
      %2293 = vmatpush1.msra.mxu0 %v2250
      %2294 = vmatprep.subr.mxu0 0.0
      %2295 = vmatpush1.msra.mxu0 %v2249
      %2296 = vmatprep.subr.mxu0 0.0
      %2297 = vmatpush1.msra.mxu0 %v2248
      %2298 = vmatprep.subr.mxu0 0.0
      %2299 = vmatpush1.msra.mxu0 %v2247
      %2300 = vmatprep.subr.mxu0 0.0
      %2301 = vmatpush1.msra.mxu0 %v2246
      %2302 = vmatprep.subr.mxu0 0.0
      %2303 = vmatpush2.msra.mxu0 0.0
      %2304 = vmatprep.subr.mxu0 0.0
      %2305 = vmatpush2.msra.mxu0 0.0
      %2306 = vmatprep.subr.mxu0 0.0
      %2307 = vmatpush2.msra.mxu0 0.0
      %2308 = vmatprep.subr.mxu0 0.0
      %2309 = vmatpush2.msra.mxu0 0.0
      %2310 = vmatprep.subr.mxu0 0.0
      %2311 = vmatpush2.msra.mxu0 0.0
      %2312 = vmatprep.subr.mxu0 0.0
      %2313 = vmatpush2.msra.mxu0 0.0
      %2314 = vmatprep.subr.mxu0 0.0
      %2315 = vmatpush2.msra.mxu0 0.0
      %2316 = vmatprep.subr.mxu0 0.0
      %2317 = vmatpush2.msra.mxu0 0.0
      %2318 = vmatprep.subr.mxu0 0.0
      %2319 = vmatpush2.msra.mxu0 0.0
      %2320 = vmatprep.subr.mxu0 0.0
      %2321 = vmatpush2.msra.mxu0 0.0
      %2322 = vmatprep.subr.mxu0 0.0
      %2323 = vmatpush2.msra.mxu0 0.0
      %2324 = vmatprep.subr.mxu0 0.0
      %2325 = vmatpush2.msra.mxu0 0.0
      %2326 = vmatprep.subr.mxu0 0.0
      %2327 = vmatpush2.msra.mxu0 0.0
      %2328 = vmatprep.subr.mxu0 0.0
      %2329 = vmatpush2.msra.mxu0 0.0
      %2330 = vmatprep.subr.mxu0 0.0
      %2331 = vmatpush2.msra.mxu0 0.0
      %2332 = vmatprep.subr.mxu0 0.0
      %2333 = vmatpush2.msra.mxu0 0.0
      %2334 = vmatprep.mubr.f32.mxu0 0.0
      %2335 = vmatmul.mubr.f32.gmra.mxu0 %v986
      %v2336 = vpop.f32.mrf.mxu0
      %v2337 = vadd.f32 %v2268, %v2336
      %v2338 = vpop.f32.mrf.mxu0
      %2339 = vmatprep.mubr.f32.mxu0 0.0
      %2340 = vmatmul.mubr.f32.gmra.mxu0 %v987
      %v2341 = vpop.f32.mrf.mxu0
      %v2342 = vadd.f32 %v2268, %v2341
      %v2343 = vpop.f32.mrf.mxu0
      %2344 = vdwg.mxu0
      %s2345 = scalar_lea.vmem %s889, 256
      %v2346 = vld [vmem:[%s2345] sm:$0xff]
      %v2347 = vld [vmem:[%s2345 + $0x8] sm:$0xff]
      %v2348 = vld [vmem:[%s2345 + $0x10] sm:$0xff]
      %v2349 = vld [vmem:[%s2345 + $0x18] sm:$0xff]
      %v2350 = vld [vmem:[%s2345 + $0x20] sm:$0xff]
      %v2351 = vld [vmem:[%s2345 + $0x28] sm:$0xff]
      %v2352 = vld [vmem:[%s2345 + $0x30] sm:$0xff]
      %v2353 = vld [vmem:[%s2345 + $0x38] sm:$0xff]
      %v2354 = vld [vmem:[%s2345 + $0x40] sm:$0xff]
      %v2355 = vld [vmem:[%s2345 + $0x48] sm:$0xff]
      %v2356 = vld [vmem:[%s2345 + $0x50] sm:$0xff]
      %v2357 = vld [vmem:[%s2345 + $0x58] sm:$0xff]
      %v2358 = vld [vmem:[%s2345 + $0x60] sm:$0xff]
      %v2359 = vld [vmem:[%s2345 + $0x68] sm:$0xff]
      %v2360 = vld [vmem:[%s2345 + $0x70] sm:$0xff]
      %v2361 = vld [vmem:[%s2345 + $0x78] sm:$0xff]
      %s2362 = scalar_lea.vmem %s893, 2
      %v2363 = vld [vmem:[%s2362] sm:$0x1]
      %v2365 = vlaneseq
      %v2366 = vshrl.u32 %v2365, 7
      %v2367 = vsub.s32 0, %v2366
      %v2368 = vrot.slane %v2363, %v2367
      %2370 = vmatprep.subr.mxu0 0.0
      %2371 = vmatpush1.msra.mxu0 %v2361
      %2372 = vmatprep.subr.mxu0 0.0
      %2373 = vmatpush1.msra.mxu0 %v2360
      %2374 = vmatprep.subr.mxu0 0.0
      %2375 = vmatpush1.msra.mxu0 %v2359
      %2376 = vmatprep.subr.mxu0 0.0
      %2377 = vmatpush1.msra.mxu0 %v2358
      %2378 = vmatprep.subr.mxu0 0.0
      %2379 = vmatpush1.msra.mxu0 %v2357
      %2380 = vmatprep.subr.mxu0 0.0
      %2381 = vmatpush1.msra.mxu0 %v2356
      %2382 = vmatprep.subr.mxu0 0.0
      %2383 = vmatpush1.msra.mxu0 %v2355
      %2384 = vmatprep.subr.mxu0 0.0
      %2385 = vmatpush1.msra.mxu0 %v2354
      %2386 = vmatprep.subr.mxu0 0.0
      %2387 = vmatpush1.msra.mxu0 %v2353
      %2388 = vmatprep.subr.mxu0 0.0
      %2389 = vmatpush1.msra.mxu0 %v2352
      %2390 = vmatprep.subr.mxu0 0.0
      %2391 = vmatpush1.msra.mxu0 %v2351
      %2392 = vmatprep.subr.mxu0 0.0
      %2393 = vmatpush1.msra.mxu0 %v2350
      %2394 = vmatprep.subr.mxu0 0.0
      %2395 = vmatpush1.msra.mxu0 %v2349
      %2396 = vmatprep.subr.mxu0 0.0
      %2397 = vmatpush1.msra.mxu0 %v2348
      %2398 = vmatprep.subr.mxu0 0.0
      %2399 = vmatpush1.msra.mxu0 %v2347
      %2400 = vmatprep.subr.mxu0 0.0
      %2401 = vmatpush1.msra.mxu0 %v2346
      %2402 = vmatprep.subr.mxu0 0.0
      %2403 = vmatpush2.msra.mxu0 0.0
      %2404 = vmatprep.subr.mxu0 0.0
      %2405 = vmatpush2.msra.mxu0 0.0
      %2406 = vmatprep.subr.mxu0 0.0
      %2407 = vmatpush2.msra.mxu0 0.0
      %2408 = vmatprep.subr.mxu0 0.0
      %2409 = vmatpush2.msra.mxu0 0.0
      %2410 = vmatprep.subr.mxu0 0.0
      %2411 = vmatpush2.msra.mxu0 0.0
      %2412 = vmatprep.subr.mxu0 0.0
      %2413 = vmatpush2.msra.mxu0 0.0
      %2414 = vmatprep.subr.mxu0 0.0
      %2415 = vmatpush2.msra.mxu0 0.0
      %2416 = vmatprep.subr.mxu0 0.0
      %2417 = vmatpush2.msra.mxu0 0.0
      %2418 = vmatprep.subr.mxu0 0.0
      %2419 = vmatpush2.msra.mxu0 0.0
      %2420 = vmatprep.subr.mxu0 0.0
      %2421 = vmatpush2.msra.mxu0 0.0
      %2422 = vmatprep.subr.mxu0 0.0
      %2423 = vmatpush2.msra.mxu0 0.0
      %2424 = vmatprep.subr.mxu0 0.0
      %2425 = vmatpush2.msra.mxu0 0.0
      %2426 = vmatprep.subr.mxu0 0.0
      %2427 = vmatpush2.msra.mxu0 0.0
      %2428 = vmatprep.subr.mxu0 0.0
      %2429 = vmatpush2.msra.mxu0 0.0
      %2430 = vmatprep.subr.mxu0 0.0
      %2431 = vmatpush2.msra.mxu0 0.0
      %2432 = vmatprep.subr.mxu0 0.0
      %2433 = vmatpush2.msra.mxu0 0.0
      %2434 = vmatprep.mubr.f32.mxu0 0.0
      %2435 = vmatmul.mubr.f32.gmra.mxu0 %v986
      %v2436 = vpop.f32.mrf.mxu0
      %v2437 = vadd.f32 %v2368, %v2436
      %v2438 = vpop.f32.mrf.mxu0
      %2439 = vmatprep.mubr.f32.mxu0 0.0
      %2440 = vmatmul.mubr.f32.gmra.mxu0 %v987
      %v2441 = vpop.f32.mrf.mxu0
      %v2442 = vadd.f32 %v2368, %v2441
      %v2443 = vpop.f32.mrf.mxu0
      %2444 = vdwg.mxu0
      %v2446 = vsel %vm1284, %v2237, 0
      %v2449 = vsel %vm1284, %v2242, 0
      %v2452 = vsel %vm1284, %v2337, 0
      %v2455 = vsel %vm1284, %v2342, 0
      %2457 = vmatprep.subr.mxu0 0.0
      %2458 = vmatpush1.xpose.msra.mxu0 0.0
      %2459 = vmatprep.subr.mxu0 0.0
      %2460 = vmatpush1.xpose.msra.mxu0 0.0
      %2461 = vmatprep.subr.mxu0 0.0
      %2462 = vmatpush1.xpose.msra.mxu0 0.0
      %2463 = vmatprep.subr.mxu0 0.0
      %2464 = vmatpush1.xpose.msra.mxu0 0.0
      %2465 = vmatprep.subr.mxu0 0.0
      %2466 = vmatpush1.xpose.msra.mxu0 0.0
      %2467 = vmatprep.subr.mxu0 0.0
      %2468 = vmatpush1.xpose.msra.mxu0 0.0
      %2469 = vmatprep.subr.mxu0 0.0
      %2470 = vmatpush1.xpose.msra.mxu0 0.0
      %2471 = vmatprep.subr.mxu0 0.0
      %2472 = vmatpush1.xpose.msra.mxu0 0.0
      %2473 = vmatprep.subr.mxu0 0.0
      %2474 = vmatpush1.xpose.msra.mxu0 0.0
      %2475 = vmatprep.subr.mxu0 0.0
      %2476 = vmatpush1.xpose.msra.mxu0 0.0
      %2477 = vmatprep.subr.mxu0 0.0
      %2478 = vmatpush1.xpose.msra.mxu0 0.0
      %2479 = vmatprep.subr.mxu0 0.0
      %2480 = vmatpush1.xpose.msra.mxu0 0.0
      %2481 = vmatprep.subr.mxu0 0.0
      %2482 = vmatpush1.xpose.msra.mxu0 0.0
      %2483 = vmatprep.subr.mxu0 0.0
      %2484 = vmatpush1.xpose.msra.mxu0 0.0
      %2485 = vmatprep.subr.mxu0 0.0
      %2486 = vmatpush1.xpose.msra.mxu0 %v2455
      %2487 = vmatprep.subr.mxu0 0.0
      %2488 = vmatpush1.xpose.msra.mxu0 %v2452
      %2489 = vmatprep.subr.mxu0 0.0
      %2490 = vmatpush2.xpose.msra.mxu0 0.0
      %2491 = vmatprep.subr.mxu0 0.0
      %2492 = vmatpush2.xpose.msra.mxu0 0.0
      %2493 = vmatprep.subr.mxu0 0.0
      %2494 = vmatpush2.xpose.msra.mxu0 0.0
      %2495 = vmatprep.subr.mxu0 0.0
      %2496 = vmatpush2.xpose.msra.mxu0 0.0
      %2497 = vmatprep.subr.mxu0 0.0
      %2498 = vmatpush2.xpose.msra.mxu0 0.0
      %2499 = vmatprep.subr.mxu0 0.0
      %2500 = vmatpush2.xpose.msra.mxu0 0.0
      %2501 = vmatprep.subr.mxu0 0.0
      %2502 = vmatpush2.xpose.msra.mxu0 0.0
      %2503 = vmatprep.subr.mxu0 0.0
      %2504 = vmatpush2.xpose.msra.mxu0 0.0
      %2505 = vmatprep.subr.mxu0 0.0
      %2506 = vmatpush2.xpose.msra.mxu0 0.0
      %2507 = vmatprep.subr.mxu0 0.0
      %2508 = vmatpush2.xpose.msra.mxu0 0.0
      %2509 = vmatprep.subr.mxu0 0.0
      %2510 = vmatpush2.xpose.msra.mxu0 0.0
      %2511 = vmatprep.subr.mxu0 0.0
      %2512 = vmatpush2.xpose.msra.mxu0 0.0
      %2513 = vmatprep.subr.mxu0 0.0
      %2514 = vmatpush2.xpose.msra.mxu0 0.0
      %2515 = vmatprep.subr.mxu0 0.0
      %2516 = vmatpush2.xpose.msra.mxu0 0.0
      %2517 = vmatprep.subr.mxu0 0.0
      %2518 = vmatpush2.xpose.msra.mxu0 0.0
      %2519 = vmatprep.subr.mxu0 0.0
      %2520 = vmatpush2.xpose.msra.mxu0 0.0
      %2521 = vmatprep.mubr.f32.mxu0 0.0
      %2522 = vmatmul.mubr.f32.gmra.mxu0 %v2446
      %v2523 = vpop.f32.mrf.mxu0
      %v2524 = vadd.f32 0.0, %v2523
      %v2525 = vpop.f32.mrf.mxu0
      %2526 = vmatprep.mubr.f32.mxu0 0.0
      %2527 = vmatmul.mubr.f32.gmra.mxu0 %v2449
      %v2528 = vpop.f32.mrf.mxu0
      %v2529 = vadd.f32 0.0, %v2528
      %v2530 = vpop.f32.mrf.mxu0
      %2531 = vdwg.mxu0
      %v2532 = vmul.f32 %v2524, 0.17677669
      %v2533 = vmul.f32 %v2529, 0.17677669
      %v2534 = vadd.f32 %v2532, %v988
      %v2535 = vadd.f32 %v2533, %v989
      %v2536 = vsel %vm1376, %v2534, -inf
      %2537 = vmax.xlane.f32.xlu0 %v2536
      %v2538 = vpop.xlane.xlu0 %2537
      %v2539 = vsel %vm1376, %v2535, -inf
      %2540 = vmax.xlane.f32.xlu0 %v2539
      %v2541 = vpop.xlane.xlu0 %2540
      %v2542 = vsub.f32 %v2534, %v2538
      %v2543 = vsub.f32 %v2535, %v2541
      %v2544 = vmul.f32 %v2542, 1.442695
      %v2545 = vpow.pop %v2544
      %v2546 = vmul.f32 %v2543, 1.442695
      %v2547 = vpow.pop %v2546
      %v2548 = vsel %vm1376, %v2545, 0.0
      %2549 = vadd.xlane.f32.xlu0 %v2548
      %v2550 = vpop.xlane.xlu0 %2549
      %v2551 = vsel %vm1376, %v2547, 0.0
      %2552 = vadd.xlane.f32.xlu0 %v2551
      %v2553 = vpop.xlane.xlu0 %2552
      %v2554 = vrcp.pop %v2550
      %v2555 = vrcp.pop %v2553
      %v2556 = vmul.f32 %v2545, %v2554
      %v2557 = vmul.f32 %v2547, %v2555
      %v2559 = vsel %vm1376, %v2556, 0
      %v2562 = vsel %vm1376, %v2557, 0
      %2564 = vmatprep.subr.mxu0 0.0
      %2565 = vmatpush1.msra.mxu0 0.0
      %2566 = vmatprep.subr.mxu0 0.0
      %2567 = vmatpush1.msra.mxu0 0.0
      %2568 = vmatprep.subr.mxu0 0.0
      %2569 = vmatpush1.msra.mxu0 0.0
      %2570 = vmatprep.subr.mxu0 0.0
      %2571 = vmatpush1.msra.mxu0 0.0
      %2572 = vmatprep.subr.mxu0 0.0
      %2573 = vmatpush1.msra.mxu0 0.0
      %2574 = vmatprep.subr.mxu0 0.0
      %2575 = vmatpush1.msra.mxu0 0.0
      %2576 = vmatprep.subr.mxu0 0.0
      %2577 = vmatpush1.msra.mxu0 0.0
      %2578 = vmatprep.subr.mxu0 0.0
      %2579 = vmatpush1.msra.mxu0 0.0
      %2580 = vmatprep.subr.mxu0 0.0
      %2581 = vmatpush1.msra.mxu0 0.0
      %2582 = vmatprep.subr.mxu0 0.0
      %2583 = vmatpush1.msra.mxu0 0.0
      %2584 = vmatprep.subr.mxu0 0.0
      %2585 = vmatpush1.msra.mxu0 0.0
      %2586 = vmatprep.subr.mxu0 0.0
      %2587 = vmatpush1.msra.mxu0 0.0
      %2588 = vmatprep.subr.mxu0 0.0
      %2589 = vmatpush1.msra.mxu0 0.0
      %2590 = vmatprep.subr.mxu0 0.0
      %2591 = vmatpush1.msra.mxu0 0.0
      %2592 = vmatprep.subr.mxu0 0.0
      %2593 = vmatpush1.msra.mxu0 %v2442
      %2594 = vmatprep.subr.mxu0 0.0
      %2595 = vmatpush1.msra.mxu0 %v2437
      %2596 = vmatprep.subr.mxu0 0.0
      %2597 = vmatpush2.msra.mxu0 0.0
      %2598 = vmatprep.subr.mxu0 0.0
      %2599 = vmatpush2.msra.mxu0 0.0
      %2600 = vmatprep.subr.mxu0 0.0
      %2601 = vmatpush2.msra.mxu0 0.0
      %2602 = vmatprep.subr.mxu0 0.0
      %2603 = vmatpush2.msra.mxu0 0.0
      %2604 = vmatprep.subr.mxu0 0.0
      %2605 = vmatpush2.msra.mxu0 0.0
      %2606 = vmatprep.subr.mxu0 0.0
      %2607 = vmatpush2.msra.mxu0 0.0
      %2608 = vmatprep.subr.mxu0 0.0
      %2609 = vmatpush2.msra.mxu0 0.0
      %2610 = vmatprep.subr.mxu0 0.0
      %2611 = vmatpush2.msra.mxu0 0.0
      %2612 = vmatprep.subr.mxu0 0.0
      %2613 = vmatpush2.msra.mxu0 0.0
      %2614 = vmatprep.subr.mxu0 0.0
      %2615 = vmatpush2.msra.mxu0 0.0
      %2616 = vmatprep.subr.mxu0 0.0
      %2617 = vmatpush2.msra.mxu0 0.0
      %2618 = vmatprep.subr.mxu0 0.0
      %2619 = vmatpush2.msra.mxu0 0.0
      %2620 = vmatprep.subr.mxu0 0.0
      %2621 = vmatpush2.msra.mxu0 0.0
      %2622 = vmatprep.subr.mxu0 0.0
      %2623 = vmatpush2.msra.mxu0 0.0
      %2624 = vmatprep.subr.mxu0 0.0
      %2625 = vmatpush2.msra.mxu0 0.0
      %2626 = vmatprep.subr.mxu0 0.0
      %2627 = vmatpush2.msra.mxu0 0.0
      %2628 = vmatprep.mubr.f32.mxu0 0.0
      %2629 = vmatmul.mubr.f32.gmra.mxu0 %v2559
      %v2630 = vpop.f32.mrf.mxu0
      %v2631 = vadd.f32 0.0, %v2630
      %v2632 = vpop.f32.mrf.mxu0
      %2633 = vmatprep.mubr.f32.mxu0 0.0
      %2634 = vmatmul.mubr.f32.gmra.mxu0 %v2562
      %v2635 = vpop.f32.mrf.mxu0
      %v2636 = vadd.f32 0.0, %v2635
      %v2637 = vpop.f32.mrf.mxu0
      %2638 = vdwg.mxu0
      %s2639 = scalar_lea.vmem %s898, 64
      %v2640 = vld [vmem:[%s2639] sm:$0xff]
      %v2641 = vld [vmem:[%s2639 + $0x8] sm:$0xff]
      %v2642 = vld [vmem:[%s2639 + $0x10] sm:$0xff]
      %v2643 = vld [vmem:[%s2639 + $0x18] sm:$0xff]
      %v2645 = vsel %vm1284, %v2631, 0
      %v2648 = vsel %vm1284, %v2636, 0
      %2650 = vmatprep.subr.mxu0 0.0
      %2651 = vmatpush1.msra.mxu0 0.0
      %2652 = vmatprep.subr.mxu0 0.0
      %2653 = vmatpush1.msra.mxu0 0.0
      %2654 = vmatprep.subr.mxu0 0.0
      %2655 = vmatpush1.msra.mxu0 0.0
      %2656 = vmatprep.subr.mxu0 0.0
      %2657 = vmatpush1.msra.mxu0 0.0
      %2658 = vmatprep.subr.mxu0 0.0
      %2659 = vmatpush1.msra.mxu0 0.0
      %2660 = vmatprep.subr.mxu0 0.0
      %2661 = vmatpush1.msra.mxu0 0.0
      %2662 = vmatprep.subr.mxu0 0.0
      %2663 = vmatpush1.msra.mxu0 0.0
      %2664 = vmatprep.subr.mxu0 0.0
      %2665 = vmatpush1.msra.mxu0 0.0
      %2666 = vmatprep.subr.mxu0 0.0
      %2667 = vmatpush1.msra.mxu0 0.0
      %2668 = vmatprep.subr.mxu0 0.0
      %2669 = vmatpush1.msra.mxu0 0.0
      %2670 = vmatprep.subr.mxu0 0.0
      %2671 = vmatpush1.msra.mxu0 0.0
      %2672 = vmatprep.subr.mxu0 0.0
      %2673 = vmatpush1.msra.mxu0 0.0
      %2674 = vmatprep.subr.mxu0 0.0
      %2675 = vmatpush1.msra.mxu0 %v2643
      %2676 = vmatprep.subr.mxu0 0.0
      %2677 = vmatpush1.msra.mxu0 %v2642
      %2678 = vmatprep.subr.mxu0 0.0
      %2679 = vmatpush1.msra.mxu0 %v2641
      %2680 = vmatprep.subr.mxu0 0.0
      %2681 = vmatpush1.msra.mxu0 %v2640
      %2682 = vmatprep.subr.mxu0 0.0
      %2683 = vmatpush2.msra.mxu0 0.0
      %2684 = vmatprep.subr.mxu0 0.0
      %2685 = vmatpush2.msra.mxu0 0.0
      %2686 = vmatprep.subr.mxu0 0.0
      %2687 = vmatpush2.msra.mxu0 0.0
      %2688 = vmatprep.subr.mxu0 0.0
      %2689 = vmatpush2.msra.mxu0 0.0
      %2690 = vmatprep.subr.mxu0 0.0
      %2691 = vmatpush2.msra.mxu0 0.0
      %2692 = vmatprep.subr.mxu0 0.0
      %2693 = vmatpush2.msra.mxu0 0.0
      %2694 = vmatprep.subr.mxu0 0.0
      %2695 = vmatpush2.msra.mxu0 0.0
      %2696 = vmatprep.subr.mxu0 0.0
      %2697 = vmatpush2.msra.mxu0 0.0
      %2698 = vmatprep.subr.mxu0 0.0
      %2699 = vmatpush2.msra.mxu0 0.0
      %2700 = vmatprep.subr.mxu0 0.0
      %2701 = vmatpush2.msra.mxu0 0.0
      %2702 = vmatprep.subr.mxu0 0.0
      %2703 = vmatpush2.msra.mxu0 0.0
      %2704 = vmatprep.subr.mxu0 0.0
      %2705 = vmatpush2.msra.mxu0 0.0
      %2706 = vmatprep.subr.mxu0 0.0
      %2707 = vmatpush2.msra.mxu0 0.0
      %2708 = vmatprep.subr.mxu0 0.0
      %2709 = vmatpush2.msra.mxu0 0.0
      %2710 = vmatprep.subr.mxu0 0.0
      %2711 = vmatpush2.msra.mxu0 0.0
      %2712 = vmatprep.subr.mxu0 0.0
      %2713 = vmatpush2.msra.mxu0 0.0
      %2714 = vmatprep.mubr.f32.mxu0 0.0
      %2715 = vmatmul.mubr.f32.gmra.mxu0 %v2645
      %v2716 = vpop.f32.mrf.mxu0
      %v2717 = vadd.f32 0.0, %v2716
      %v2718 = vpop.f32.mrf.mxu0
      %2719 = vmatprep.mubr.f32.mxu0 0.0
      %2720 = vmatmul.mubr.f32.gmra.mxu0 %v2648
      %v2721 = vpop.f32.mrf.mxu0
      %v2722 = vadd.f32 0.0, %v2721
      %v2723 = vpop.f32.mrf.mxu0
      %2724 = vdwg.mxu0
      %v2725 = vadd.f32 %v2137, %v2717
      %v2726 = vadd.f32 %v2142, %v2722
      %s2727 = scalar_lea.vmem %s871, 384
      %v2728 = vld [vmem:[%s2727] sm:$0xff]
      %v2729 = vld [vmem:[%s2727 + $0x8] sm:$0xff]
      %v2730 = vld [vmem:[%s2727 + $0x10] sm:$0xff]
      %v2731 = vld [vmem:[%s2727 + $0x18] sm:$0xff]
      %v2732 = vld [vmem:[%s2727 + $0x20] sm:$0xff]
      %v2733 = vld [vmem:[%s2727 + $0x28] sm:$0xff]
      %v2734 = vld [vmem:[%s2727 + $0x30] sm:$0xff]
      %v2735 = vld [vmem:[%s2727 + $0x38] sm:$0xff]
      %v2736 = vld [vmem:[%s2727 + $0x40] sm:$0xff]
      %v2737 = vld [vmem:[%s2727 + $0x48] sm:$0xff]
      %v2738 = vld [vmem:[%s2727 + $0x50] sm:$0xff]
      %v2739 = vld [vmem:[%s2727 + $0x58] sm:$0xff]
      %v2740 = vld [vmem:[%s2727 + $0x60] sm:$0xff]
      %v2741 = vld [vmem:[%s2727 + $0x68] sm:$0xff]
      %v2742 = vld [vmem:[%s2727 + $0x70] sm:$0xff]
      %v2743 = vld [vmem:[%s2727 + $0x78] sm:$0xff]
      %s2744 = scalar_lea.vmem %s875, 3
      %v2745 = vld [vmem:[%s2744] sm:$0x1]
      %v2747 = vlaneseq
      %v2748 = vshrl.u32 %v2747, 7
      %v2749 = vsub.s32 0, %v2748
      %v2750 = vrot.slane %v2745, %v2749
      %2752 = vmatprep.subr.mxu0 0.0
      %2753 = vmatpush1.msra.mxu0 %v2743
      %2754 = vmatprep.subr.mxu0 0.0
      %2755 = vmatpush1.msra.mxu0 %v2742
      %2756 = vmatprep.subr.mxu0 0.0
      %2757 = vmatpush1.msra.mxu0 %v2741
      %2758 = vmatprep.subr.mxu0 0.0
      %2759 = vmatpush1.msra.mxu0 %v2740
      %2760 = vmatprep.subr.mxu0 0.0
      %2761 = vmatpush1.msra.mxu0 %v2739
      %2762 = vmatprep.subr.mxu0 0.0
      %2763 = vmatpush1.msra.mxu0 %v2738
      %2764 = vmatprep.subr.mxu0 0.0
      %2765 = vmatpush1.msra.mxu0 %v2737
      %2766 = vmatprep.subr.mxu0 0.0
      %2767 = vmatpush1.msra.mxu0 %v2736
      %2768 = vmatprep.subr.mxu0 0.0
      %2769 = vmatpush1.msra.mxu0 %v2735
      %2770 = vmatprep.subr.mxu0 0.0
      %2771 = vmatpush1.msra.mxu0 %v2734
      %2772 = vmatprep.subr.mxu0 0.0
      %2773 = vmatpush1.msra.mxu0 %v2733
      %2774 = vmatprep.subr.mxu0 0.0
      %2775 = vmatpush1.msra.mxu0 %v2732
      %2776 = vmatprep.subr.mxu0 0.0
      %2777 = vmatpush1.msra.mxu0 %v2731
      %2778 = vmatprep.subr.mxu0 0.0
      %2779 = vmatpush1.msra.mxu0 %v2730
      %2780 = vmatprep.subr.mxu0 0.0
      %2781 = vmatpush1.msra.mxu0 %v2729
      %2782 = vmatprep.subr.mxu0 0.0
      %2783 = vmatpush1.msra.mxu0 %v2728
      %2784 = vmatprep.subr.mxu0 0.0
      %2785 = vmatpush2.msra.mxu0 0.0
      %2786 = vmatprep.subr.mxu0 0.0
      %2787 = vmatpush2.msra.mxu0 0.0
      %2788 = vmatprep.subr.mxu0 0.0
      %2789 = vmatpush2.msra.mxu0 0.0
      %2790 = vmatprep.subr.mxu0 0.0
      %2791 = vmatpush2.msra.mxu0 0.0
      %2792 = vmatprep.subr.mxu0 0.0
      %2793 = vmatpush2.msra.mxu0 0.0
      %2794 = vmatprep.subr.mxu0 0.0
      %2795 = vmatpush2.msra.mxu0 0.0
      %2796 = vmatprep.subr.mxu0 0.0
      %2797 = vmatpush2.msra.mxu0 0.0
      %2798 = vmatprep.subr.mxu0 0.0
      %2799 = vmatpush2.msra.mxu0 0.0
      %2800 = vmatprep.subr.mxu0 0.0
      %2801 = vmatpush2.msra.mxu0 0.0
      %2802 = vmatprep.subr.mxu0 0.0
      %2803 = vmatpush2.msra.mxu0 0.0
      %2804 = vmatprep.subr.mxu0 0.0
      %2805 = vmatpush2.msra.mxu0 0.0
      %2806 = vmatprep.subr.mxu0 0.0
      %2807 = vmatpush2.msra.mxu0 0.0
      %2808 = vmatprep.subr.mxu0 0.0
      %2809 = vmatpush2.msra.mxu0 0.0
      %2810 = vmatprep.subr.mxu0 0.0
      %2811 = vmatpush2.msra.mxu0 0.0
      %2812 = vmatprep.subr.mxu0 0.0
      %2813 = vmatpush2.msra.mxu0 0.0
      %2814 = vmatprep.subr.mxu0 0.0
      %2815 = vmatpush2.msra.mxu0 0.0
      %2816 = vmatprep.mubr.f32.mxu0 0.0
      %2817 = vmatmul.mubr.f32.gmra.mxu0 %v986
      %v2818 = vpop.f32.mrf.mxu0
      %v2819 = vadd.f32 %v2750, %v2818
      %v2820 = vpop.f32.mrf.mxu0
      %2821 = vmatprep.mubr.f32.mxu0 0.0
      %2822 = vmatmul.mubr.f32.gmra.mxu0 %v987
      %v2823 = vpop.f32.mrf.mxu0
      %v2824 = vadd.f32 %v2750, %v2823
      %v2825 = vpop.f32.mrf.mxu0
      %2826 = vdwg.mxu0
      %s2827 = scalar_lea.vmem %s880, 384
      %v2828 = vld [vmem:[%s2827] sm:$0xff]
      %v2829 = vld [vmem:[%s2827 + $0x8] sm:$0xff]
      %v2830 = vld [vmem:[%s2827 + $0x10] sm:$0xff]
      %v2831 = vld [vmem:[%s2827 + $0x18] sm:$0xff]
      %v2832 = vld [vmem:[%s2827 + $0x20] sm:$0xff]
      %v2833 = vld [vmem:[%s2827 + $0x28] sm:$0xff]
      %v2834 = vld [vmem:[%s2827 + $0x30] sm:$0xff]
      %v2835 = vld [vmem:[%s2827 + $0x38] sm:$0xff]
      %v2836 = vld [vmem:[%s2827 + $0x40] sm:$0xff]
      %v2837 = vld [vmem:[%s2827 + $0x48] sm:$0xff]
      %v2838 = vld [vmem:[%s2827 + $0x50] sm:$0xff]
      %v2839 = vld [vmem:[%s2827 + $0x58] sm:$0xff]
      %v2840 = vld [vmem:[%s2827 + $0x60] sm:$0xff]
      %v2841 = vld [vmem:[%s2827 + $0x68] sm:$0xff]
      %v2842 = vld [vmem:[%s2827 + $0x70] sm:$0xff]
      %v2843 = vld [vmem:[%s2827 + $0x78] sm:$0xff]
      %s2844 = scalar_lea.vmem %s884, 3
      %v2845 = vld [vmem:[%s2844] sm:$0x1]
      %v2847 = vlaneseq
      %v2848 = vshrl.u32 %v2847, 7
      %v2849 = vsub.s32 0, %v2848
      %v2850 = vrot.slane %v2845, %v2849
      %2852 = vmatprep.subr.mxu0 0.0
      %2853 = vmatpush1.msra.mxu0 %v2843
      %2854 = vmatprep.subr.mxu0 0.0
      %2855 = vmatpush1.msra.mxu0 %v2842
      %2856 = vmatprep.subr.mxu0 0.0
      %2857 = vmatpush1.msra.mxu0 %v2841
      %2858 = vmatprep.subr.mxu0 0.0
      %2859 = vmatpush1.msra.mxu0 %v2840
      %2860 = vmatprep.subr.mxu0 0.0
      %2861 = vmatpush1.msra.mxu0 %v2839
      %2862 = vmatprep.subr.mxu0 0.0
      %2863 = vmatpush1.msra.mxu0 %v2838
      %2864 = vmatprep.subr.mxu0 0.0
      %2865 = vmatpush1.msra.mxu0 %v2837
      %2866 = vmatprep.subr.mxu0 0.0
      %2867 = vmatpush1.msra.mxu0 %v2836
      %2868 = vmatprep.subr.mxu0 0.0
      %2869 = vmatpush1.msra.mxu0 %v2835
      %2870 = vmatprep.subr.mxu0 0.0
      %2871 = vmatpush1.msra.mxu0 %v2834
      %2872 = vmatprep.subr.mxu0 0.0
      %2873 = vmatpush1.msra.mxu0 %v2833
      %2874 = vmatprep.subr.mxu0 0.0
      %2875 = vmatpush1.msra.mxu0 %v2832
      %2876 = vmatprep.subr.mxu0 0.0
      %2877 = vmatpush1.msra.mxu0 %v2831
      %2878 = vmatprep.subr.mxu0 0.0
      %2879 = vmatpush1.msra.mxu0 %v2830
      %2880 = vmatprep.subr.mxu0 0.0
      %2881 = vmatpush1.msra.mxu0 %v2829
      %2882 = vmatprep.subr.mxu0 0.0
      %2883 = vmatpush1.msra.mxu0 %v2828
      %2884 = vmatprep.subr.mxu0 0.0
      %2885 = vmatpush2.msra.mxu0 0.0
      %2886 = vmatprep.subr.mxu0 0.0
      %2887 = vmatpush2.msra.mxu0 0.0
      %2888 = vmatprep.subr.mxu0 0.0
      %2889 = vmatpush2.msra.mxu0 0.0
      %2890 = vmatprep.subr.mxu0 0.0
      %2891 = vmatpush2.msra.mxu0 0.0
      %2892 = vmatprep.subr.mxu0 0.0
      %2893 = vmatpush2.msra.mxu0 0.0
      %2894 = vmatprep.subr.mxu0 0.0
      %2895 = vmatpush2.msra.mxu0 0.0
      %2896 = vmatprep.subr.mxu0 0.0
      %2897 = vmatpush2.msra.mxu0 0.0
      %2898 = vmatprep.subr.mxu0 0.0
      %2899 = vmatpush2.msra.mxu0 0.0
      %2900 = vmatprep.subr.mxu0 0.0
      %2901 = vmatpush2.msra.mxu0 0.0
      %2902 = vmatprep.subr.mxu0 0.0
      %2903 = vmatpush2.msra.mxu0 0.0
      %2904 = vmatprep.subr.mxu0 0.0
      %2905 = vmatpush2.msra.mxu0 0.0
      %2906 = vmatprep.subr.mxu0 0.0
      %2907 = vmatpush2.msra.mxu0 0.0
      %2908 = vmatprep.subr.mxu0 0.0
      %2909 = vmatpush2.msra.mxu0 0.0
      %2910 = vmatprep.subr.mxu0 0.0
      %2911 = vmatpush2.msra.mxu0 0.0
      %2912 = vmatprep.subr.mxu0 0.0
      %2913 = vmatpush2.msra.mxu0 0.0
      %2914 = vmatprep.subr.mxu0 0.0
      %2915 = vmatpush2.msra.mxu0 0.0
      %2916 = vmatprep.mubr.f32.mxu0 0.0
      %2917 = vmatmul.mubr.f32.gmra.mxu0 %v986
      %v2918 = vpop.f32.mrf.mxu0
      %v2919 = vadd.f32 %v2850, %v2918
      %v2920 = vpop.f32.mrf.mxu0
      %2921 = vmatprep.mubr.f32.mxu0 0.0
      %2922 = vmatmul.mubr.f32.gmra.mxu0 %v987
      %v2923 = vpop.f32.mrf.mxu0
      %v2924 = vadd.f32 %v2850, %v2923
      %v2925 = vpop.f32.mrf.mxu0
      %2926 = vdwg.mxu0
      %s2927 = scalar_lea.vmem %s889, 384
      %v2928 = vld [vmem:[%s2927] sm:$0xff]
      %v2929 = vld [vmem:[%s2927 + $0x8] sm:$0xff]
      %v2930 = vld [vmem:[%s2927 + $0x10] sm:$0xff]
      %v2931 = vld [vmem:[%s2927 + $0x18] sm:$0xff]
      %v2932 = vld [vmem:[%s2927 + $0x20] sm:$0xff]
      %v2933 = vld [vmem:[%s2927 + $0x28] sm:$0xff]
      %v2934 = vld [vmem:[%s2927 + $0x30] sm:$0xff]
      %v2935 = vld [vmem:[%s2927 + $0x38] sm:$0xff]
      %v2936 = vld [vmem:[%s2927 + $0x40] sm:$0xff]
      %v2937 = vld [vmem:[%s2927 + $0x48] sm:$0xff]
      %v2938 = vld [vmem:[%s2927 + $0x50] sm:$0xff]
      %v2939 = vld [vmem:[%s2927 + $0x58] sm:$0xff]
      %v2940 = vld [vmem:[%s2927 + $0x60] sm:$0xff]
      %v2941 = vld [vmem:[%s2927 + $0x68] sm:$0xff]
      %v2942 = vld [vmem:[%s2927 + $0x70] sm:$0xff]
      %v2943 = vld [vmem:[%s2927 + $0x78] sm:$0xff]
      %s2944 = scalar_lea.vmem %s893, 3
      %v2945 = vld [vmem:[%s2944] sm:$0x1]
      %v2947 = vlaneseq
      %v2948 = vshrl.u32 %v2947, 7
      %v2949 = vsub.s32 0, %v2948
      %v2950 = vrot.slane %v2945, %v2949
      %2952 = vmatprep.subr.mxu0 0.0
      %2953 = vmatpush1.msra.mxu0 %v2943
      %2954 = vmatprep.subr.mxu0 0.0
      %2955 = vmatpush1.msra.mxu0 %v2942
      %2956 = vmatprep.subr.mxu0 0.0
      %2957 = vmatpush1.msra.mxu0 %v2941
      %2958 = vmatprep.subr.mxu0 0.0
      %2959 = vmatpush1.msra.mxu0 %v2940
      %2960 = vmatprep.subr.mxu0 0.0
      %2961 = vmatpush1.msra.mxu0 %v2939
      %2962 = vmatprep.subr.mxu0 0.0
      %2963 = vmatpush1.msra.mxu0 %v2938
      %2964 = vmatprep.subr.mxu0 0.0
      %2965 = vmatpush1.msra.mxu0 %v2937
      %2966 = vmatprep.subr.mxu0 0.0
      %2967 = vmatpush1.msra.mxu0 %v2936
      %2968 = vmatprep.subr.mxu0 0.0
      %2969 = vmatpush1.msra.mxu0 %v2935
      %2970 = vmatprep.subr.mxu0 0.0
      %2971 = vmatpush1.msra.mxu0 %v2934
      %2972 = vmatprep.subr.mxu0 0.0
      %2973 = vmatpush1.msra.mxu0 %v2933
      %2974 = vmatprep.subr.mxu0 0.0
      %2975 = vmatpush1.msra.mxu0 %v2932
      %2976 = vmatprep.subr.mxu0 0.0
      %2977 = vmatpush1.msra.mxu0 %v2931
      %2978 = vmatprep.subr.mxu0 0.0
      %2979 = vmatpush1.msra.mxu0 %v2930
      %2980 = vmatprep.subr.mxu0 0.0
      %2981 = vmatpush1.msra.mxu0 %v2929
      %2982 = vmatprep.subr.mxu0 0.0
      %2983 = vmatpush1.msra.mxu0 %v2928
      %2984 = vmatprep.subr.mxu0 0.0
      %2985 = vmatpush2.msra.mxu0 0.0
      %2986 = vmatprep.subr.mxu0 0.0
      %2987 = vmatpush2.msra.mxu0 0.0
      %2988 = vmatprep.subr.mxu0 0.0
      %2989 = vmatpush2.msra.mxu0 0.0
      %2990 = vmatprep.subr.mxu0 0.0
      %2991 = vmatpush2.msra.mxu0 0.0
      %2992 = vmatprep.subr.mxu0 0.0
      %2993 = vmatpush2.msra.mxu0 0.0
      %2994 = vmatprep.subr.mxu0 0.0
      %2995 = vmatpush2.msra.mxu0 0.0
      %2996 = vmatprep.subr.mxu0 0.0
      %2997 = vmatpush2.msra.mxu0 0.0
      %2998 = vmatprep.subr.mxu0 0.0
      %2999 = vmatpush2.msra.mxu0 0.0
      %3000 = vmatprep.subr.mxu0 0.0
      %3001 = vmatpush2.msra.mxu0 0.0
      %3002 = vmatprep.subr.mxu0 0.0
      %3003 = vmatpush2.msra.mxu0 0.0
      %3004 = vmatprep.subr.mxu0 0.0
      %3005 = vmatpush2.msra.mxu0 0.0
      %3006 = vmatprep.subr.mxu0 0.0
      %3007 = vmatpush2.msra.mxu0 0.0
      %3008 = vmatprep.subr.mxu0 0.0
      %3009 = vmatpush2.msra.mxu0 0.0
      %3010 = vmatprep.subr.mxu0 0.0
      %3011 = vmatpush2.msra.mxu0 0.0
      %3012 = vmatprep.subr.mxu0 0.0
      %3013 = vmatpush2.msra.mxu0 0.0
      %3014 = vmatprep.subr.mxu0 0.0
      %3015 = vmatpush2.msra.mxu0 0.0
      %3016 = vmatprep.mubr.f32.mxu0 0.0
      %3017 = vmatmul.mubr.f32.gmra.mxu0 %v986
      %v3018 = vpop.f32.mrf.mxu0
      %v3019 = vadd.f32 %v2950, %v3018
      %v3020 = vpop.f32.mrf.mxu0
      %3021 = vmatprep.mubr.f32.mxu0 0.0
      %3022 = vmatmul.mubr.f32.gmra.mxu0 %v987
      %v3023 = vpop.f32.mrf.mxu0
      %v3024 = vadd.f32 %v2950, %v3023
      %v3025 = vpop.f32.mrf.mxu0
      %3026 = vdwg.mxu0
      %v3028 = vsel %vm1284, %v2819, 0
      %v3031 = vsel %vm1284, %v2824, 0
      %v3034 = vsel %vm1284, %v2919, 0
      %v3037 = vsel %vm1284, %v2924, 0
      %3039 = vmatprep.subr.mxu0 0.0
      %3040 = vmatpush1.xpose.msra.mxu0 0.0
      %3041 = vmatprep.subr.mxu0 0.0
      %3042 = vmatpush1.xpose.msra.mxu0 0.0
      %3043 = vmatprep.subr.mxu0 0.0
      %3044 = vmatpush1.xpose.msra.mxu0 0.0
      %3045 = vmatprep.subr.mxu0 0.0
      %3046 = vmatpush1.xpose.msra.mxu0 0.0
      %3047 = vmatprep.subr.mxu0 0.0
      %3048 = vmatpush1.xpose.msra.mxu0 0.0
      %3049 = vmatprep.subr.mxu0 0.0
      %3050 = vmatpush1.xpose.msra.mxu0 0.0
      %3051 = vmatprep.subr.mxu0 0.0
      %3052 = vmatpush1.xpose.msra.mxu0 0.0
      %3053 = vmatprep.subr.mxu0 0.0
      %3054 = vmatpush1.xpose.msra.mxu0 0.0
      %3055 = vmatprep.subr.mxu0 0.0
      %3056 = vmatpush1.xpose.msra.mxu0 0.0
      %3057 = vmatprep.subr.mxu0 0.0
      %3058 = vmatpush1.xpose.msra.mxu0 0.0
      %3059 = vmatprep.subr.mxu0 0.0
      %3060 = vmatpush1.xpose.msra.mxu0 0.0
      %3061 = vmatprep.subr.mxu0 0.0
      %3062 = vmatpush1.xpose.msra.mxu0 0.0
      %3063 = vmatprep.subr.mxu0 0.0
      %3064 = vmatpush1.xpose.msra.mxu0 0.0
      %3065 = vmatprep.subr.mxu0 0.0
      %3066 = vmatpush1.xpose.msra.mxu0 0.0
      %3067 = vmatprep.subr.mxu0 0.0
      %3068 = vmatpush1.xpose.msra.mxu0 %v3037
      %3069 = vmatprep.subr.mxu0 0.0
      %3070 = vmatpush1.xpose.msra.mxu0 %v3034
      %3071 = vmatprep.subr.mxu0 0.0
      %3072 = vmatpush2.xpose.msra.mxu0 0.0
      %3073 = vmatprep.subr.mxu0 0.0
      %3074 = vmatpush2.xpose.msra.mxu0 0.0
      %3075 = vmatprep.subr.mxu0 0.0
      %3076 = vmatpush2.xpose.msra.mxu0 0.0
      %3077 = vmatprep.subr.mxu0 0.0
      %3078 = vmatpush2.xpose.msra.mxu0 0.0
      %3079 = vmatprep.subr.mxu0 0.0
      %3080 = vmatpush2.xpose.msra.mxu0 0.0
      %3081 = vmatprep.subr.mxu0 0.0
      %3082 = vmatpush2.xpose.msra.mxu0 0.0
      %3083 = vmatprep.subr.mxu0 0.0
      %3084 = vmatpush2.xpose.msra.mxu0 0.0
      %3085 = vmatprep.subr.mxu0 0.0
      %3086 = vmatpush2.xpose.msra.mxu0 0.0
      %3087 = vmatprep.subr.mxu0 0.0
      %3088 = vmatpush2.xpose.msra.mxu0 0.0
      %3089 = vmatprep.subr.mxu0 0.0
      %3090 = vmatpush2.xpose.msra.mxu0 0.0
      %3091 = vmatprep.subr.mxu0 0.0
      %3092 = vmatpush2.xpose.msra.mxu0 0.0
      %3093 = vmatprep.subr.mxu0 0.0
      %3094 = vmatpush2.xpose.msra.mxu0 0.0
      %3095 = vmatprep.subr.mxu0 0.0
      %3096 = vmatpush2.xpose.msra.mxu0 0.0
      %3097 = vmatprep.subr.mxu0 0.0
      %3098 = vmatpush2.xpose.msra.mxu0 0.0
      %3099 = vmatprep.subr.mxu0 0.0
      %3100 = vmatpush2.xpose.msra.mxu0 0.0
      %3101 = vmatprep.subr.mxu0 0.0
      %3102 = vmatpush2.xpose.msra.mxu0 0.0
      %3103 = vmatprep.mubr.f32.mxu0 0.0
      %3104 = vmatmul.mubr.f32.gmra.mxu0 %v3028
      %v3105 = vpop.f32.mrf.mxu0
      %v3106 = vadd.f32 0.0, %v3105
      %v3107 = vpop.f32.mrf.mxu0
      %3108 = vmatprep.mubr.f32.mxu0 0.0
      %3109 = vmatmul.mubr.f32.gmra.mxu0 %v3031
      %v3110 = vpop.f32.mrf.mxu0
      %v3111 = vadd.f32 0.0, %v3110
      %v3112 = vpop.f32.mrf.mxu0
      %3113 = vdwg.mxu0
      %v3114 = vmul.f32 %v3106, 0.17677669
      %v3115 = vmul.f32 %v3111, 0.17677669
      %v3116 = vadd.f32 %v3114, %v988
      %v3117 = vadd.f32 %v3115, %v989
      %v3118 = vsel %vm1376, %v3116, -inf
      %3119 = vmax.xlane.f32.xlu0 %v3118
      %v3120 = vpop.xlane.xlu0 %3119
      %v3121 = vsel %vm1376, %v3117, -inf
      %3122 = vmax.xlane.f32.xlu0 %v3121
      %v3123 = vpop.xlane.xlu0 %3122
      %v3124 = vsub.f32 %v3116, %v3120
      %v3125 = vsub.f32 %v3117, %v3123
      %v3126 = vmul.f32 %v3124, 1.442695
      %v3127 = vpow.pop %v3126
      %v3128 = vmul.f32 %v3125, 1.442695
      %v3129 = vpow.pop %v3128
      %v3130 = vsel %vm1376, %v3127, 0.0
      %3131 = vadd.xlane.f32.xlu0 %v3130
      %v3132 = vpop.xlane.xlu0 %3131
      %v3133 = vsel %vm1376, %v3129, 0.0
      %3134 = vadd.xlane.f32.xlu0 %v3133
      %v3135 = vpop.xlane.xlu0 %3134
      %v3136 = vrcp.pop %v3132
      %v3137 = vrcp.pop %v3135
      %v3138 = vmul.f32 %v3127, %v3136
      %v3139 = vmul.f32 %v3129, %v3137
      %v3141 = vsel %vm1376, %v3138, 0
      %v3144 = vsel %vm1376, %v3139, 0
      %3146 = vmatprep.subr.mxu0 0.0
      %3147 = vmatpush1.msra.mxu0 0.0
      %3148 = vmatprep.subr.mxu0 0.0
      %3149 = vmatpush1.msra.mxu0 0.0
      %3150 = vmatprep.subr.mxu0 0.0
      %3151 = vmatpush1.msra.mxu0 0.0
      %3152 = vmatprep.subr.mxu0 0.0
      %3153 = vmatpush1.msra.mxu0 0.0
      %3154 = vmatprep.subr.mxu0 0.0
      %3155 = vmatpush1.msra.mxu0 0.0
      %3156 = vmatprep.subr.mxu0 0.0
      %3157 = vmatpush1.msra.mxu0 0.0
      %3158 = vmatprep.subr.mxu0 0.0
      %3159 = vmatpush1.msra.mxu0 0.0
      %3160 = vmatprep.subr.mxu0 0.0
      %3161 = vmatpush1.msra.mxu0 0.0
      %3162 = vmatprep.subr.mxu0 0.0
      %3163 = vmatpush1.msra.mxu0 0.0
      %3164 = vmatprep.subr.mxu0 0.0
      %3165 = vmatpush1.msra.mxu0 0.0
      %3166 = vmatprep.subr.mxu0 0.0
      %3167 = vmatpush1.msra.mxu0 0.0
      %3168 = vmatprep.subr.mxu0 0.0
      %3169 = vmatpush1.msra.mxu0 0.0
      %3170 = vmatprep.subr.mxu0 0.0
      %3171 = vmatpush1.msra.mxu0 0.0
      %3172 = vmatprep.subr.mxu0 0.0
      %3173 = vmatpush1.msra.mxu0 0.0
      %3174 = vmatprep.subr.mxu0 0.0
      %3175 = vmatpush1.msra.mxu0 %v3024
      %3176 = vmatprep.subr.mxu0 0.0
      %3177 = vmatpush1.msra.mxu0 %v3019
      %3178 = vmatprep.subr.mxu0 0.0
      %3179 = vmatpush2.msra.mxu0 0.0
      %3180 = vmatprep.subr.mxu0 0.0
      %3181 = vmatpush2.msra.mxu0 0.0
      %3182 = vmatprep.subr.mxu0 0.0
      %3183 = vmatpush2.msra.mxu0 0.0
      %3184 = vmatprep.subr.mxu0 0.0
      %3185 = vmatpush2.msra.mxu0 0.0
      %3186 = vmatprep.subr.mxu0 0.0
      %3187 = vmatpush2.msra.mxu0 0.0
      %3188 = vmatprep.subr.mxu0 0.0
      %3189 = vmatpush2.msra.mxu0 0.0
      %3190 = vmatprep.subr.mxu0 0.0
      %3191 = vmatpush2.msra.mxu0 0.0
      %3192 = vmatprep.subr.mxu0 0.0
      %3193 = vmatpush2.msra.mxu0 0.0
      %3194 = vmatprep.subr.mxu0 0.0
      %3195 = vmatpush2.msra.mxu0 0.0
      %3196 = vmatprep.subr.mxu0 0.0
      %3197 = vmatpush2.msra.mxu0 0.0
      %3198 = vmatprep.subr.mxu0 0.0
      %3199 = vmatpush2.msra.mxu0 0.0
      %3200 = vmatprep.subr.mxu0 0.0
      %3201 = vmatpush2.msra.mxu0 0.0
      %3202 = vmatprep.subr.mxu0 0.0
      %3203 = vmatpush2.msra.mxu0 0.0
      %3204 = vmatprep.subr.mxu0 0.0
      %3205 = vmatpush2.msra.mxu0 0.0
      %3206 = vmatprep.subr.mxu0 0.0
      %3207 = vmatpush2.msra.mxu0 0.0
      %3208 = vmatprep.subr.mxu0 0.0
      %3209 = vmatpush2.msra.mxu0 0.0
      %3210 = vmatprep.mubr.f32.mxu0 0.0
      %3211 = vmatmul.mubr.f32.gmra.mxu0 %v3141
      %v3212 = vpop.f32.mrf.mxu0
      %v3213 = vadd.f32 0.0, %v3212
      %v3214 = vpop.f32.mrf.mxu0
      %3215 = vmatprep.mubr.f32.mxu0 0.0
      %3216 = vmatmul.mubr.f32.gmra.mxu0 %v3144
      %v3217 = vpop.f32.mrf.mxu0
      %v3218 = vadd.f32 0.0, %v3217
      %v3219 = vpop.f32.mrf.mxu0
      %3220 = vdwg.mxu0
      %s3221 = scalar_lea.vmem %s898, 96
      %v3222 = vld [vmem:[%s3221] sm:$0xff]
      %v3223 = vld [vmem:[%s3221 + $0x8] sm:$0xff]
      %v3224 = vld [vmem:[%s3221 + $0x10] sm:$0xff]
      %v3225 = vld [vmem:[%s3221 + $0x18] sm:$0xff]
      %v3227 = vsel %vm1284, %v3213, 0
      %v3230 = vsel %vm1284, %v3218, 0
      %3232 = vmatprep.subr.mxu0 0.0
      %3233 = vmatpush1.msra.mxu0 0.0
      %3234 = vmatprep.subr.mxu0 0.0
      %3235 = vmatpush1.msra.mxu0 0.0
      %3236 = vmatprep.subr.mxu0 0.0
      %3237 = vmatpush1.msra.mxu0 0.0
      %3238 = vmatprep.subr.mxu0 0.0
      %3239 = vmatpush1.msra.mxu0 0.0
      %3240 = vmatprep.subr.mxu0 0.0
      %3241 = vmatpush1.msra.mxu0 0.0
      %3242 = vmatprep.subr.mxu0 0.0
      %3243 = vmatpush1.msra.mxu0 0.0
      %3244 = vmatprep.subr.mxu0 0.0
      %3245 = vmatpush1.msra.mxu0 0.0
      %3246 = vmatprep.subr.mxu0 0.0
      %3247 = vmatpush1.msra.mxu0 0.0
      %3248 = vmatprep.subr.mxu0 0.0
      %3249 = vmatpush1.msra.mxu0 0.0
      %3250 = vmatprep.subr.mxu0 0.0
      %3251 = vmatpush1.msra.mxu0 0.0
      %3252 = vmatprep.subr.mxu0 0.0
      %3253 = vmatpush1.msra.mxu0 0.0
      %3254 = vmatprep.subr.mxu0 0.0
      %3255 = vmatpush1.msra.mxu0 0.0
      %3256 = vmatprep.subr.mxu0 0.0
      %3257 = vmatpush1.msra.mxu0 %v3225
      %3258 = vmatprep.subr.mxu0 0.0
      %3259 = vmatpush1.msra.mxu0 %v3224
      %3260 = vmatprep.subr.mxu0 0.0
      %3261 = vmatpush1.msra.mxu0 %v3223
      %3262 = vmatprep.subr.mxu0 0.0
      %3263 = vmatpush1.msra.mxu0 %v3222
      %3264 = vmatprep.subr.mxu0 0.0
      %3265 = vmatpush2.msra.mxu0 0.0
      %3266 = vmatprep.subr.mxu0 0.0
      %3267 = vmatpush2.msra.mxu0 0.0
      %3268 = vmatprep.subr.mxu0 0.0
      %3269 = vmatpush2.msra.mxu0 0.0
      %3270 = vmatprep.subr.mxu0 0.0
      %3271 = vmatpush2.msra.mxu0 0.0
      %3272 = vmatprep.subr.mxu0 0.0
      %3273 = vmatpush2.msra.mxu0 0.0
      %3274 = vmatprep.subr.mxu0 0.0
      %3275 = vmatpush2.msra.mxu0 0.0
      %3276 = vmatprep.subr.mxu0 0.0
      %3277 = vmatpush2.msra.mxu0 0.0
      %3278 = vmatprep.subr.mxu0 0.0
      %3279 = vmatpush2.msra.mxu0 0.0
      %3280 = vmatprep.subr.mxu0 0.0
      %3281 = vmatpush2.msra.mxu0 0.0
      %3282 = vmatprep.subr.mxu0 0.0
      %3283 = vmatpush2.msra.mxu0 0.0
      %3284 = vmatprep.subr.mxu0 0.0
      %3285 = vmatpush2.msra.mxu0 0.0
      %3286 = vmatprep.subr.mxu0 0.0
      %3287 = vmatpush2.msra.mxu0 0.0
      %3288 = vmatprep.subr.mxu0 0.0
      %3289 = vmatpush2.msra.mxu0 0.0
      %3290 = vmatprep.subr.mxu0 0.0
      %3291 = vmatpush2.msra.mxu0 0.0
      %3292 = vmatprep.subr.mxu0 0.0
      %3293 = vmatpush2.msra.mxu0 0.0
      %3294 = vmatprep.subr.mxu0 0.0
      %3295 = vmatpush2.msra.mxu0 0.0
      %3296 = vmatprep.mubr.f32.mxu0 0.0
      %3297 = vmatmul.mubr.f32.gmra.mxu0 %v3227
      %v3298 = vpop.f32.mrf.mxu0
      %v3299 = vadd.f32 0.0, %v3298
      %v3300 = vpop.f32.mrf.mxu0
      %3301 = vmatprep.mubr.f32.mxu0 0.0
      %3302 = vmatmul.mubr.f32.gmra.mxu0 %v3230
      %v3303 = vpop.f32.mrf.mxu0
      %v3304 = vadd.f32 0.0, %v3303
      %v3305 = vpop.f32.mrf.mxu0
      %3306 = vdwg.mxu0
      %v3307 = vadd.f32 %v2725, %v3299
      %v3308 = vadd.f32 %v2726, %v3304
      %v3309 = vld [vmem:[%s901] sm:$0x1]
      %v3311 = vlaneseq
      %v3312 = vshrl.u32 %v3311, 7
      %v3313 = vsub.s32 0, %v3312
      %v3314 = vrot.slane %v3309, %v3313
      %v3316 = vadd.f32 %v3307, %v3314
      %v3317 = vadd.f32 %v3308, %v3314
      %v3318 = vadd.f32 %v3316, %v986
      %v3319 = vadd.f32 %v3317, %v987
      %v3320 = vld [vmem:[%s904] sm:$0x1]
      %v3321 = vld [vmem:[%s907] sm:$0x1]
      %3322 = vadd.xlane.f32.xlu0 %v3318
      %v3323 = vpop.xlane.xlu0 %3322
      %3324 = vadd.xlane.f32.xlu0 %v3319
      %v3325 = vpop.xlane.xlu0 %3324
      %v3326 = vrcp.pop 128.0
      %v3327 = vmul.f32 %v3323, %v3326
      %v3328 = vmul.f32 %v3325, %v3326
      %v3329 = vsub.f32 %v3318, %v3327
      %v3330 = vsub.f32 %v3319, %v3328
      %v3331 = vmul.f32 %v3329, %v3329
      %v3332 = vmul.f32 %v3330, %v3330
      %3333 = vadd.xlane.f32.xlu0 %v3331
      %v3334 = vpop.xlane.xlu0 %3333
      %3335 = vadd.xlane.f32.xlu0 %v3332
      %v3336 = vpop.xlane.xlu0 %3335
      %v3337 = vmul.f32 %v3334, %v3326
      %v3338 = vmul.f32 %v3336, %v3326
      %v3339 = vadd.f32 %v3337, 1e-12
      %v3340 = vadd.f32 %v3338, 1e-12
      %v3341 = vrsqrt.pop %v3339
      %v3342 = vrsqrt.pop %v3340
      %v3343 = vmul.f32 %v3329, %v3341
      %v3344 = vmul.f32 %v3330, %v3342
      %v3346 = vlaneseq
      %v3347 = vshrl.u32 %v3346, 7
      %v3348 = vsub.s32 0, %v3347
      %v3349 = vrot.slane %v3320, %v3348
      %v3351 = vmul.f32 %v3343, %v3349
      %v3352 = vmul.f32 %v3344, %v3349
      %v3354 = vlaneseq
      %v3355 = vshrl.u32 %v3354, 7
      %v3356 = vsub.s32 0, %v3355
      %v3357 = vrot.slane %v3321, %v3356
      %v3359 = vadd.f32 %v3351, %v3357
      %v3360 = vadd.f32 %v3352, %v3357
      %v3361 = vld [vmem:[%s912] sm:$0xff]
      %v3362 = vld [vmem:[%s912 + $0x8] sm:$0xff]
      %v3363 = vld [vmem:[%s912 + $0x10] sm:$0xff]
      %v3364 = vld [vmem:[%s912 + $0x18] sm:$0xff]
      %v3365 = vld [vmem:[%s912 + $0x20] sm:$0xff]
      %v3366 = vld [vmem:[%s912 + $0x28] sm:$0xff]
      %v3367 = vld [vmem:[%s912 + $0x30] sm:$0xff]
      %v3368 = vld [vmem:[%s912 + $0x38] sm:$0xff]
      %v3369 = vld [vmem:[%s912 + $0x40] sm:$0xff]
      %v3370 = vld [vmem:[%s912 + $0x48] sm:$0xff]
      %v3371 = vld [vmem:[%s912 + $0x50] sm:$0xff]
      %v3372 = vld [vmem:[%s912 + $0x58] sm:$0xff]
      %v3373 = vld [vmem:[%s912 + $0x60] sm:$0xff]
      %v3374 = vld [vmem:[%s912 + $0x68] sm:$0xff]
      %v3375 = vld [vmem:[%s912 + $0x70] sm:$0xff]
      %v3376 = vld [vmem:[%s912 + $0x78] sm:$0xff]
      %v3377 = vld [vmem:[%s912 + $0x80] sm:$0xff]
      %v3378 = vld [vmem:[%s912 + $0x88] sm:$0xff]
      %v3379 = vld [vmem:[%s912 + $0x90] sm:$0xff]
      %v3380 = vld [vmem:[%s912 + $0x98] sm:$0xff]
      %v3381 = vld [vmem:[%s912 + $0xa0] sm:$0xff]
      %v3382 = vld [vmem:[%s912 + $0xa8] sm:$0xff]
      %v3383 = vld [vmem:[%s912 + $0xb0] sm:$0xff]
      %v3384 = vld [vmem:[%s912 + $0xb8] sm:$0xff]
      %v3385 = vld [vmem:[%s912 + $0xc0] sm:$0xff]
      %v3386 = vld [vmem:[%s912 + $0xc8] sm:$0xff]
      %v3387 = vld [vmem:[%s912 + $0xd0] sm:$0xff]
      %v3388 = vld [vmem:[%s912 + $0xd8] sm:$0xff]
      %v3389 = vld [vmem:[%s912 + $0xe0] sm:$0xff]
      %v3390 = vld [vmem:[%s912 + $0xe8] sm:$0xff]
      %v3391 = vld [vmem:[%s912 + $0xf0] sm:$0xff]
      %v3392 = vld [vmem:[%s912 + $0xf8] sm:$0xff]
      %v3393 = vld [vmem:[%s912 + $0x100] sm:$0xff]
      %v3394 = vld [vmem:[%s912 + $0x108] sm:$0xff]
      %v3395 = vld [vmem:[%s912 + $0x110] sm:$0xff]
      %v3396 = vld [vmem:[%s912 + $0x118] sm:$0xff]
      %v3397 = vld [vmem:[%s912 + $0x120] sm:$0xff]
      %v3398 = vld [vmem:[%s912 + $0x128] sm:$0xff]
      %v3399 = vld [vmem:[%s912 + $0x130] sm:$0xff]
      %v3400 = vld [vmem:[%s912 + $0x138] sm:$0xff]
      %v3401 = vld [vmem:[%s912 + $0x140] sm:$0xff]
      %v3402 = vld [vmem:[%s912 + $0x148] sm:$0xff]
      %v3403 = vld [vmem:[%s912 + $0x150] sm:$0xff]
      %v3404 = vld [vmem:[%s912 + $0x158] sm:$0xff]
      %v3405 = vld [vmem:[%s912 + $0x160] sm:$0xff]
      %v3406 = vld [vmem:[%s912 + $0x168] sm:$0xff]
      %v3407 = vld [vmem:[%s912 + $0x170] sm:$0xff]
      %v3408 = vld [vmem:[%s912 + $0x178] sm:$0xff]
      %v3409 = vld [vmem:[%s912 + $0x180] sm:$0xff]
      %v3410 = vld [vmem:[%s912 + $0x188] sm:$0xff]
      %v3411 = vld [vmem:[%s912 + $0x190] sm:$0xff]
      %v3412 = vld [vmem:[%s912 + $0x198] sm:$0xff]
      %v3413 = vld [vmem:[%s912 + $0x1a0] sm:$0xff]
      %v3414 = vld [vmem:[%s912 + $0x1a8] sm:$0xff]
      %v3415 = vld [vmem:[%s912 + $0x1b0] sm:$0xff]
      %v3416 = vld [vmem:[%s912 + $0x1b8] sm:$0xff]
      %v3417 = vld [vmem:[%s912 + $0x1c0] sm:$0xff]
      %v3418 = vld [vmem:[%s912 + $0x1c8] sm:$0xff]
      %v3419 = vld [vmem:[%s912 + $0x1d0] sm:$0xff]
      %v3420 = vld [vmem:[%s912 + $0x1d8] sm:$0xff]
      %v3421 = vld [vmem:[%s912 + $0x1e0] sm:$0xff]
      %v3422 = vld [vmem:[%s912 + $0x1e8] sm:$0xff]
      %v3423 = vld [vmem:[%s912 + $0x1f0] sm:$0xff]
      %v3424 = vld [vmem:[%s912 + $0x1f8] sm:$0xff]
      %v3425 = vld [vmem:[%s916] sm:$0xf]
      %v3427 = vlaneseq
      %v3428 = vshrl.u32 %v3427, 7
      %v3429 = vsub.s32 0, %v3428
      %v3430 = vrot.slane %v3425, %v3429
      %v3431 = vlaneseq
      %v3432 = vshrl.u32 %v3431, 7
      %v3433 = vsub.s32 1, %v3432
      %v3434 = vrot.slane %v3425, %v3433
      %v3435 = vlaneseq
      %v3436 = vshrl.u32 %v3435, 7
      %v3437 = vsub.s32 2, %v3436
      %v3438 = vrot.slane %v3425, %v3437
      %v3439 = vlaneseq
      %v3440 = vshrl.u32 %v3439, 7
      %v3441 = vsub.s32 3, %v3440
      %v3442 = vrot.slane %v3425, %v3441
      %3447 = vmatprep.subr.mxu0 %v3422
      %3448 = vmatpush1.msra.mxu0 %v3421
      %3449 = vmatprep.subr.mxu0 %v3418
      %3450 = vmatpush1.msra.mxu0 %v3417
      %3451 = vmatprep.subr.mxu0 %v3414
      %3452 = vmatpush1.msra.mxu0 %v3413
      %3453 = vmatprep.subr.mxu0 %v3410
      %3454 = vmatpush1.msra.mxu0 %v3409
      %3455 = vmatprep.subr.mxu0 %v3406
      %3456 = vmatpush1.msra.mxu0 %v3405
      %3457 = vmatprep.subr.mxu0 %v3402
      %3458 = vmatpush1.msra.mxu0 %v3401
      %3459 = vmatprep.subr.mxu0 %v3398
      %3460 = vmatpush1.msra.mxu0 %v3397
      %3461 = vmatprep.subr.mxu0 %v3394
      %3462 = vmatpush1.msra.mxu0 %v3393
      %3463 = vmatprep.subr.mxu0 %v3390
      %3464 = vmatpush1.msra.mxu0 %v3389
      %3465 = vmatprep.subr.mxu0 %v3386
      %3466 = vmatpush1.msra.mxu0 %v3385
      %3467 = vmatprep.subr.mxu0 %v3382
      %3468 = vmatpush1.msra.mxu0 %v3381
      %3469 = vmatprep.subr.mxu0 %v3378
      %3470 = vmatpush1.msra.mxu0 %v3377
      %3471 = vmatprep.subr.mxu0 %v3374
      %3472 = vmatpush1.msra.mxu0 %v3373
      %3473 = vmatprep.subr.mxu0 %v3370
      %3474 = vmatpush1.msra.mxu0 %v3369
      %3475 = vmatprep.subr.mxu0 %v3366
      %3476 = vmatpush1.msra.mxu0 %v3365
      %3477 = vmatprep.subr.mxu0 %v3362
      %3478 = vmatpush1.msra.mxu0 %v3361
      %3479 = vmatprep.subr.mxu0 0.0
      %3480 = vmatpush2.msra.mxu0 0.0
      %3481 = vmatprep.subr.mxu0 0.0
      %3482 = vmatpush2.msra.mxu0 0.0
      %3483 = vmatprep.subr.mxu0 0.0
      %3484 = vmatpush2.msra.mxu0 0.0
      %3485 = vmatprep.subr.mxu0 0.0
      %3486 = vmatpush2.msra.mxu0 0.0
      %3487 = vmatprep.subr.mxu0 0.0
      %3488 = vmatpush2.msra.mxu0 0.0
      %3489 = vmatprep.subr.mxu0 0.0
      %3490 = vmatpush2.msra.mxu0 0.0
      %3491 = vmatprep.subr.mxu0 0.0
      %3492 = vmatpush2.msra.mxu0 0.0
      %3493 = vmatprep.subr.mxu0 0.0
      %3494 = vmatpush2.msra.mxu0 0.0
      %3495 = vmatprep.subr.mxu0 0.0
      %3496 = vmatpush2.msra.mxu0 0.0
      %3497 = vmatprep.subr.mxu0 0.0
      %3498 = vmatpush2.msra.mxu0 0.0
      %3499 = vmatprep.subr.mxu0 0.0
      %3500 = vmatpush2.msra.mxu0 0.0
      %3501 = vmatprep.subr.mxu0 0.0
      %3502 = vmatpush2.msra.mxu0 0.0
      %3503 = vmatprep.subr.mxu0 0.0
      %3504 = vmatpush2.msra.mxu0 0.0
      %3505 = vmatprep.subr.mxu0 0.0
      %3506 = vmatpush2.msra.mxu0 0.0
      %3507 = vmatprep.subr.mxu0 0.0
      %3508 = vmatpush2.msra.mxu0 0.0
      %3509 = vmatprep.subr.mxu0 0.0
      %3510 = vmatpush2.msra.mxu0 0.0
      %3511 = vmatprep.mubr.f32.mxu0 0.0
      %3512 = vmatmul.mubr.f32.gmra.mxu0 %v3359
      %v3513 = vpop.f32.mrf.mxu0
      %v3514 = vadd.f32 %v3430, %v3513
      %v3515 = vpop.f32.mrf.mxu0
      %v3516 = vadd.f32 %v3434, %v3515
      %3517 = vmatprep.mubr.f32.mxu0 0.0
      %3518 = vmatmul.mubr.f32.gmra.mxu0 %v3360
      %v3519 = vpop.f32.mrf.mxu0
      %v3520 = vadd.f32 %v3430, %v3519
      %v3521 = vpop.f32.mrf.mxu0
      %v3522 = vadd.f32 %v3434, %v3521
      %3523 = vdwg.mxu0
      %3524 = vmatprep.subr.mxu0 %v3424
      %3525 = vmatpush1.msra.mxu0 %v3423
      %3526 = vmatprep.subr.mxu0 %v3420
      %3527 = vmatpush1.msra.mxu0 %v3419
      %3528 = vmatprep.subr.mxu0 %v3416
      %3529 = vmatpush1.msra.mxu0 %v3415
      %3530 = vmatprep.subr.mxu0 %v3412
      %3531 = vmatpush1.msra.mxu0 %v3411
      %3532 = vmatprep.subr.mxu0 %v3408
      %3533 = vmatpush1.msra.mxu0 %v3407
      %3534 = vmatprep.subr.mxu0 %v3404
      %3535 = vmatpush1.msra.mxu0 %v3403
      %3536 = vmatprep.subr.mxu0 %v3400
      %3537 = vmatpush1.msra.mxu0 %v3399
      %3538 = vmatprep.subr.mxu0 %v3396
      %3539 = vmatpush1.msra.mxu0 %v3395
      %3540 = vmatprep.subr.mxu0 %v3392
      %3541 = vmatpush1.msra.mxu0 %v3391
      %3542 = vmatprep.subr.mxu0 %v3388
      %3543 = vmatpush1.msra.mxu0 %v3387
      %3544 = vmatprep.subr.mxu0 %v3384
      %3545 = vmatpush1.msra.mxu0 %v3383
      %3546 = vmatprep.subr.mxu0 %v3380
      %3547 = vmatpush1.msra.mxu0 %v3379
      %3548 = vmatprep.subr.mxu0 %v3376
      %3549 = vmatpush1.msra.mxu0 %v3375
      %3550 = vmatprep.subr.mxu0 %v3372
      %3551 = vmatpush1.msra.mxu0 %v3371
      %3552 = vmatprep.subr.mxu0 %v3368
      %3553 = vmatpush1.msra.mxu0 %v3367
      %3554 = vmatprep.subr.mxu0 %v3364
      %3555 = vmatpush1.msra.mxu0 %v3363
      %3556 = vmatprep.subr.mxu0 0.0
      %3557 = vmatpush2.msra.mxu0 0.0
      %3558 = vmatprep.subr.mxu0 0.0
      %3559 = vmatpush2.msra.mxu0 0.0
      %3560 = vmatprep.subr.mxu0 0.0
      %3561 = vmatpush2.msra.mxu0 0.0
      %3562 = vmatprep.subr.mxu0 0.0
      %3563 = vmatpush2.msra.mxu0 0.0
      %3564 = vmatprep.subr.mxu0 0.0
      %3565 = vmatpush2.msra.mxu0 0.0
      %3566 = vmatprep.subr.mxu0 0.0
      %3567 = vmatpush2.msra.mxu0 0.0
      %3568 = vmatprep.subr.mxu0 0.0
      %3569 = vmatpush2.msra.mxu0 0.0
      %3570 = vmatprep.subr.mxu0 0.0
      %3571 = vmatpush2.msra.mxu0 0.0
      %3572 = vmatprep.subr.mxu0 0.0
      %3573 = vmatpush2.msra.mxu0 0.0
      %3574 = vmatprep.subr.mxu0 0.0
      %3575 = vmatpush2.msra.mxu0 0.0
      %3576 = vmatprep.subr.mxu0 0.0
      %3577 = vmatpush2.msra.mxu0 0.0
      %3578 = vmatprep.subr.mxu0 0.0
      %3579 = vmatpush2.msra.mxu0 0.0
      %3580 = vmatprep.subr.mxu0 0.0
      %3581 = vmatpush2.msra.mxu0 0.0
      %3582 = vmatprep.subr.mxu0 0.0
      %3583 = vmatpush2.msra.mxu0 0.0
      %3584 = vmatprep.subr.mxu0 0.0
      %3585 = vmatpush2.msra.mxu0 0.0
      %3586 = vmatprep.subr.mxu0 0.0
      %3587 = vmatpush2.msra.mxu0 0.0
      %3588 = vmatprep.mubr.f32.mxu0 0.0
      %3589 = vmatmul.mubr.f32.gmra.mxu0 %v3359
      %v3590 = vpop.f32.mrf.mxu0
      %v3591 = vadd.f32 %v3438, %v3590
      %v3592 = vpop.f32.mrf.mxu0
      %v3593 = vadd.f32 %v3442, %v3592
      %3594 = vmatprep.mubr.f32.mxu0 0.0
      %3595 = vmatmul.mubr.f32.gmra.mxu0 %v3360
      %v3596 = vpop.f32.mrf.mxu0
      %v3597 = vadd.f32 %v3438, %v3596
      %v3598 = vpop.f32.mrf.mxu0
      %v3599 = vadd.f32 %v3442, %v3598
      %3600 = vdwg.mxu0
      %v3601 = vmul.f32 %v3514, 0.5
      %v3602 = vmul.f32 %v3516, 0.5
      %v3603 = vmul.f32 %v3591, 0.5
      %v3604 = vmul.f32 %v3593, 0.5
      %v3605 = vmul.f32 %v3520, 0.5
      %v3606 = vmul.f32 %v3522, 0.5
      %v3607 = vmul.f32 %v3597, 0.5
      %v3608 = vmul.f32 %v3599, 0.5
      %v3609 = vmul.f32 %v3514, 0.044715
      %v3610 = vmul.f32 %v3516, 0.044715
      %v3611 = vmul.f32 %v3591, 0.044715
      %v3612 = vmul.f32 %v3593, 0.044715
      %v3613 = vmul.f32 %v3520, 0.044715
      %v3614 = vmul.f32 %v3522, 0.044715
      %v3615 = vmul.f32 %v3597, 0.044715
      %v3616 = vmul.f32 %v3599, 0.044715
      %v3617 = vmul.f32 %v3609, %v3514
      %v3618 = vmul.f32 %v3610, %v3516
      %v3619 = vmul.f32 %v3611, %v3591
      %v3620 = vmul.f32 %v3612, %v3593
      %v3621 = vmul.f32 %v3613, %v3520
      %v3622 = vmul.f32 %v3614, %v3522
      %v3623 = vmul.f32 %v3615, %v3597
      %v3624 = vmul.f32 %v3616, %v3599
      %v3625 = vmul.f32 %v3617, %v3514
      %v3626 = vmul.f32 %v3618, %v3516
      %v3627 = vmul.f32 %v3619, %v3591
      %v3628 = vmul.f32 %v3620, %v3593
      %v3629 = vmul.f32 %v3621, %v3520
      %v3630 = vmul.f32 %v3622, %v3522
      %v3631 = vmul.f32 %v3623, %v3597
      %v3632 = vmul.f32 %v3624, %v3599
      %v3633 = vadd.f32 %v3514, %v3625
      %v3634 = vadd.f32 %v3516, %v3626
      %v3635 = vadd.f32 %v3591, %v3627
      %v3636 = vadd.f32 %v3593, %v3628
      %v3637 = vadd.f32 %v3520, %v3629
      %v3638 = vadd.f32 %v3522, %v3630
      %v3639 = vadd.f32 %v3597, %v3631
      %v3640 = vadd.f32 %v3599, %v3632
      %v3641 = vmul.f32 %v3633, 0.7978846
      %v3642 = vmul.f32 %v3634, 0.7978846
      %v3643 = vmul.f32 %v3635, 0.7978846
      %v3644 = vmul.f32 %v3636, 0.7978846
      %v3645 = vmul.f32 %v3637, 0.7978846
      %v3646 = vmul.f32 %v3638, 0.7978846
      %v3647 = vmul.f32 %v3639, 0.7978846
      %v3648 = vmul.f32 %v3640, 0.7978846
      %v3649 = vtanh.pop %v3641
      %v3650 = vtanh.pop %v3642
      %v3651 = vtanh.pop %v3643
      %v3652 = vtanh.pop %v3644
      %v3653 = vtanh.pop %v3645
      %v3654 = vtanh.pop %v3646
      %v3655 = vtanh.pop %v3647
      %v3656 = vtanh.pop %v3648
      %v3657 = vadd.f32 %v3649, 1.0
      %v3658 = vadd.f32 %v3650, 1.0
      %v3659 = vadd.f32 %v3651, 1.0
      %v3660 = vadd.f32 %v3652, 1.0
      %v3661 = vadd.f32 %v3653, 1.0
      %v3662 = vadd.f32 %v3654, 1.0
      %v3663 = vadd.f32 %v3655, 1.0
      %v3664 = vadd.f32 %v3656, 1.0
      %v3665 = vmul.f32 %v3601, %v3657
      %v3666 = vmul.f32 %v3602, %v3658
      %v3667 = vmul.f32 %v3603, %v3659
      %v3668 = vmul.f32 %v3604, %v3660
      %v3669 = vmul.f32 %v3605, %v3661
      %v3670 = vmul.f32 %v3606, %v3662
      %v3671 = vmul.f32 %v3607, %v3663
      %v3672 = vmul.f32 %v3608, %v3664
      %v3673 = vld [vmem:[%s921] sm:$0xff]
      %v3674 = vld [vmem:[%s921 + $0x8] sm:$0xff]
      %v3675 = vld [vmem:[%s921 + $0x10] sm:$0xff]
      %v3676 = vld [vmem:[%s921 + $0x18] sm:$0xff]
      %v3677 = vld [vmem:[%s921 + $0x20] sm:$0xff]
      %v3678 = vld [vmem:[%s921 + $0x28] sm:$0xff]
      %v3679 = vld [vmem:[%s921 + $0x30] sm:$0xff]
      %v3680 = vld [vmem:[%s921 + $0x38] sm:$0xff]
      %v3681 = vld [vmem:[%s921 + $0x40] sm:$0xff]
      %v3682 = vld [vmem:[%s921 + $0x48] sm:$0xff]
      %v3683 = vld [vmem:[%s921 + $0x50] sm:$0xff]
      %v3684 = vld [vmem:[%s921 + $0x58] sm:$0xff]
      %v3685 = vld [vmem:[%s921 + $0x60] sm:$0xff]
      %v3686 = vld [vmem:[%s921 + $0x68] sm:$0xff]
      %v3687 = vld [vmem:[%s921 + $0x70] sm:$0xff]
      %v3688 = vld [vmem:[%s921 + $0x78] sm:$0xff]
      %v3689 = vld [vmem:[%s921 + $0x80] sm:$0xff]
      %v3690 = vld [vmem:[%s921 + $0x88] sm:$0xff]
      %v3691 = vld [vmem:[%s921 + $0x90] sm:$0xff]
      %v3692 = vld [vmem:[%s921 + $0x98] sm:$0xff]
      %v3693 = vld [vmem:[%s921 + $0xa0] sm:$0xff]
      %v3694 = vld [vmem:[%s921 + $0xa8] sm:$0xff]
      %v3695 = vld [vmem:[%s921 + $0xb0] sm:$0xff]
      %v3696 = vld [vmem:[%s921 + $0xb8] sm:$0xff]
      %v3697 = vld [vmem:[%s921 + $0xc0] sm:$0xff]
      %v3698 = vld [vmem:[%s921 + $0xc8] sm:$0xff]
      %v3699 = vld [vmem:[%s921 + $0xd0] sm:$0xff]
      %v3700 = vld [vmem:[%s921 + $0xd8] sm:$0xff]
      %v3701 = vld [vmem:[%s921 + $0xe0] sm:$0xff]
      %v3702 = vld [vmem:[%s921 + $0xe8] sm:$0xff]
      %v3703 = vld [vmem:[%s921 + $0xf0] sm:$0xff]
      %v3704 = vld [vmem:[%s921 + $0xf8] sm:$0xff]
      %v3705 = vld [vmem:[%s921 + $0x100] sm:$0xff]
      %v3706 = vld [vmem:[%s921 + $0x108] sm:$0xff]
      %v3707 = vld [vmem:[%s921 + $0x110] sm:$0xff]
      %v3708 = vld [vmem:[%s921 + $0x118] sm:$0xff]
      %v3709 = vld [vmem:[%s921 + $0x120] sm:$0xff]
      %v3710 = vld [vmem:[%s921 + $0x128] sm:$0xff]
      %v3711 = vld [vmem:[%s921 + $0x130] sm:$0xff]
      %v3712 = vld [vmem:[%s921 + $0x138] sm:$0xff]
      %v3713 = vld [vmem:[%s921 + $0x140] sm:$0xff]
      %v3714 = vld [vmem:[%s921 + $0x148] sm:$0xff]
      %v3715 = vld [vmem:[%s921 + $0x150] sm:$0xff]
      %v3716 = vld [vmem:[%s921 + $0x158] sm:$0xff]
      %v3717 = vld [vmem:[%s921 + $0x160] sm:$0xff]
      %v3718 = vld [vmem:[%s921 + $0x168] sm:$0xff]
      %v3719 = vld [vmem:[%s921 + $0x170] sm:$0xff]
      %v3720 = vld [vmem:[%s921 + $0x178] sm:$0xff]
      %v3721 = vld [vmem:[%s921 + $0x180] sm:$0xff]
      %v3722 = vld [vmem:[%s921 + $0x188] sm:$0xff]
      %v3723 = vld [vmem:[%s921 + $0x190] sm:$0xff]
      %v3724 = vld [vmem:[%s921 + $0x198] sm:$0xff]
      %v3725 = vld [vmem:[%s921 + $0x1a0] sm:$0xff]
      %v3726 = vld [vmem:[%s921 + $0x1a8] sm:$0xff]
      %v3727 = vld [vmem:[%s921 + $0x1b0] sm:$0xff]
      %v3728 = vld [vmem:[%s921 + $0x1b8] sm:$0xff]
      %v3729 = vld [vmem:[%s921 + $0x1c0] sm:$0xff]
      %v3730 = vld [vmem:[%s921 + $0x1c8] sm:$0xff]
      %v3731 = vld [vmem:[%s921 + $0x1d0] sm:$0xff]
      %v3732 = vld [vmem:[%s921 + $0x1d8] sm:$0xff]
      %v3733 = vld [vmem:[%s921 + $0x1e0] sm:$0xff]
      %v3734 = vld [vmem:[%s921 + $0x1e8] sm:$0xff]
      %v3735 = vld [vmem:[%s921 + $0x1f0] sm:$0xff]
      %v3736 = vld [vmem:[%s921 + $0x1f8] sm:$0xff]
      %v3737 = vld [vmem:[%s924] sm:$0x1]
      %v3739 = vlaneseq
      %v3740 = vshrl.u32 %v3739, 7
      %v3741 = vsub.s32 0, %v3740
      %v3742 = vrot.slane %v3737, %v3741
      %3744 = vmatprep.subr.mxu0 0.0
      %3745 = vmatpush1.msra.mxu0 %v3688
      %3746 = vmatprep.subr.mxu0 0.0
      %3747 = vmatpush1.msra.mxu0 %v3687
      %3748 = vmatprep.subr.mxu0 0.0
      %3749 = vmatpush1.msra.mxu0 %v3686
      %3750 = vmatprep.subr.mxu0 0.0
      %3751 = vmatpush1.msra.mxu0 %v3685
      %3752 = vmatprep.subr.mxu0 0.0
      %3753 = vmatpush1.msra.mxu0 %v3684
      %3754 = vmatprep.subr.mxu0 0.0
      %3755 = vmatpush1.msra.mxu0 %v3683
      %3756 = vmatprep.subr.mxu0 0.0
      %3757 = vmatpush1.msra.mxu0 %v3682
      %3758 = vmatprep.subr.mxu0 0.0
      %3759 = vmatpush1.msra.mxu0 %v3681
      %3760 = vmatprep.subr.mxu0 0.0
      %3761 = vmatpush1.msra.mxu0 %v3680
      %3762 = vmatprep.subr.mxu0 0.0
      %3763 = vmatpush1.msra.mxu0 %v3679
      %3764 = vmatprep.subr.mxu0 0.0
      %3765 = vmatpush1.msra.mxu0 %v3678
      %3766 = vmatprep.subr.mxu0 0.0
      %3767 = vmatpush1.msra.mxu0 %v3677
      %3768 = vmatprep.subr.mxu0 0.0
      %3769 = vmatpush1.msra.mxu0 %v3676
      %3770 = vmatprep.subr.mxu0 0.0
      %3771 = vmatpush1.msra.mxu0 %v3675
      %3772 = vmatprep.subr.mxu0 0.0
      %3773 = vmatpush1.msra.mxu0 %v3674
      %3774 = vmatprep.subr.mxu0 0.0
      %3775 = vmatpush1.msra.mxu0 %v3673
      %3776 = vmatprep.subr.mxu0 0.0
      %3777 = vmatpush2.msra.mxu0 %v3704
      %3778 = vmatprep.subr.mxu0 0.0
      %3779 = vmatpush2.msra.mxu0 %v3703
      %3780 = vmatprep.subr.mxu0 0.0
      %3781 = vmatpush2.msra.mxu0 %v3702
      %3782 = vmatprep.subr.mxu0 0.0
      %3783 = vmatpush2.msra.mxu0 %v3701
      %3784 = vmatprep.subr.mxu0 0.0
      %3785 = vmatpush2.msra.mxu0 %v3700
      %3786 = vmatprep.subr.mxu0 0.0
      %3787 = vmatpush2.msra.mxu0 %v3699
      %3788 = vmatprep.subr.mxu0 0.0
      %3789 = vmatpush2.msra.mxu0 %v3698
      %3790 = vmatprep.subr.mxu0 0.0
      %3791 = vmatpush2.msra.mxu0 %v3697
      %3792 = vmatprep.subr.mxu0 0.0
      %3793 = vmatpush2.msra.mxu0 %v3696
      %3794 = vmatprep.subr.mxu0 0.0
      %3795 = vmatpush2.msra.mxu0 %v3695
      %3796 = vmatprep.subr.mxu0 0.0
      %3797 = vmatpush2.msra.mxu0 %v3694
      %3798 = vmatprep.subr.mxu0 0.0
      %3799 = vmatpush2.msra.mxu0 %v3693
      %3800 = vmatprep.subr.mxu0 0.0
      %3801 = vmatpush2.msra.mxu0 %v3692
      %3802 = vmatprep.subr.mxu0 0.0
      %3803 = vmatpush2.msra.mxu0 %v3691
      %3804 = vmatprep.subr.mxu0 0.0
      %3805 = vmatpush2.msra.mxu0 %v3690
      %3806 = vmatprep.subr.mxu0 0.0
      %3807 = vmatpush2.msra.mxu0 %v3689
      %3808 = vmatprep.mubr.f32.mxu0 %v3666
      %3809 = vmatmul.mubr.f32.gmra.mxu0 %v3665
      %v3810 = vpop.f32.mrf.mxu0
      %v3811 = vadd.f32 %v3742, %v3810
      %v3812 = vpop.f32.mrf.mxu0
      %3813 = vmatprep.mubr.f32.mxu0 %v3670
      %3814 = vmatmul.mubr.f32.gmra.mxu0 %v3669
      %v3815 = vpop.f32.mrf.mxu0
      %v3816 = vadd.f32 %v3742, %v3815
      %v3817 = vpop.f32.mrf.mxu0
      %3818 = vdwg.mxu0
      %3819 = vmatprep.subr.mxu0 0.0
      %3820 = vmatpush1.msra.mxu0 %v3720
      %3821 = vmatprep.subr.mxu0 0.0
      %3822 = vmatpush1.msra.mxu0 %v3719
      %3823 = vmatprep.subr.mxu0 0.0
      %3824 = vmatpush1.msra.mxu0 %v3718
      %3825 = vmatprep.subr.mxu0 0.0
      %3826 = vmatpush1.msra.mxu0 %v3717
      %3827 = vmatprep.subr.mxu0 0.0
      %3828 = vmatpush1.msra.mxu0 %v3716
      %3829 = vmatprep.subr.mxu0 0.0
      %3830 = vmatpush1.msra.mxu0 %v3715
      %3831 = vmatprep.subr.mxu0 0.0
      %3832 = vmatpush1.msra.mxu0 %v3714
      %3833 = vmatprep.subr.mxu0 0.0
      %3834 = vmatpush1.msra.mxu0 %v3713
      %3835 = vmatprep.subr.mxu0 0.0
      %3836 = vmatpush1.msra.mxu0 %v3712
      %3837 = vmatprep.subr.mxu0 0.0
      %3838 = vmatpush1.msra.mxu0 %v3711
      %3839 = vmatprep.subr.mxu0 0.0
      %3840 = vmatpush1.msra.mxu0 %v3710
      %3841 = vmatprep.subr.mxu0 0.0
      %3842 = vmatpush1.msra.mxu0 %v3709
      %3843 = vmatprep.subr.mxu0 0.0
      %3844 = vmatpush1.msra.mxu0 %v3708
      %3845 = vmatprep.subr.mxu0 0.0
      %3846 = vmatpush1.msra.mxu0 %v3707
      %3847 = vmatprep.subr.mxu0 0.0
      %3848 = vmatpush1.msra.mxu0 %v3706
      %3849 = vmatprep.subr.mxu0 0.0
      %3850 = vmatpush1.msra.mxu0 %v3705
      %3851 = vmatprep.subr.mxu0 0.0
      %3852 = vmatpush2.msra.mxu0 %v3736
      %3853 = vmatprep.subr.mxu0 0.0
      %3854 = vmatpush2.msra.mxu0 %v3735
      %3855 = vmatprep.subr.mxu0 0.0
      %3856 = vmatpush2.msra.mxu0 %v3734
      %3857 = vmatprep.subr.mxu0 0.0
      %3858 = vmatpush2.msra.mxu0 %v3733
      %3859 = vmatprep.subr.mxu0 0.0
      %3860 = vmatpush2.msra.mxu0 %v3732
      %3861 = vmatprep.subr.mxu0 0.0
      %3862 = vmatpush2.msra.mxu0 %v3731
      %3863 = vmatprep.subr.mxu0 0.0
      %3864 = vmatpush2.msra.mxu0 %v3730
      %3865 = vmatprep.subr.mxu0 0.0
      %3866 = vmatpush2.msra.mxu0 %v3729
      %3867 = vmatprep.subr.mxu0 0.0
      %3868 = vmatpush2.msra.mxu0 %v3728
      %3869 = vmatprep.subr.mxu0 0.0
      %3870 = vmatpush2.msra.mxu0 %v3727
      %3871 = vmatprep.subr.mxu0 0.0
      %3872 = vmatpush2.msra.mxu0 %v3726
      %3873 = vmatprep.subr.mxu0 0.0
      %3874 = vmatpush2.msra.mxu0 %v3725
      %3875 = vmatprep.subr.mxu0 0.0
      %3876 = vmatpush2.msra.mxu0 %v3724
      %3877 = vmatprep.subr.mxu0 0.0
      %3878 = vmatpush2.msra.mxu0 %v3723
      %3879 = vmatprep.subr.mxu0 0.0
      %3880 = vmatpush2.msra.mxu0 %v3722
      %3881 = vmatprep.subr.mxu0 0.0
      %3882 = vmatpush2.msra.mxu0 %v3721
      %3883 = vmatprep.mubr.f32.mxu0 %v3668
      %3884 = vmatmul.mubr.f32.gmra.mxu0 %v3667
      %v3885 = vpop.f32.mrf.mxu0
      %v3886 = vadd.f32 %v3811, %v3885
      %v3887 = vpop.f32.mrf.mxu0
      %3888 = vmatprep.mubr.f32.mxu0 %v3672
      %3889 = vmatmul.mubr.f32.gmra.mxu0 %v3671
      %v3890 = vpop.f32.mrf.mxu0
      %v3891 = vadd.f32 %v3816, %v3890
      %v3892 = vpop.f32.mrf.mxu0
      %3893 = vdwg.mxu0
      %v3894 = vadd.f32 %v3886, %v3359
      %v3895 = vadd.f32 %v3891, %v3360
      %v3896 = vld [vmem:[%s927] sm:$0x1]
      %v3897 = vld [vmem:[%s930] sm:$0x1]
      %3898 = vadd.xlane.f32.xlu0 %v3894
      %v3899 = vpop.xlane.xlu0 %3898
      %3900 = vadd.xlane.f32.xlu0 %v3895
      %v3901 = vpop.xlane.xlu0 %3900
      %v3902 = vmul.f32 %v3899, %v3326
      %v3903 = vmul.f32 %v3901, %v3326
      %v3904 = vsub.f32 %v3894, %v3902
      %v3905 = vsub.f32 %v3895, %v3903
      %v3906 = vmul.f32 %v3904, %v3904
      %v3907 = vmul.f32 %v3905, %v3905
      %3908 = vadd.xlane.f32.xlu0 %v3906
      %v3909 = vpop.xlane.xlu0 %3908
      %3910 = vadd.xlane.f32.xlu0 %v3907
      %v3911 = vpop.xlane.xlu0 %3910
      %v3912 = vmul.f32 %v3909, %v3326
      %v3913 = vmul.f32 %v3911, %v3326
      %v3914 = vadd.f32 %v3912, 1e-12
      %v3915 = vadd.f32 %v3913, 1e-12
      %v3916 = vrsqrt.pop %v3914
      %v3917 = vrsqrt.pop %v3915
      %v3918 = vmul.f32 %v3904, %v3916
      %v3919 = vmul.f32 %v3905, %v3917
      %v3921 = vlaneseq
      %v3922 = vshrl.u32 %v3921, 7
      %v3923 = vsub.s32 0, %v3922
      %v3924 = vrot.slane %v3896, %v3923
      %v3926 = vmul.f32 %v3918, %v3924
      %v3927 = vmul.f32 %v3919, %v3924
      %v3929 = vlaneseq
      %v3930 = vshrl.u32 %v3929, 7
      %v3931 = vsub.s32 0, %v3930
      %v3932 = vrot.slane %v3897, %v3931
      %v3934 = vadd.f32 %v3926, %v3932
      %v3935 = vadd.f32 %v3927, %v3932
      %3936 = vst [vmem:[%s935] sm:$0xff] %v3934
      %3937 = vst [vmem:[%s935 + $0x8] sm:$0xff] %v3935
      %s3938 = smul.u32 2, %s35
      %p3939 = scmp.lt.s32.totalorder %s3938, 3
      %s3940 = scalar_select %p3939, %s3938, 3
      %s3941 = smul.addr %s3940, 8
      %s3942 = scalar_lea.vmem %s20, %s3941
      // Predicated region
      $region105: #{bert_classifier_forward.1} parent=99 // pred_check
        %p3943 = pneg %p571
      $region106: #{bert_classifier_forward.1} parent=99 // pred_check_branch
        %3945 = sbr.rel (%p3943) target = $region108
      $region107: #{bert_classifier_forward.1} parent=99 // pred_region
        %s3946 = smul.u32 2, %s35
      $region108: #{bert_classifier_forward.1} parent=99 // pred_fallthru
        _
    $region100: #{bert_classifier_forward.1} parent=5 // pred_fallthru
      _
    %p3947 = scmp.le.s32.totalorder 2, %s26
    // Predicated region
    $region109: #{bert_classifier_forward.1} parent=5 // pred_check
      %p3948 = pneg %p3947
    $region110: #{bert_classifier_forward.1} parent=5 // pred_check_branch
      %3950 = sbr.rel (%p3948) target = $region112
    $region111: #{bert_classifier_forward.1} parent=5 // pred_region
      %s3951 = ssub.s32 %s26, 2
      // Predicated region
      $region113: #{bert_classifier_forward.1} parent=111 // pred_check
        %p3952 = pneg %p577
      $region114: #{bert_classifier_forward.1} parent=111 // pred_check_branch
        %3954 = sbr.rel (%p3952) target = $region116
      $region115: #{bert_classifier_forward.1} parent=111 // pred_region
        %s3955 = smul.u32 2, %s37
        %p3956 = scmp.lt.s32.totalorder %s3955, 3
        %s3957 = scalar_select %p3956, %s3955, 3
        %s3958 = smul.addr %s3957, 8
        %s3959 = scalar_lea.vmem %s20, %s3958
      $region116: #{bert_classifier_forward.1} parent=111 // pred_fallthru
        _
    $region112: #{bert_classifier_forward.1} parent=5 // pred_fallthru
      _
  $region6: #{bert_classifier_forward.1} parent=0 // loop_footer
    %s30 = sadd.s32 1, %s26
  $region7: #{bert_classifier_forward.1} parent=0 // loop_footer_branch
    %25 = sbr.rel target = $region3
  $region8: #{bert_classifier_forward.1} parent=0 // loop_exit
    _

</llo_original>
